<compile_context>
chip_gen: v6e
topology: v6e:2x2x1
jax: 0.10.0
libtpu: 0.0.40
codegen_flags: <defaults>
</compile_context>

<pallas_src>
import functools

import jax
import jax.numpy as jnp
from jax.experimental import pallas as pl
from jax.experimental.pallas import tpu as pltpu


# ---------------------------------------------------------------------------
# Fused CBAM kernel
# ---------------------------------------------------------------------------
def cbam_kernel(x_ref, w1_ref, b1_ref, w2_ref, b2_ref, wconv_ref, gb_ref,
                out_ref, sp_scr, *, H, W):
    # x_ref:    (B, C, HW)  input, lane-dense
    # w1/b1:    (C, Hid), (1, Hid)     shared MLP layer 1
    # w2/b2:    (Hid, C), (1, C)       shared MLP layer 2
    # wconv:    SMEM (98,)             flattened 7x7 conv weight (c, di, dj)
    # gb:       SMEM (2,)              [gamma, beta] of BatchNorm2d(1)
    # out_ref:  (B, C, HW)
    # sp_scr:   VMEM (B, 2, H+6, W+6)  zero-padded [mean, max] spatial map
    B, C, HW = x_ref.shape
    Hp = H + 6

    x = x_ref[...].astype(jnp.float32)                       # (B, C, HW)

    # --- Channel attention: adaptive avg/max pool -> shared MLP -> sigmoid ---
    avg = jnp.mean(x, axis=2)                                 # (B, C)
    mx = jnp.max(x, axis=2)                                   # (B, C)
    v = jnp.concatenate([avg, mx], axis=0)                    # (2B, C): one MLP pass
    h = jnp.maximum(
        jnp.dot(v, w1_ref[...], preferred_element_type=jnp.float32) + b1_ref[...],
        0.0)
    o = jnp.dot(h, w2_ref[...], preferred_element_type=jnp.float32) + b2_ref[...]
    s = jax.nn.sigmoid(o[:B] + o[B:])                         # (B, C)
    y = x * s[:, :, None]                                     # channel-att output

    # --- Spatial stats (channel mean / max), written padded into VMEM scratch
    mean_c = jnp.mean(y, axis=1)                              # (B, HW)
    max_c = jnp.max(y, axis=1)                                # (B, HW)
    sp_flat = jnp.stack([mean_c, max_c], axis=1)              # (B, 2, HW)
    sp_scr[...] = jnp.zeros_like(sp_scr)
    for i in range(H):                                        # scatter rows into
        row = i * W                                           # the padded interior
        sp_scr[:, :, 3 + i, 3:3 + W] = sp_flat[:, :, row:row + W]
    P = sp_scr[...]                                           # (B, 2, Hp, Wp)

    # --- 7x7 conv (2 -> 1 channels, no bias), stride 1, padding 3 ----------
    # Column pass: 7 dj-shifted slabs, reused across all (c, di) taps.
    Pj = [P[:, :, :, dj:dj + W] for dj in range(7)]           # 7 x (B, 2, Hp, W)
    acc = jnp.zeros((B, H, W), jnp.float32)
    for di in range(7):
        t = jnp.zeros((B, Hp, W), jnp.float32)
        for dj in range(7):
            p = Pj[dj]
            t = (t
                 + wconv_ref[di * 7 + dj] * p[:, 0]
                 + wconv_ref[49 + di * 7 + dj] * p[:, 1])
        # Row pass: one sublane shift per di.
        acc = acc + t[:, di:di + H, :]

    # --- BatchNorm2d(1): training-mode batch stats in a single pass ---------
    # TODO(synk): running_mean / running_var buffer updates are not modeled.
    n = float(B * H * W)
    s1 = jnp.sum(acc)
    s2 = jnp.sum(acc * acc)
    mean = s1 / n
    var = s2 / n - mean * mean                                # biased variance
    bn = (acc - mean) * jax.lax.rsqrt(var + 1e-5) * gb_ref[0] + gb_ref[1]
    sig = jax.nn.sigmoid(bn)                                  # (B, H, W)

    # --- Apply spatial scale in the lane-dense (B, C, HW) layout ------------
    scale = jnp.concatenate([sig[:, i, :] for i in range(H)], axis=1)  # (B, HW)
    out_ref[...] = (y * scale[:, None, :]).astype(out_ref.dtype)


# ---------------------------------------------------------------------------
# Wrapper
# ---------------------------------------------------------------------------
@jax.jit
def cbam_forward(x, w1, b1, w2, b2, wconv, gamma, beta):
    B, C, H, W = x.shape
    HW = H * W
    x3 = x.reshape(B, C, HW)
    wflat = wconv.reshape(-1).astype(jnp.float32)              # (98,)
    gb = jnp.stack([jnp.asarray(gamma, jnp.float32),
                    jnp.asarray(beta, jnp.float32)])           # (2,)

    vmem = pl.BlockSpec(memory_space=pltpu.MemorySpace.VMEM)
    smem = pl.BlockSpec(memory_space=pltpu.MemorySpace.SMEM)

    out3 = pl.pallas_call(
        functools.partial(cbam_kernel, H=H, W=W),
        out_shape=jax.ShapeDtypeStruct((B, C, HW), x.dtype),
        in_specs=[vmem, vmem, vmem, vmem, vmem, smem, smem],
        out_specs=vmem,
        scratch_shapes=[pltpu.VMEM((B, 2, H + 6, W + 6), jnp.float32)],
    )(x3, w1, b1, w2, b2, wflat, gb)
    return out3.reshape(B, C, H, W)


# Pure-JAX reference (mirrors the PyTorch forward exactly).
def cbam_reference(x, w1, b1, w2, b2, wconv, gamma, beta):
    avg = x.mean(axis=(2, 3))
    mx = x.max(axis=(2, 3))
    mlp = lambda v: jnp.maximum(v @ w1 + b1, 0.0) @ w2 + b2
    s = jax.nn.sigmoid(mlp(avg) + mlp(mx))
    y = x * s[:, :, None, None]
    sp = jnp.stack([y.mean(axis=1), y.max(axis=1)], axis=1)     # (B, 2, H, W)
    conv = jax.lax.conv_general_dilated(
        sp, wconv.reshape(1, 2, 7, 7), window_strides=(1, 1),
        padding=((3, 3), (3, 3)),
        dimension_numbers=("NCHW", "OIHW", "NCHW"))[:, 0]       # (B, H, W)
    mean = conv.mean()
    var = ((conv - mean) ** 2).mean()
    bn = (conv - mean) * jax.lax.rsqrt(var + 1e-5) * gamma + beta
    return y * jax.nn.sigmoid(bn)[:, None, :, :]


def make_params(key, C, reduction_ratio=16):
    hid = C // reduction_ratio
    k1, k2, k3, k4, k5 = jax.random.split(key, 5)
    return dict(
        w1=jax.random.normal(k1, (C, hid), jnp.float32) * 0.2,
        b1=jax.random.normal(k2, (1, hid), jnp.float32) * 0.1,
        w2=jax.random.normal(k3, (hid, C), jnp.float32) * 0.2,
        b2=jax.random.normal(k4, (1, C), jnp.float32) * 0.1,
        wconv=jax.random.normal(k5, (2, 7, 7), jnp.float32) * 0.1,
        gamma=jnp.float32(1.0),
        beta=jnp.float32(0.0),
    )


if __name__ == "__main__":
    key = jax.random.PRNGKey(0)
    kx, kp = jax.random.split(key)

    B, C, H, W = 2, 32, 16, 16          # C must satisfy C // 16 >= 1
    x = jax.random.normal(kx, (B, C, H, W), jnp.float32)
    p = make_params(kp, C, reduction_ratio=16)

    out = cbam_forward(x, p["w1"], p["b1"], p["w2"], p["b2"],
                       p["wconv"], p["gamma"], p["beta"])
    out = jax.block_until_ready(out)

    ref = cbam_reference(x, p["w1"], p["b1"], p["w2"], p["b2"],
                         p["wconv"], p["gamma"], p["beta"])
    err = float(jnp.max(jnp.abs(out - ref)))
    assert out.shape == x.shape and out.dtype == x.dtype
    if err > 5e-3:
        raise AssertionError(f"mismatch vs reference: max abs err = {err}")
    print("KERNEL_OK")
</pallas_src>

<mosaic_0001>
module attributes {stable_mosaic.version = 11 : i64} {
  func.func @cbam_kernel(%arg0: memref<2x32x256xf32, #tpu.memory_space<vmem>>, %arg1: memref<32x2xf32, #tpu.memory_space<vmem>>, %arg2: memref<1x2xf32, #tpu.memory_space<vmem>>, %arg3: memref<2x32xf32, #tpu.memory_space<vmem>>, %arg4: memref<1x32xf32, #tpu.memory_space<vmem>>, %arg5: memref<98xf32, #tpu.memory_space<smem>>, %arg6: memref<2xf32, #tpu.memory_space<smem>>, %arg7: memref<2x32x256xf32, #tpu.memory_space<vmem>>, %arg8: memref<2x2x22x22xf32, #tpu.memory_space<vmem>>) attributes {dimension_semantics = [], scalar_prefetch = 0 : i64, scratch_operands = 1 : i64, tpu.core_type = #tpu.core_type<tc>} {
    %c0 = arith.constant 0 : index
    %c0_0 = arith.constant 0 : index
    %c0_1 = arith.constant 0 : index
    %0 = vector.load %arg0[%c0, %c0_0, %c0_1] : memref<2x32x256xf32, #tpu.memory_space<vmem>>, vector<2x32x256xf32>
    %cst = arith.constant dense<0.000000e+00> : vector<2x32xf32>
    %1 = vector.multi_reduction <add>, %0, %cst [2] : vector<2x32x256xf32> to vector<2x32xf32>
    %cst_2 = arith.constant 2.560000e+02 : f32
    %2 = vector.broadcast %cst_2 : f32 to vector<2x32xf32>
    %3 = arith.divf %1, %2 : vector<2x32xf32>
    %cst_3 = arith.constant dense<0xFF800000> : vector<2x32xf32>
    %4 = vector.multi_reduction <maximumf>, %0, %cst_3 [2] : vector<2x32x256xf32> to vector<2x32xf32>
    %5 = tpu.concatenate %3, %4 in 0 : vector<2x32xf32>, vector<2x32xf32> -> vector<4x32xf32>
    %c0_4 = arith.constant 0 : index
    %c0_5 = arith.constant 0 : index
    %6 = vector.load %arg1[%c0_4, %c0_5] : memref<32x2xf32, #tpu.memory_space<vmem>>, vector<32x2xf32>
    %cst_6 = arith.constant dense<0.000000e+00> : vector<4x2xf32>
    %7 = tpu.matmul %5, %6, %cst_6 {dimension_numbers = #tpu.dot_dimension_numbers<[1], [0], [0], [1], [0, 0, 1, 1], [], []>} : vector<4x32xf32>, vector<32x2xf32>, vector<4x2xf32> -> vector<4x2xf32>
    %c0_7 = arith.constant 0 : index
    %c0_8 = arith.constant 0 : index
    %8 = vector.load %arg2[%c0_7, %c0_8] : memref<1x2xf32, #tpu.memory_space<vmem>>, vector<1x2xf32>
    %9 = vector.broadcast %8 : vector<1x2xf32> to vector<4x2xf32>
    %10 = arith.addf %7, %9 : vector<4x2xf32>
    %cst_9 = arith.constant 0.000000e+00 : f32
    %11 = vector.broadcast %cst_9 : f32 to vector<4x2xf32>
    %12 = arith.maximumf %10, %11 : vector<4x2xf32>
    %c0_10 = arith.constant 0 : index
    %c0_11 = arith.constant 0 : index
    %13 = vector.load %arg3[%c0_10, %c0_11] : memref<2x32xf32, #tpu.memory_space<vmem>>, vector<2x32xf32>
    %cst_12 = arith.constant dense<0.000000e+00> : vector<4x32xf32>
    %14 = tpu.matmul %12, %13, %cst_12 {dimension_numbers = #tpu.dot_dimension_numbers<[1], [0], [0], [1], [0, 0, 1, 1], [], []>} : vector<4x2xf32>, vector<2x32xf32>, vector<4x32xf32> -> vector<4x32xf32>
    %c0_13 = arith.constant 0 : index
    %c0_14 = arith.constant 0 : index
    %15 = vector.load %arg4[%c0_13, %c0_14] : memref<1x32xf32, #tpu.memory_space<vmem>>, vector<1x32xf32>
    %16 = vector.broadcast %15 : vector<1x32xf32> to vector<4x32xf32>
    %17 = arith.addf %14, %16 : vector<4x32xf32>
    %18 = vector.extract_strided_slice %17 {offsets = [0, 0], sizes = [2, 32], strides = [1, 1]} : vector<4x32xf32> to vector<2x32xf32>
    %19 = vector.extract_strided_slice %17 {offsets = [2, 0], sizes = [2, 32], strides = [1, 1]} : vector<4x32xf32> to vector<2x32xf32>
    %20 = arith.addf %18, %19 : vector<2x32xf32>
    %21 = arith.negf %20 : vector<2x32xf32>
    %22 = math.exp %21 : vector<2x32xf32>
    %cst_15 = arith.constant 1.000000e+00 : f32
    %23 = vector.broadcast %cst_15 : f32 to vector<2x32xf32>
    %24 = arith.addf %23, %22 : vector<2x32xf32>
    %25 = arith.divf %23, %24 : vector<2x32xf32>
    %26 = vector.shape_cast %25 : vector<2x32xf32> to vector<2x32x1xf32>
    %27 = vector.broadcast %26 : vector<2x32x1xf32> to vector<2x32x256xf32>
    %28 = arith.mulf %0, %27 : vector<2x32x256xf32>
    %cst_16 = arith.constant dense<0.000000e+00> : vector<2x256xf32>
    %29 = vector.multi_reduction <add>, %28, %cst_16 [1] : vector<2x32x256xf32> to vector<2x256xf32>
    %cst_17 = arith.constant 3.200000e+01 : f32
    %30 = vector.broadcast %cst_17 : f32 to vector<2x256xf32>
    %31 = arith.divf %29, %30 : vector<2x256xf32>
    %cst_18 = arith.constant dense<0xFF800000> : vector<2x256xf32>
    %32 = vector.multi_reduction <maximumf>, %28, %cst_18 [1] : vector<2x32x256xf32> to vector<2x256xf32>
    %33 = vector.shape_cast %31 : vector<2x256xf32> to vector<2x1x256xf32>
    %34 = vector.shape_cast %32 : vector<2x256xf32> to vector<2x1x256xf32>
    %35 = tpu.concatenate %33, %34 in 1 : vector<2x1x256xf32>, vector<2x1x256xf32> -> vector<2x2x256xf32>
    %cst_19 = arith.constant 0.000000e+00 : f32
    %36 = vector.broadcast %cst_19 : f32 to vector<2x2x22x22xf32>
    %c0_20 = arith.constant 0 : index
    %c0_21 = arith.constant 0 : index
    %c0_22 = arith.constant 0 : index
    %c0_23 = arith.constant 0 : index
    %37 = vector.load %arg8[%c0_20, %c0_21, %c0_22, %c0_23] : memref<2x2x22x22xf32, #tpu.memory_space<vmem>>, vector<2x2x22x22xf32>
    tpu.vector_store %arg8[%c0_20, %c0_21, %c0_22, %c0_23], %36 {strides = array<i32>} : memref<2x2x22x22xf32, #tpu.memory_space<vmem>>, vector<2x2x22x22xf32>,
    %38 = vector.extract_strided_slice %35 {offsets = [0, 0, 0], sizes = [2, 2, 16], strides = [1, 1, 1]} : vector<2x2x256xf32> to vector<2x2x16xf32>
    %c0_24 = arith.constant 0 : index
    %c0_25 = arith.constant 0 : index
    %c3 = arith.constant 3 : index
    %c3_26 = arith.constant 3 : index
    %39 = vector.load %arg8[%c0_24, %c0_25, %c3, %c3_26] : memref<2x2x22x22xf32, #tpu.memory_space<vmem>>, vector<2x2x1x16xf32>
    %40 = vector.shape_cast %39 : vector<2x2x1x16xf32> to vector<2x2x16xf32>
    %41 = vector.shape_cast %38 : vector<2x2x16xf32> to vector<2x2x1x16xf32>
    tpu.vector_store %arg8[%c0_24, %c0_25, %c3, %c3_26], %41 {strides = array<i32>} : memref<2x2x22x22xf32, #tpu.memory_space<vmem>>, vector<2x2x1x16xf32>,
    %42 = vector.extract_strided_slice %35 {offsets = [0, 0, 16], sizes = [2, 2, 16], strides = [1, 1, 1]} : vector<2x2x256xf32> to vector<2x2x16xf32>
    %c0_27 = arith.constant 0 : index
    %c0_28 = arith.constant 0 : index
    %c4 = arith.constant 4 : index
    %c3_29 = arith.constant 3 : index
    %43 = vector.load %arg8[%c0_27, %c0_28, %c4, %c3_29] : memref<2x2x22x22xf32, #tpu.memory_space<vmem>>, vector<2x2x1x16xf32>
    %44 = vector.shape_cast %43 : vector<2x2x1x16xf32> to vector<2x2x16xf32>
    %45 = vector.shape_cast %42 : vector<2x2x16xf32> to vector<2x2x1x16xf32>
    tpu.vector_store %arg8[%c0_27, %c0_28, %c4, %c3_29], %45 {strides = array<i32>} : memref<2x2x22x22xf32, #tpu.memory_space<vmem>>, vector<2x2x1x16xf32>,
    %46 = vector.extract_strided_slice %35 {offsets = [0, 0, 32], sizes = [2, 2, 16], strides = [1, 1, 1]} : vector<2x2x256xf32> to vector<2x2x16xf32>
    %c0_30 = arith.constant 0 : index
    %c0_31 = arith.constant 0 : index
    %c5 = arith.constant 5 : index
    %c3_32 = arith.constant 3 : index
    %47 = vector.load %arg8[%c0_30, %c0_31, %c5, %c3_32] : memref<2x2x22x22xf32, #tpu.memory_space<vmem>>, vector<2x2x1x16xf32>
    %48 = vector.shape_cast %47 : vector<2x2x1x16xf32> to vector<2x2x16xf32>
    %49 = vector.shape_cast %46 : vector<2x2x16xf32> to vector<2x2x1x16xf32>
    tpu.vector_store %arg8[%c0_30, %c0_31, %c5, %c3_32], %49 {strides = array<i32>} : memref<2x2x22x22xf32, #tpu.memory_space<vmem>>, vector<2x2x1x16xf32>,
    %50 = vector.extract_strided_slice %35 {offsets = [0, 0, 48], sizes = [2, 2, 16], strides = [1, 1, 1]} : vector<2x2x256xf32> to vector<2x2x16xf32>
    %c0_33 = arith.constant 0 : index
    %c0_34 = arith.constant 0 : index
    %c6 = arith.constant 6 : index
    %c3_35 = arith.constant 3 : index
    %51 = vector.load %arg8[%c0_33, %c0_34, %c6, %c3_35] : memref<2x2x22x22xf32, #tpu.memory_space<vmem>>, vector<2x2x1x16xf32>
    %52 = vector.shape_cast %51 : vector<2x2x1x16xf32> to vector<2x2x16xf32>
    %53 = vector.shape_cast %50 : vector<2x2x16xf32> to vector<2x2x1x16xf32>
    tpu.vector_store %arg8[%c0_33, %c0_34, %c6, %c3_35], %53 {strides = array<i32>} : memref<2x2x22x22xf32, #tpu.memory_space<vmem>>, vector<2x2x1x16xf32>,
    %54 = vector.extract_strided_slice %35 {offsets = [0, 0, 64], sizes = [2, 2, 16], strides = [1, 1, 1]} : vector<2x2x256xf32> to vector<2x2x16xf32>
    %c0_36 = arith.constant 0 : index
    %c0_37 = arith.constant 0 : index
    %c7 = arith.constant 7 : index
    %c3_38 = arith.constant 3 : index
    %55 = vector.load %arg8[%c0_36, %c0_37, %c7, %c3_38] : memref<2x2x22x22xf32, #tpu.memory_space<vmem>>, vector<2x2x1x16xf32>
    %56 = vector.shape_cast %55 : vector<2x2x1x16xf32> to vector<2x2x16xf32>
    %57 = vector.shape_cast %54 : vector<2x2x16xf32> to vector<2x2x1x16xf32>
    tpu.vector_store %arg8[%c0_36, %c0_37, %c7, %c3_38], %57 {strides = array<i32>} : memref<2x2x22x22xf32, #tpu.memory_space<vmem>>, vector<2x2x1x16xf32>,
    %58 = vector.extract_strided_slice %35 {offsets = [0, 0, 80], sizes = [2, 2, 16], strides = [1, 1, 1]} : vector<2x2x256xf32> to vector<2x2x16xf32>
    %c0_39 = arith.constant 0 : index
    %c0_40 = arith.constant 0 : index
    %c8 = arith.constant 8 : index
    %c3_41 = arith.constant 3 : index
    %59 = vector.load %arg8[%c0_39, %c0_40, %c8, %c3_41] : memref<2x2x22x22xf32, #tpu.memory_space<vmem>>, vector<2x2x1x16xf32>
    %60 = vector.shape_cast %59 : vector<2x2x1x16xf32> to vector<2x2x16xf32>
    %61 = vector.shape_cast %58 : vector<2x2x16xf32> to vector<2x2x1x16xf32>
    tpu.vector_store %arg8[%c0_39, %c0_40, %c8, %c3_41], %61 {strides = array<i32>} : memref<2x2x22x22xf32, #tpu.memory_space<vmem>>, vector<2x2x1x16xf32>,
    %62 = vector.extract_strided_slice %35 {offsets = [0, 0, 96], sizes = [2, 2, 16], strides = [1, 1, 1]} : vector<2x2x256xf32> to vector<2x2x16xf32>
    %c0_42 = arith.constant 0 : index
    %c0_43 = arith.constant 0 : index
    %c9 = arith.constant 9 : index
    %c3_44 = arith.constant 3 : index
    %63 = vector.load %arg8[%c0_42, %c0_43, %c9, %c3_44] : memref<2x2x22x22xf32, #tpu.memory_space<vmem>>, vector<2x2x1x16xf32>
    %64 = vector.shape_cast %63 : vector<2x2x1x16xf32> to vector<2x2x16xf32>
    %65 = vector.shape_cast %62 : vector<2x2x16xf32> to vector<2x2x1x16xf32>
    tpu.vector_store %arg8[%c0_42, %c0_43, %c9, %c3_44], %65 {strides = array<i32>} : memref<2x2x22x22xf32, #tpu.memory_space<vmem>>, vector<2x2x1x16xf32>,
    %66 = vector.extract_strided_slice %35 {offsets = [0, 0, 112], sizes = [2, 2, 16], strides = [1, 1, 1]} : vector<2x2x256xf32> to vector<2x2x16xf32>
    %c0_45 = arith.constant 0 : index
    %c0_46 = arith.constant 0 : index
    %c10 = arith.constant 10 : index
    %c3_47 = arith.constant 3 : index
    %67 = vector.load %arg8[%c0_45, %c0_46, %c10, %c3_47] : memref<2x2x22x22xf32, #tpu.memory_space<vmem>>, vector<2x2x1x16xf32>
    %68 = vector.shape_cast %67 : vector<2x2x1x16xf32> to vector<2x2x16xf32>
    %69 = vector.shape_cast %66 : vector<2x2x16xf32> to vector<2x2x1x16xf32>
    tpu.vector_store %arg8[%c0_45, %c0_46, %c10, %c3_47], %69 {strides = array<i32>} : memref<2x2x22x22xf32, #tpu.memory_space<vmem>>, vector<2x2x1x16xf32>,
    %70 = vector.extract_strided_slice %35 {offsets = [0, 0, 128], sizes = [2, 2, 16], strides = [1, 1, 1]} : vector<2x2x256xf32> to vector<2x2x16xf32>
    %c0_48 = arith.constant 0 : index
    %c0_49 = arith.constant 0 : index
    %c11 = arith.constant 11 : index
    %c3_50 = arith.constant 3 : index
    %71 = vector.load %arg8[%c0_48, %c0_49, %c11, %c3_50] : memref<2x2x22x22xf32, #tpu.memory_space<vmem>>, vector<2x2x1x16xf32>
    %72 = vector.shape_cast %71 : vector<2x2x1x16xf32> to vector<2x2x16xf32>
    %73 = vector.shape_cast %70 : vector<2x2x16xf32> to vector<2x2x1x16xf32>
    tpu.vector_store %arg8[%c0_48, %c0_49, %c11, %c3_50], %73 {strides = array<i32>} : memref<2x2x22x22xf32, #tpu.memory_space<vmem>>, vector<2x2x1x16xf32>,
    %74 = vector.extract_strided_slice %35 {offsets = [0, 0, 144], sizes = [2, 2, 16], strides = [1, 1, 1]} : vector<2x2x256xf32> to vector<2x2x16xf32>
    %c0_51 = arith.constant 0 : index
    %c0_52 = arith.constant 0 : index
    %c12 = arith.constant 12 : index
    %c3_53 = arith.constant 3 : index
    %75 = vector.load %arg8[%c0_51, %c0_52, %c12, %c3_53] : memref<2x2x22x22xf32, #tpu.memory_space<vmem>>, vector<2x2x1x16xf32>
    %76 = vector.shape_cast %75 : vector<2x2x1x16xf32> to vector<2x2x16xf32>
    %77 = vector.shape_cast %74 : vector<2x2x16xf32> to vector<2x2x1x16xf32>
    tpu.vector_store %arg8[%c0_51, %c0_52, %c12, %c3_53], %77 {strides = array<i32>} : memref<2x2x22x22xf32, #tpu.memory_space<vmem>>, vector<2x2x1x16xf32>,
    %78 = vector.extract_strided_slice %35 {offsets = [0, 0, 160], sizes = [2, 2, 16], strides = [1, 1, 1]} : vector<2x2x256xf32> to vector<2x2x16xf32>
    %c0_54 = arith.constant 0 : index
    %c0_55 = arith.constant 0 : index
    %c13 = arith.constant 13 : index
    %c3_56 = arith.constant 3 : index
    %79 = vector.load %arg8[%c0_54, %c0_55, %c13, %c3_56] : memref<2x2x22x22xf32, #tpu.memory_space<vmem>>, vector<2x2x1x16xf32>
    %80 = vector.shape_cast %79 : vector<2x2x1x16xf32> to vector<2x2x16xf32>
    %81 = vector.shape_cast %78 : vector<2x2x16xf32> to vector<2x2x1x16xf32>
    tpu.vector_store %arg8[%c0_54, %c0_55, %c13, %c3_56], %81 {strides = array<i32>} : memref<2x2x22x22xf32, #tpu.memory_space<vmem>>, vector<2x2x1x16xf32>,
    %82 = vector.extract_strided_slice %35 {offsets = [0, 0, 176], sizes = [2, 2, 16], strides = [1, 1, 1]} : vector<2x2x256xf32> to vector<2x2x16xf32>
    %c0_57 = arith.constant 0 : index
    %c0_58 = arith.constant 0 : index
    %c14 = arith.constant 14 : index
    %c3_59 = arith.constant 3 : index
    %83 = vector.load %arg8[%c0_57, %c0_58, %c14, %c3_59] : memref<2x2x22x22xf32, #tpu.memory_space<vmem>>, vector<2x2x1x16xf32>
    %84 = vector.shape_cast %83 : vector<2x2x1x16xf32> to vector<2x2x16xf32>
    %85 = vector.shape_cast %82 : vector<2x2x16xf32> to vector<2x2x1x16xf32>
    tpu.vector_store %arg8[%c0_57, %c0_58, %c14, %c3_59], %85 {strides = array<i32>} : memref<2x2x22x22xf32, #tpu.memory_space<vmem>>, vector<2x2x1x16xf32>,
    %86 = vector.extract_strided_slice %35 {offsets = [0, 0, 192], sizes = [2, 2, 16], strides = [1, 1, 1]} : vector<2x2x256xf32> to vector<2x2x16xf32>
    %c0_60 = arith.constant 0 : index
    %c0_61 = arith.constant 0 : index
    %c15 = arith.constant 15 : index
    %c3_62 = arith.constant 3 : index
    %87 = vector.load %arg8[%c0_60, %c0_61, %c15, %c3_62] : memref<2x2x22x22xf32, #tpu.memory_space<vmem>>, vector<2x2x1x16xf32>
    %88 = vector.shape_cast %87 : vector<2x2x1x16xf32> to vector<2x2x16xf32>
    %89 = vector.shape_cast %86 : vector<2x2x16xf32> to vector<2x2x1x16xf32>
    tpu.vector_store %arg8[%c0_60, %c0_61, %c15, %c3_62], %89 {strides = array<i32>} : memref<2x2x22x22xf32, #tpu.memory_space<vmem>>, vector<2x2x1x16xf32>,
    %90 = vector.extract_strided_slice %35 {offsets = [0, 0, 208], sizes = [2, 2, 16], strides = [1, 1, 1]} : vector<2x2x256xf32> to vector<2x2x16xf32>
    %c0_63 = arith.constant 0 : index
    %c0_64 = arith.constant 0 : index
    %c16 = arith.constant 16 : index
    %c3_65 = arith.constant 3 : index
    %91 = vector.load %arg8[%c0_63, %c0_64, %c16, %c3_65] : memref<2x2x22x22xf32, #tpu.memory_space<vmem>>, vector<2x2x1x16xf32>
    %92 = vector.shape_cast %91 : vector<2x2x1x16xf32> to vector<2x2x16xf32>
    %93 = vector.shape_cast %90 : vector<2x2x16xf32> to vector<2x2x1x16xf32>
    tpu.vector_store %arg8[%c0_63, %c0_64, %c16, %c3_65], %93 {strides = array<i32>} : memref<2x2x22x22xf32, #tpu.memory_space<vmem>>, vector<2x2x1x16xf32>,
    %94 = vector.extract_strided_slice %35 {offsets = [0, 0, 224], sizes = [2, 2, 16], strides = [1, 1, 1]} : vector<2x2x256xf32> to vector<2x2x16xf32>
    %c0_66 = arith.constant 0 : index
    %c0_67 = arith.constant 0 : index
    %c17 = arith.constant 17 : index
    %c3_68 = arith.constant 3 : index
    %95 = vector.load %arg8[%c0_66, %c0_67, %c17, %c3_68] : memref<2x2x22x22xf32, #tpu.memory_space<vmem>>, vector<2x2x1x16xf32>
    %96 = vector.shape_cast %95 : vector<2x2x1x16xf32> to vector<2x2x16xf32>
    %97 = vector.shape_cast %94 : vector<2x2x16xf32> to vector<2x2x1x16xf32>
    tpu.vector_store %arg8[%c0_66, %c0_67, %c17, %c3_68], %97 {strides = array<i32>} : memref<2x2x22x22xf32, #tpu.memory_space<vmem>>, vector<2x2x1x16xf32>,
    %98 = vector.extract_strided_slice %35 {offsets = [0, 0, 240], sizes = [2, 2, 16], strides = [1, 1, 1]} : vector<2x2x256xf32> to vector<2x2x16xf32>
    %c0_69 = arith.constant 0 : index
    %c0_70 = arith.constant 0 : index
    %c18 = arith.constant 18 : index
    %c3_71 = arith.constant 3 : index
    %99 = vector.load %arg8[%c0_69, %c0_70, %c18, %c3_71] : memref<2x2x22x22xf32, #tpu.memory_space<vmem>>, vector<2x2x1x16xf32>
    %100 = vector.shape_cast %99 : vector<2x2x1x16xf32> to vector<2x2x16xf32>
    %101 = vector.shape_cast %98 : vector<2x2x16xf32> to vector<2x2x1x16xf32>
    tpu.vector_store %arg8[%c0_69, %c0_70, %c18, %c3_71], %101 {strides = array<i32>} : memref<2x2x22x22xf32, #tpu.memory_space<vmem>>, vector<2x2x1x16xf32>,
    %c0_72 = arith.constant 0 : index
    %c0_73 = arith.constant 0 : index
    %c0_74 = arith.constant 0 : index
    %c0_75 = arith.constant 0 : index
    %102 = vector.load %arg8[%c0_72, %c0_73, %c0_74, %c0_75] : memref<2x2x22x22xf32, #tpu.memory_space<vmem>>, vector<2x2x22x22xf32>
    %103 = vector.extract_strided_slice %102 {offsets = [0, 0, 0, 0], sizes = [2, 2, 22, 16], strides = [1, 1, 1, 1]} : vector<2x2x22x22xf32> to vector<2x2x22x16xf32>
    %104 = vector.extract_strided_slice %102 {offsets = [0, 0, 0, 1], sizes = [2, 2, 22, 16], strides = [1, 1, 1, 1]} : vector<2x2x22x22xf32> to vector<2x2x22x16xf32>
    %105 = vector.extract_strided_slice %102 {offsets = [0, 0, 0, 2], sizes = [2, 2, 22, 16], strides = [1, 1, 1, 1]} : vector<2x2x22x22xf32> to vector<2x2x22x16xf32>
    %106 = vector.extract_strided_slice %102 {offsets = [0, 0, 0, 3], sizes = [2, 2, 22, 16], strides = [1, 1, 1, 1]} : vector<2x2x22x22xf32> to vector<2x2x22x16xf32>
    %107 = vector.extract_strided_slice %102 {offsets = [0, 0, 0, 4], sizes = [2, 2, 22, 16], strides = [1, 1, 1, 1]} : vector<2x2x22x22xf32> to vector<2x2x22x16xf32>
    %108 = vector.extract_strided_slice %102 {offsets = [0, 0, 0, 5], sizes = [2, 2, 22, 16], strides = [1, 1, 1, 1]} : vector<2x2x22x22xf32> to vector<2x2x22x16xf32>
    %109 = vector.extract_strided_slice %102 {offsets = [0, 0, 0, 6], sizes = [2, 2, 22, 16], strides = [1, 1, 1, 1]} : vector<2x2x22x22xf32> to vector<2x2x22x16xf32>
    %cst_76 = arith.constant 0.000000e+00 : f32
    %110 = vector.broadcast %cst_76 : f32 to vector<2x16x16xf32>
    %cst_77 = arith.constant 0.000000e+00 : f32
    %111 = vector.broadcast %cst_77 : f32 to vector<2x22x16xf32>
    %c0_78 = arith.constant 0 : index
    %112 = memref.load %arg5[%c0_78] : memref<98xf32, #tpu.memory_space<smem>>
    %113 = vector.extract_strided_slice %103 {offsets = [0, 0, 0, 0], sizes = [2, 1, 22, 16], strides = [1, 1, 1, 1]} : vector<2x2x22x16xf32> to vector<2x1x22x16xf32>
    %114 = vector.shape_cast %113 : vector<2x1x22x16xf32> to vector<2x22x16xf32>
    %115 = vector.broadcast %112 : f32 to vector<2x22x16xf32>
    %116 = arith.mulf %115, %114 : vector<2x22x16xf32>
    %117 = arith.addf %111, %116 : vector<2x22x16xf32>
    %c49 = arith.constant 49 : index
    %118 = memref.load %arg5[%c49] : memref<98xf32, #tpu.memory_space<smem>>
    %119 = vector.extract_strided_slice %103 {offsets = [0, 1, 0, 0], sizes = [2, 1, 22, 16], strides = [1, 1, 1, 1]} : vector<2x2x22x16xf32> to vector<2x1x22x16xf32>
    %120 = vector.shape_cast %119 : vector<2x1x22x16xf32> to vector<2x22x16xf32>
    %121 = vector.broadcast %118 : f32 to vector<2x22x16xf32>
    %122 = arith.mulf %121, %120 : vector<2x22x16xf32>
    %123 = arith.addf %117, %122 : vector<2x22x16xf32>
    %c1 = arith.constant 1 : index
    %124 = memref.load %arg5[%c1] : memref<98xf32, #tpu.memory_space<smem>>
    %125 = vector.extract_strided_slice %104 {offsets = [0, 0, 0, 0], sizes = [2, 1, 22, 16], strides = [1, 1, 1, 1]} : vector<2x2x22x16xf32> to vector<2x1x22x16xf32>
    %126 = vector.shape_cast %125 : vector<2x1x22x16xf32> to vector<2x22x16xf32>
    %127 = vector.broadcast %124 : f32 to vector<2x22x16xf32>
    %128 = arith.mulf %127, %126 : vector<2x22x16xf32>
    %129 = arith.addf %123, %128 : vector<2x22x16xf32>
    %c50 = arith.constant 50 : index
    %130 = memref.load %arg5[%c50] : memref<98xf32, #tpu.memory_space<smem>>
    %131 = vector.extract_strided_slice %104 {offsets = [0, 1, 0, 0], sizes = [2, 1, 22, 16], strides = [1, 1, 1, 1]} : vector<2x2x22x16xf32> to vector<2x1x22x16xf32>
    %132 = vector.shape_cast %131 : vector<2x1x22x16xf32> to vector<2x22x16xf32>
    %133 = vector.broadcast %130 : f32 to vector<2x22x16xf32>
    %134 = arith.mulf %133, %132 : vector<2x22x16xf32>
    %135 = arith.addf %129, %134 : vector<2x22x16xf32>
    %c2 = arith.constant 2 : index
    %136 = memref.load %arg5[%c2] : memref<98xf32, #tpu.memory_space<smem>>
    %137 = vector.extract_strided_slice %105 {offsets = [0, 0, 0, 0], sizes = [2, 1, 22, 16], strides = [1, 1, 1, 1]} : vector<2x2x22x16xf32> to vector<2x1x22x16xf32>
    %138 = vector.shape_cast %137 : vector<2x1x22x16xf32> to vector<2x22x16xf32>
    %139 = vector.broadcast %136 : f32 to vector<2x22x16xf32>
    %140 = arith.mulf %139, %138 : vector<2x22x16xf32>
    %141 = arith.addf %135, %140 : vector<2x22x16xf32>
    %c51 = arith.constant 51 : index
    %142 = memref.load %arg5[%c51] : memref<98xf32, #tpu.memory_space<smem>>
    %143 = vector.extract_strided_slice %105 {offsets = [0, 1, 0, 0], sizes = [2, 1, 22, 16], strides = [1, 1, 1, 1]} : vector<2x2x22x16xf32> to vector<2x1x22x16xf32>
    %144 = vector.shape_cast %143 : vector<2x1x22x16xf32> to vector<2x22x16xf32>
    %145 = vector.broadcast %142 : f32 to vector<2x22x16xf32>
    %146 = arith.mulf %145, %144 : vector<2x22x16xf32>
    %147 = arith.addf %141, %146 : vector<2x22x16xf32>
    %c3_79 = arith.constant 3 : index
    %148 = memref.load %arg5[%c3_79] : memref<98xf32, #tpu.memory_space<smem>>
    %149 = vector.extract_strided_slice %106 {offsets = [0, 0, 0, 0], sizes = [2, 1, 22, 16], strides = [1, 1, 1, 1]} : vector<2x2x22x16xf32> to vector<2x1x22x16xf32>
    %150 = vector.shape_cast %149 : vector<2x1x22x16xf32> to vector<2x22x16xf32>
    %151 = vector.broadcast %148 : f32 to vector<2x22x16xf32>
    %152 = arith.mulf %151, %150 : vector<2x22x16xf32>
    %153 = arith.addf %147, %152 : vector<2x22x16xf32>
    %c52 = arith.constant 52 : index
    %154 = memref.load %arg5[%c52] : memref<98xf32, #tpu.memory_space<smem>>
    %155 = vector.extract_strided_slice %106 {offsets = [0, 1, 0, 0], sizes = [2, 1, 22, 16], strides = [1, 1, 1, 1]} : vector<2x2x22x16xf32> to vector<2x1x22x16xf32>
    %156 = vector.shape_cast %155 : vector<2x1x22x16xf32> to vector<2x22x16xf32>
    %157 = vector.broadcast %154 : f32 to vector<2x22x16xf32>
    %158 = arith.mulf %157, %156 : vector<2x22x16xf32>
    %159 = arith.addf %153, %158 : vector<2x22x16xf32>
    %c4_80 = arith.constant 4 : index
    %160 = memref.load %arg5[%c4_80] : memref<98xf32, #tpu.memory_space<smem>>
    %161 = vector.extract_strided_slice %107 {offsets = [0, 0, 0, 0], sizes = [2, 1, 22, 16], strides = [1, 1, 1, 1]} : vector<2x2x22x16xf32> to vector<2x1x22x16xf32>
    %162 = vector.shape_cast %161 : vector<2x1x22x16xf32> to vector<2x22x16xf32>
    %163 = vector.broadcast %160 : f32 to vector<2x22x16xf32>
    %164 = arith.mulf %163, %162 : vector<2x22x16xf32>
    %165 = arith.addf %159, %164 : vector<2x22x16xf32>
    %c53 = arith.constant 53 : index
    %166 = memref.load %arg5[%c53] : memref<98xf32, #tpu.memory_space<smem>>
    %167 = vector.extract_strided_slice %107 {offsets = [0, 1, 0, 0], sizes = [2, 1, 22, 16], strides = [1, 1, 1, 1]} : vector<2x2x22x16xf32> to vector<2x1x22x16xf32>
    %168 = vector.shape_cast %167 : vector<2x1x22x16xf32> to vector<2x22x16xf32>
    %169 = vector.broadcast %166 : f32 to vector<2x22x16xf32>
    %170 = arith.mulf %169, %168 : vector<2x22x16xf32>
    %171 = arith.addf %165, %170 : vector<2x22x16xf32>
    %c5_81 = arith.constant 5 : index
    %172 = memref.load %arg5[%c5_81] : memref<98xf32, #tpu.memory_space<smem>>
    %173 = vector.extract_strided_slice %108 {offsets = [0, 0, 0, 0], sizes = [2, 1, 22, 16], strides = [1, 1, 1, 1]} : vector<2x2x22x16xf32> to vector<2x1x22x16xf32>
    %174 = vector.shape_cast %173 : vector<2x1x22x16xf32> to vector<2x22x16xf32>
    %175 = vector.broadcast %172 : f32 to vector<2x22x16xf32>
    %176 = arith.mulf %175, %174 : vector<2x22x16xf32>
    %177 = arith.addf %171, %176 : vector<2x22x16xf32>
    %c54 = arith.constant 54 : index
    %178 = memref.load %arg5[%c54] : memref<98xf32, #tpu.memory_space<smem>>
    %179 = vector.extract_strided_slice %108 {offsets = [0, 1, 0, 0], sizes = [2, 1, 22, 16], strides = [1, 1, 1, 1]} : vector<2x2x22x16xf32> to vector<2x1x22x16xf32>
    %180 = vector.shape_cast %179 : vector<2x1x22x16xf32> to vector<2x22x16xf32>
    %181 = vector.broadcast %178 : f32 to vector<2x22x16xf32>
    %182 = arith.mulf %181, %180 : vector<2x22x16xf32>
    %183 = arith.addf %177, %182 : vector<2x22x16xf32>
    %c6_82 = arith.constant 6 : index
    %184 = memref.load %arg5[%c6_82] : memref<98xf32, #tpu.memory_space<smem>>
    %185 = vector.extract_strided_slice %109 {offsets = [0, 0, 0, 0], sizes = [2, 1, 22, 16], strides = [1, 1, 1, 1]} : vector<2x2x22x16xf32> to vector<2x1x22x16xf32>
    %186 = vector.shape_cast %185 : vector<2x1x22x16xf32> to vector<2x22x16xf32>
    %187 = vector.broadcast %184 : f32 to vector<2x22x16xf32>
    %188 = arith.mulf %187, %186 : vector<2x22x16xf32>
    %189 = arith.addf %183, %188 : vector<2x22x16xf32>
    %c55 = arith.constant 55 : index
    %190 = memref.load %arg5[%c55] : memref<98xf32, #tpu.memory_space<smem>>
    %191 = vector.extract_strided_slice %109 {offsets = [0, 1, 0, 0], sizes = [2, 1, 22, 16], strides = [1, 1, 1, 1]} : vector<2x2x22x16xf32> to vector<2x1x22x16xf32>
    %192 = vector.shape_cast %191 : vector<2x1x22x16xf32> to vector<2x22x16xf32>
    %193 = vector.broadcast %190 : f32 to vector<2x22x16xf32>
    %194 = arith.mulf %193, %192 : vector<2x22x16xf32>
    %195 = arith.addf %189, %194 : vector<2x22x16xf32>
    %196 = vector.extract_strided_slice %195 {offsets = [0, 0, 0], sizes = [2, 16, 16], strides = [1, 1, 1]} : vector<2x22x16xf32> to vector<2x16x16xf32>
    %197 = arith.addf %110, %196 : vector<2x16x16xf32>
    %cst_83 = arith.constant 0.000000e+00 : f32
    %198 = vector.broadcast %cst_83 : f32 to vector<2x22x16xf32>
    %c7_84 = arith.constant 7 : index
    %199 = memref.load %arg5[%c7_84] : memref<98xf32, #tpu.memory_space<smem>>
    %200 = vector.extract_strided_slice %103 {offsets = [0, 0, 0, 0], sizes = [2, 1, 22, 16], strides = [1, 1, 1, 1]} : vector<2x2x22x16xf32> to vector<2x1x22x16xf32>
    %201 = vector.shape_cast %200 : vector<2x1x22x16xf32> to vector<2x22x16xf32>
    %202 = vector.broadcast %199 : f32 to vector<2x22x16xf32>
    %203 = arith.mulf %202, %201 : vector<2x22x16xf32>
    %204 = arith.addf %198, %203 : vector<2x22x16xf32>
    %c56 = arith.constant 56 : index
    %205 = memref.load %arg5[%c56] : memref<98xf32, #tpu.memory_space<smem>>
    %206 = vector.extract_strided_slice %103 {offsets = [0, 1, 0, 0], sizes = [2, 1, 22, 16], strides = [1, 1, 1, 1]} : vector<2x2x22x16xf32> to vector<2x1x22x16xf32>
    %207 = vector.shape_cast %206 : vector<2x1x22x16xf32> to vector<2x22x16xf32>
    %208 = vector.broadcast %205 : f32 to vector<2x22x16xf32>
    %209 = arith.mulf %208, %207 : vector<2x22x16xf32>
    %210 = arith.addf %204, %209 : vector<2x22x16xf32>
    %c8_85 = arith.constant 8 : index
    %211 = memref.load %arg5[%c8_85] : memref<98xf32, #tpu.memory_space<smem>>
    %212 = vector.extract_strided_slice %104 {offsets = [0, 0, 0, 0], sizes = [2, 1, 22, 16], strides = [1, 1, 1, 1]} : vector<2x2x22x16xf32> to vector<2x1x22x16xf32>
    %213 = vector.shape_cast %212 : vector<2x1x22x16xf32> to vector<2x22x16xf32>
    %214 = vector.broadcast %211 : f32 to vector<2x22x16xf32>
    %215 = arith.mulf %214, %213 : vector<2x22x16xf32>
    %216 = arith.addf %210, %215 : vector<2x22x16xf32>
    %c57 = arith.constant 57 : index
    %217 = memref.load %arg5[%c57] : memref<98xf32, #tpu.memory_space<smem>>
    %218 = vector.extract_strided_slice %104 {offsets = [0, 1, 0, 0], sizes = [2, 1, 22, 16], strides = [1, 1, 1, 1]} : vector<2x2x22x16xf32> to vector<2x1x22x16xf32>
    %219 = vector.shape_cast %218 : vector<2x1x22x16xf32> to vector<2x22x16xf32>
    %220 = vector.broadcast %217 : f32 to vector<2x22x16xf32>
    %221 = arith.mulf %220, %219 : vector<2x22x16xf32>
    %222 = arith.addf %216, %221 : vector<2x22x16xf32>
    %c9_86 = arith.constant 9 : index
    %223 = memref.load %arg5[%c9_86] : memref<98xf32, #tpu.memory_space<smem>>
    %224 = vector.extract_strided_slice %105 {offsets = [0, 0, 0, 0], sizes = [2, 1, 22, 16], strides = [1, 1, 1, 1]} : vector<2x2x22x16xf32> to vector<2x1x22x16xf32>
    %225 = vector.shape_cast %224 : vector<2x1x22x16xf32> to vector<2x22x16xf32>
    %226 = vector.broadcast %223 : f32 to vector<2x22x16xf32>
    %227 = arith.mulf %226, %225 : vector<2x22x16xf32>
    %228 = arith.addf %222, %227 : vector<2x22x16xf32>
    %c58 = arith.constant 58 : index
    %229 = memref.load %arg5[%c58] : memref<98xf32, #tpu.memory_space<smem>>
    %230 = vector.extract_strided_slice %105 {offsets = [0, 1, 0, 0], sizes = [2, 1, 22, 16], strides = [1, 1, 1, 1]} : vector<2x2x22x16xf32> to vector<2x1x22x16xf32>
    %231 = vector.shape_cast %230 : vector<2x1x22x16xf32> to vector<2x22x16xf32>
    %232 = vector.broadcast %229 : f32 to vector<2x22x16xf32>
    %233 = arith.mulf %232, %231 : vector<2x22x16xf32>
    %234 = arith.addf %228, %233 : vector<2x22x16xf32>
    %c10_87 = arith.constant 10 : index
    %235 = memref.load %arg5[%c10_87] : memref<98xf32, #tpu.memory_space<smem>>
    %236 = vector.extract_strided_slice %106 {offsets = [0, 0, 0, 0], sizes = [2, 1, 22, 16], strides = [1, 1, 1, 1]} : vector<2x2x22x16xf32> to vector<2x1x22x16xf32>
    %237 = vector.shape_cast %236 : vector<2x1x22x16xf32> to vector<2x22x16xf32>
    %238 = vector.broadcast %235 : f32 to vector<2x22x16xf32>
    %239 = arith.mulf %238, %237 : vector<2x22x16xf32>
    %240 = arith.addf %234, %239 : vector<2x22x16xf32>
    %c59 = arith.constant 59 : index
    %241 = memref.load %arg5[%c59] : memref<98xf32, #tpu.memory_space<smem>>
    %242 = vector.extract_strided_slice %106 {offsets = [0, 1, 0, 0], sizes = [2, 1, 22, 16], strides = [1, 1, 1, 1]} : vector<2x2x22x16xf32> to vector<2x1x22x16xf32>
    %243 = vector.shape_cast %242 : vector<2x1x22x16xf32> to vector<2x22x16xf32>
    %244 = vector.broadcast %241 : f32 to vector<2x22x16xf32>
    %245 = arith.mulf %244, %243 : vector<2x22x16xf32>
    %246 = arith.addf %240, %245 : vector<2x22x16xf32>
    %c11_88 = arith.constant 11 : index
    %247 = memref.load %arg5[%c11_88] : memref<98xf32, #tpu.memory_space<smem>>
    %248 = vector.extract_strided_slice %107 {offsets = [0, 0, 0, 0], sizes = [2, 1, 22, 16], strides = [1, 1, 1, 1]} : vector<2x2x22x16xf32> to vector<2x1x22x16xf32>
    %249 = vector.shape_cast %248 : vector<2x1x22x16xf32> to vector<2x22x16xf32>
    %250 = vector.broadcast %247 : f32 to vector<2x22x16xf32>
    %251 = arith.mulf %250, %249 : vector<2x22x16xf32>
    %252 = arith.addf %246, %251 : vector<2x22x16xf32>
    %c60 = arith.constant 60 : index
    %253 = memref.load %arg5[%c60] : memref<98xf32, #tpu.memory_space<smem>>
    %254 = vector.extract_strided_slice %107 {offsets = [0, 1, 0, 0], sizes = [2, 1, 22, 16], strides = [1, 1, 1, 1]} : vector<2x2x22x16xf32> to vector<2x1x22x16xf32>
    %255 = vector.shape_cast %254 : vector<2x1x22x16xf32> to vector<2x22x16xf32>
    %256 = vector.broadcast %253 : f32 to vector<2x22x16xf32>
    %257 = arith.mulf %256, %255 : vector<2x22x16xf32>
    %258 = arith.addf %252, %257 : vector<2x22x16xf32>
    %c12_89 = arith.constant 12 : index
    %259 = memref.load %arg5[%c12_89] : memref<98xf32, #tpu.memory_space<smem>>
    %260 = vector.extract_strided_slice %108 {offsets = [0, 0, 0, 0], sizes = [2, 1, 22, 16], strides = [1, 1, 1, 1]} : vector<2x2x22x16xf32> to vector<2x1x22x16xf32>
    %261 = vector.shape_cast %260 : vector<2x1x22x16xf32> to vector<2x22x16xf32>
    %262 = vector.broadcast %259 : f32 to vector<2x22x16xf32>
    %263 = arith.mulf %262, %261 : vector<2x22x16xf32>
    %264 = arith.addf %258, %263 : vector<2x22x16xf32>
    %c61 = arith.constant 61 : index
    %265 = memref.load %arg5[%c61] : memref<98xf32, #tpu.memory_space<smem>>
    %266 = vector.extract_strided_slice %108 {offsets = [0, 1, 0, 0], sizes = [2, 1, 22, 16], strides = [1, 1, 1, 1]} : vector<2x2x22x16xf32> to vector<2x1x22x16xf32>
    %267 = vector.shape_cast %266 : vector<2x1x22x16xf32> to vector<2x22x16xf32>
    %268 = vector.broadcast %265 : f32 to vector<2x22x16xf32>
    %269 = arith.mulf %268, %267 : vector<2x22x16xf32>
    %270 = arith.addf %264, %269 : vector<2x22x16xf32>
    %c13_90 = arith.constant 13 : index
    %271 = memref.load %arg5[%c13_90] : memref<98xf32, #tpu.memory_space<smem>>
    %272 = vector.extract_strided_slice %109 {offsets = [0, 0, 0, 0], sizes = [2, 1, 22, 16], strides = [1, 1, 1, 1]} : vector<2x2x22x16xf32> to vector<2x1x22x16xf32>
    %273 = vector.shape_cast %272 : vector<2x1x22x16xf32> to vector<2x22x16xf32>
    %274 = vector.broadcast %271 : f32 to vector<2x22x16xf32>
    %275 = arith.mulf %274, %273 : vector<2x22x16xf32>
    %276 = arith.addf %270, %275 : vector<2x22x16xf32>
    %c62 = arith.constant 62 : index
    %277 = memref.load %arg5[%c62] : memref<98xf32, #tpu.memory_space<smem>>
    %278 = vector.extract_strided_slice %109 {offsets = [0, 1, 0, 0], sizes = [2, 1, 22, 16], strides = [1, 1, 1, 1]} : vector<2x2x22x16xf32> to vector<2x1x22x16xf32>
    %279 = vector.shape_cast %278 : vector<2x1x22x16xf32> to vector<2x22x16xf32>
    %280 = vector.broadcast %277 : f32 to vector<2x22x16xf32>
    %281 = arith.mulf %280, %279 : vector<2x22x16xf32>
    %282 = arith.addf %276, %281 : vector<2x22x16xf32>
    %283 = vector.extract_strided_slice %282 {offsets = [0, 1, 0], sizes = [2, 16, 16], strides = [1, 1, 1]} : vector<2x22x16xf32> to vector<2x16x16xf32>
    %284 = arith.addf %197, %283 : vector<2x16x16xf32>
    %cst_91 = arith.constant 0.000000e+00 : f32
    %285 = vector.broadcast %cst_91 : f32 to vector<2x22x16xf32>
    %c14_92 = arith.constant 14 : index
    %286 = memref.load %arg5[%c14_92] : memref<98xf32, #tpu.memory_space<smem>>
    %287 = vector.extract_strided_slice %103 {offsets = [0, 0, 0, 0], sizes = [2, 1, 22, 16], strides = [1, 1, 1, 1]} : vector<2x2x22x16xf32> to vector<2x1x22x16xf32>
    %288 = vector.shape_cast %287 : vector<2x1x22x16xf32> to vector<2x22x16xf32>
    %289 = vector.broadcast %286 : f32 to vector<2x22x16xf32>
    %290 = arith.mulf %289, %288 : vector<2x22x16xf32>
    %291 = arith.addf %285, %290 : vector<2x22x16xf32>
    %c63 = arith.constant 63 : index
    %292 = memref.load %arg5[%c63] : memref<98xf32, #tpu.memory_space<smem>>
    %293 = vector.extract_strided_slice %103 {offsets = [0, 1, 0, 0], sizes = [2, 1, 22, 16], strides = [1, 1, 1, 1]} : vector<2x2x22x16xf32> to vector<2x1x22x16xf32>
    %294 = vector.shape_cast %293 : vector<2x1x22x16xf32> to vector<2x22x16xf32>
    %295 = vector.broadcast %292 : f32 to vector<2x22x16xf32>
    %296 = arith.mulf %295, %294 : vector<2x22x16xf32>
    %297 = arith.addf %291, %296 : vector<2x22x16xf32>
    %c15_93 = arith.constant 15 : index
    %298 = memref.load %arg5[%c15_93] : memref<98xf32, #tpu.memory_space<smem>>
    %299 = vector.extract_strided_slice %104 {offsets = [0, 0, 0, 0], sizes = [2, 1, 22, 16], strides = [1, 1, 1, 1]} : vector<2x2x22x16xf32> to vector<2x1x22x16xf32>
    %300 = vector.shape_cast %299 : vector<2x1x22x16xf32> to vector<2x22x16xf32>
    %301 = vector.broadcast %298 : f32 to vector<2x22x16xf32>
    %302 = arith.mulf %301, %300 : vector<2x22x16xf32>
    %303 = arith.addf %297, %302 : vector<2x22x16xf32>
    %c64 = arith.constant 64 : index
    %304 = memref.load %arg5[%c64] : memref<98xf32, #tpu.memory_space<smem>>
    %305 = vector.extract_strided_slice %104 {offsets = [0, 1, 0, 0], sizes = [2, 1, 22, 16], strides = [1, 1, 1, 1]} : vector<2x2x22x16xf32> to vector<2x1x22x16xf32>
    %306 = vector.shape_cast %305 : vector<2x1x22x16xf32> to vector<2x22x16xf32>
    %307 = vector.broadcast %304 : f32 to vector<2x22x16xf32>
    %308 = arith.mulf %307, %306 : vector<2x22x16xf32>
    %309 = arith.addf %303, %308 : vector<2x22x16xf32>
    %c16_94 = arith.constant 16 : index
    %310 = memref.load %arg5[%c16_94] : memref<98xf32, #tpu.memory_space<smem>>
    %311 = vector.extract_strided_slice %105 {offsets = [0, 0, 0, 0], sizes = [2, 1, 22, 16], strides = [1, 1, 1, 1]} : vector<2x2x22x16xf32> to vector<2x1x22x16xf32>
    %312 = vector.shape_cast %311 : vector<2x1x22x16xf32> to vector<2x22x16xf32>
    %313 = vector.broadcast %310 : f32 to vector<2x22x16xf32>
    %314 = arith.mulf %313, %312 : vector<2x22x16xf32>
    %315 = arith.addf %309, %314 : vector<2x22x16xf32>
    %c65 = arith.constant 65 : index
    %316 = memref.load %arg5[%c65] : memref<98xf32, #tpu.memory_space<smem>>
    %317 = vector.extract_strided_slice %105 {offsets = [0, 1, 0, 0], sizes = [2, 1, 22, 16], strides = [1, 1, 1, 1]} : vector<2x2x22x16xf32> to vector<2x1x22x16xf32>
    %318 = vector.shape_cast %317 : vector<2x1x22x16xf32> to vector<2x22x16xf32>
    %319 = vector.broadcast %316 : f32 to vector<2x22x16xf32>
    %320 = arith.mulf %319, %318 : vector<2x22x16xf32>
    %321 = arith.addf %315, %320 : vector<2x22x16xf32>
    %c17_95 = arith.constant 17 : index
    %322 = memref.load %arg5[%c17_95] : memref<98xf32, #tpu.memory_space<smem>>
    %323 = vector.extract_strided_slice %106 {offsets = [0, 0, 0, 0], sizes = [2, 1, 22, 16], strides = [1, 1, 1, 1]} : vector<2x2x22x16xf32> to vector<2x1x22x16xf32>
    %324 = vector.shape_cast %323 : vector<2x1x22x16xf32> to vector<2x22x16xf32>
    %325 = vector.broadcast %322 : f32 to vector<2x22x16xf32>
    %326 = arith.mulf %325, %324 : vector<2x22x16xf32>
    %327 = arith.addf %321, %326 : vector<2x22x16xf32>
    %c66 = arith.constant 66 : index
    %328 = memref.load %arg5[%c66] : memref<98xf32, #tpu.memory_space<smem>>
    %329 = vector.extract_strided_slice %106 {offsets = [0, 1, 0, 0], sizes = [2, 1, 22, 16], strides = [1, 1, 1, 1]} : vector<2x2x22x16xf32> to vector<2x1x22x16xf32>
    %330 = vector.shape_cast %329 : vector<2x1x22x16xf32> to vector<2x22x16xf32>
    %331 = vector.broadcast %328 : f32 to vector<2x22x16xf32>
    %332 = arith.mulf %331, %330 : vector<2x22x16xf32>
    %333 = arith.addf %327, %332 : vector<2x22x16xf32>
    %c18_96 = arith.constant 18 : index
    %334 = memref.load %arg5[%c18_96] : memref<98xf32, #tpu.memory_space<smem>>
    %335 = vector.extract_strided_slice %107 {offsets = [0, 0, 0, 0], sizes = [2, 1, 22, 16], strides = [1, 1, 1, 1]} : vector<2x2x22x16xf32> to vector<2x1x22x16xf32>
    %336 = vector.shape_cast %335 : vector<2x1x22x16xf32> to vector<2x22x16xf32>
    %337 = vector.broadcast %334 : f32 to vector<2x22x16xf32>
    %338 = arith.mulf %337, %336 : vector<2x22x16xf32>
    %339 = arith.addf %333, %338 : vector<2x22x16xf32>
    %c67 = arith.constant 67 : index
    %340 = memref.load %arg5[%c67] : memref<98xf32, #tpu.memory_space<smem>>
    %341 = vector.extract_strided_slice %107 {offsets = [0, 1, 0, 0], sizes = [2, 1, 22, 16], strides = [1, 1, 1, 1]} : vector<2x2x22x16xf32> to vector<2x1x22x16xf32>
    %342 = vector.shape_cast %341 : vector<2x1x22x16xf32> to vector<2x22x16xf32>
    %343 = vector.broadcast %340 : f32 to vector<2x22x16xf32>
    %344 = arith.mulf %343, %342 : vector<2x22x16xf32>
    %345 = arith.addf %339, %344 : vector<2x22x16xf32>
    %c19 = arith.constant 19 : index
    %346 = memref.load %arg5[%c19] : memref<98xf32, #tpu.memory_space<smem>>
    %347 = vector.extract_strided_slice %108 {offsets = [0, 0, 0, 0], sizes = [2, 1, 22, 16], strides = [1, 1, 1, 1]} : vector<2x2x22x16xf32> to vector<2x1x22x16xf32>
    %348 = vector.shape_cast %347 : vector<2x1x22x16xf32> to vector<2x22x16xf32>
    %349 = vector.broadcast %346 : f32 to vector<2x22x16xf32>
    %350 = arith.mulf %349, %348 : vector<2x22x16xf32>
    %351 = arith.addf %345, %350 : vector<2x22x16xf32>
    %c68 = arith.constant 68 : index
    %352 = memref.load %arg5[%c68] : memref<98xf32, #tpu.memory_space<smem>>
    %353 = vector.extract_strided_slice %108 {offsets = [0, 1, 0, 0], sizes = [2, 1, 22, 16], strides = [1, 1, 1, 1]} : vector<2x2x22x16xf32> to vector<2x1x22x16xf32>
    %354 = vector.shape_cast %353 : vector<2x1x22x16xf32> to vector<2x22x16xf32>
    %355 = vector.broadcast %352 : f32 to vector<2x22x16xf32>
    %356 = arith.mulf %355, %354 : vector<2x22x16xf32>
    %357 = arith.addf %351, %356 : vector<2x22x16xf32>
    %c20 = arith.constant 20 : index
    %358 = memref.load %arg5[%c20] : memref<98xf32, #tpu.memory_space<smem>>
    %359 = vector.extract_strided_slice %109 {offsets = [0, 0, 0, 0], sizes = [2, 1, 22, 16], strides = [1, 1, 1, 1]} : vector<2x2x22x16xf32> to vector<2x1x22x16xf32>
    %360 = vector.shape_cast %359 : vector<2x1x22x16xf32> to vector<2x22x16xf32>
    %361 = vector.broadcast %358 : f32 to vector<2x22x16xf32>
    %362 = arith.mulf %361, %360 : vector<2x22x16xf32>
    %363 = arith.addf %357, %362 : vector<2x22x16xf32>
    %c69 = arith.constant 69 : index
    %364 = memref.load %arg5[%c69] : memref<98xf32, #tpu.memory_space<smem>>
    %365 = vector.extract_strided_slice %109 {offsets = [0, 1, 0, 0], sizes = [2, 1, 22, 16], strides = [1, 1, 1, 1]} : vector<2x2x22x16xf32> to vector<2x1x22x16xf32>
    %366 = vector.shape_cast %365 : vector<2x1x22x16xf32> to vector<2x22x16xf32>
    %367 = vector.broadcast %364 : f32 to vector<2x22x16xf32>
    %368 = arith.mulf %367, %366 : vector<2x22x16xf32>
    %369 = arith.addf %363, %368 : vector<2x22x16xf32>
    %370 = vector.extract_strided_slice %369 {offsets = [0, 2, 0], sizes = [2, 16, 16], strides = [1, 1, 1]} : vector<2x22x16xf32> to vector<2x16x16xf32>
    %371 = arith.addf %284, %370 : vector<2x16x16xf32>
    %cst_97 = arith.constant 0.000000e+00 : f32
    %372 = vector.broadcast %cst_97 : f32 to vector<2x22x16xf32>
    %c21 = arith.constant 21 : index
    %373 = memref.load %arg5[%c21] : memref<98xf32, #tpu.memory_space<smem>>
    %374 = vector.extract_strided_slice %103 {offsets = [0, 0, 0, 0], sizes = [2, 1, 22, 16], strides = [1, 1, 1, 1]} : vector<2x2x22x16xf32> to vector<2x1x22x16xf32>
    %375 = vector.shape_cast %374 : vector<2x1x22x16xf32> to vector<2x22x16xf32>
    %376 = vector.broadcast %373 : f32 to vector<2x22x16xf32>
    %377 = arith.mulf %376, %375 : vector<2x22x16xf32>
    %378 = arith.addf %372, %377 : vector<2x22x16xf32>
    %c70 = arith.constant 70 : index
    %379 = memref.load %arg5[%c70] : memref<98xf32, #tpu.memory_space<smem>>
    %380 = vector.extract_strided_slice %103 {offsets = [0, 1, 0, 0], sizes = [2, 1, 22, 16], strides = [1, 1, 1, 1]} : vector<2x2x22x16xf32> to vector<2x1x22x16xf32>
    %381 = vector.shape_cast %380 : vector<2x1x22x16xf32> to vector<2x22x16xf32>
    %382 = vector.broadcast %379 : f32 to vector<2x22x16xf32>
    %383 = arith.mulf %382, %381 : vector<2x22x16xf32>
    %384 = arith.addf %378, %383 : vector<2x22x16xf32>
    %c22 = arith.constant 22 : index
    %385 = memref.load %arg5[%c22] : memref<98xf32, #tpu.memory_space<smem>>
    %386 = vector.extract_strided_slice %104 {offsets = [0, 0, 0, 0], sizes = [2, 1, 22, 16], strides = [1, 1, 1, 1]} : vector<2x2x22x16xf32> to vector<2x1x22x16xf32>
    %387 = vector.shape_cast %386 : vector<2x1x22x16xf32> to vector<2x22x16xf32>
    %388 = vector.broadcast %385 : f32 to vector<2x22x16xf32>
    %389 = arith.mulf %388, %387 : vector<2x22x16xf32>
    %390 = arith.addf %384, %389 : vector<2x22x16xf32>
    %c71 = arith.constant 71 : index
    %391 = memref.load %arg5[%c71] : memref<98xf32, #tpu.memory_space<smem>>
    %392 = vector.extract_strided_slice %104 {offsets = [0, 1, 0, 0], sizes = [2, 1, 22, 16], strides = [1, 1, 1, 1]} : vector<2x2x22x16xf32> to vector<2x1x22x16xf32>
    %393 = vector.shape_cast %392 : vector<2x1x22x16xf32> to vector<2x22x16xf32>
    %394 = vector.broadcast %391 : f32 to vector<2x22x16xf32>
    %395 = arith.mulf %394, %393 : vector<2x22x16xf32>
    %396 = arith.addf %390, %395 : vector<2x22x16xf32>
    %c23 = arith.constant 23 : index
    %397 = memref.load %arg5[%c23] : memref<98xf32, #tpu.memory_space<smem>>
    %398 = vector.extract_strided_slice %105 {offsets = [0, 0, 0, 0], sizes = [2, 1, 22, 16], strides = [1, 1, 1, 1]} : vector<2x2x22x16xf32> to vector<2x1x22x16xf32>
    %399 = vector.shape_cast %398 : vector<2x1x22x16xf32> to vector<2x22x16xf32>
    %400 = vector.broadcast %397 : f32 to vector<2x22x16xf32>
    %401 = arith.mulf %400, %399 : vector<2x22x16xf32>
    %402 = arith.addf %396, %401 : vector<2x22x16xf32>
    %c72 = arith.constant 72 : index
    %403 = memref.load %arg5[%c72] : memref<98xf32, #tpu.memory_space<smem>>
    %404 = vector.extract_strided_slice %105 {offsets = [0, 1, 0, 0], sizes = [2, 1, 22, 16], strides = [1, 1, 1, 1]} : vector<2x2x22x16xf32> to vector<2x1x22x16xf32>
    %405 = vector.shape_cast %404 : vector<2x1x22x16xf32> to vector<2x22x16xf32>
    %406 = vector.broadcast %403 : f32 to vector<2x22x16xf32>
    %407 = arith.mulf %406, %405 : vector<2x22x16xf32>
    %408 = arith.addf %402, %407 : vector<2x22x16xf32>
    %c24 = arith.constant 24 : index
    %409 = memref.load %arg5[%c24] : memref<98xf32, #tpu.memory_space<smem>>
    %410 = vector.extract_strided_slice %106 {offsets = [0, 0, 0, 0], sizes = [2, 1, 22, 16], strides = [1, 1, 1, 1]} : vector<2x2x22x16xf32> to vector<2x1x22x16xf32>
    %411 = vector.shape_cast %410 : vector<2x1x22x16xf32> to vector<2x22x16xf32>
    %412 = vector.broadcast %409 : f32 to vector<2x22x16xf32>
    %413 = arith.mulf %412, %411 : vector<2x22x16xf32>
    %414 = arith.addf %408, %413 : vector<2x22x16xf32>
    %c73 = arith.constant 73 : index
    %415 = memref.load %arg5[%c73] : memref<98xf32, #tpu.memory_space<smem>>
    %416 = vector.extract_strided_slice %106 {offsets = [0, 1, 0, 0], sizes = [2, 1, 22, 16], strides = [1, 1, 1, 1]} : vector<2x2x22x16xf32> to vector<2x1x22x16xf32>
    %417 = vector.shape_cast %416 : vector<2x1x22x16xf32> to vector<2x22x16xf32>
    %418 = vector.broadcast %415 : f32 to vector<2x22x16xf32>
    %419 = arith.mulf %418, %417 : vector<2x22x16xf32>
    %420 = arith.addf %414, %419 : vector<2x22x16xf32>
    %c25 = arith.constant 25 : index
    %421 = memref.load %arg5[%c25] : memref<98xf32, #tpu.memory_space<smem>>
    %422 = vector.extract_strided_slice %107 {offsets = [0, 0, 0, 0], sizes = [2, 1, 22, 16], strides = [1, 1, 1, 1]} : vector<2x2x22x16xf32> to vector<2x1x22x16xf32>
    %423 = vector.shape_cast %422 : vector<2x1x22x16xf32> to vector<2x22x16xf32>
    %424 = vector.broadcast %421 : f32 to vector<2x22x16xf32>
    %425 = arith.mulf %424, %423 : vector<2x22x16xf32>
    %426 = arith.addf %420, %425 : vector<2x22x16xf32>
    %c74 = arith.constant 74 : index
    %427 = memref.load %arg5[%c74] : memref<98xf32, #tpu.memory_space<smem>>
    %428 = vector.extract_strided_slice %107 {offsets = [0, 1, 0, 0], sizes = [2, 1, 22, 16], strides = [1, 1, 1, 1]} : vector<2x2x22x16xf32> to vector<2x1x22x16xf32>
    %429 = vector.shape_cast %428 : vector<2x1x22x16xf32> to vector<2x22x16xf32>
    %430 = vector.broadcast %427 : f32 to vector<2x22x16xf32>
    %431 = arith.mulf %430, %429 : vector<2x22x16xf32>
    %432 = arith.addf %426, %431 : vector<2x22x16xf32>
    %c26 = arith.constant 26 : index
    %433 = memref.load %arg5[%c26] : memref<98xf32, #tpu.memory_space<smem>>
    %434 = vector.extract_strided_slice %108 {offsets = [0, 0, 0, 0], sizes = [2, 1, 22, 16], strides = [1, 1, 1, 1]} : vector<2x2x22x16xf32> to vector<2x1x22x16xf32>
    %435 = vector.shape_cast %434 : vector<2x1x22x16xf32> to vector<2x22x16xf32>
    %436 = vector.broadcast %433 : f32 to vector<2x22x16xf32>
    %437 = arith.mulf %436, %435 : vector<2x22x16xf32>
    %438 = arith.addf %432, %437 : vector<2x22x16xf32>
    %c75 = arith.constant 75 : index
    %439 = memref.load %arg5[%c75] : memref<98xf32, #tpu.memory_space<smem>>
    %440 = vector.extract_strided_slice %108 {offsets = [0, 1, 0, 0], sizes = [2, 1, 22, 16], strides = [1, 1, 1, 1]} : vector<2x2x22x16xf32> to vector<2x1x22x16xf32>
    %441 = vector.shape_cast %440 : vector<2x1x22x16xf32> to vector<2x22x16xf32>
    %442 = vector.broadcast %439 : f32 to vector<2x22x16xf32>
    %443 = arith.mulf %442, %441 : vector<2x22x16xf32>
    %444 = arith.addf %438, %443 : vector<2x22x16xf32>
    %c27 = arith.constant 27 : index
    %445 = memref.load %arg5[%c27] : memref<98xf32, #tpu.memory_space<smem>>
    %446 = vector.extract_strided_slice %109 {offsets = [0, 0, 0, 0], sizes = [2, 1, 22, 16], strides = [1, 1, 1, 1]} : vector<2x2x22x16xf32> to vector<2x1x22x16xf32>
    %447 = vector.shape_cast %446 : vector<2x1x22x16xf32> to vector<2x22x16xf32>
    %448 = vector.broadcast %445 : f32 to vector<2x22x16xf32>
    %449 = arith.mulf %448, %447 : vector<2x22x16xf32>
    %450 = arith.addf %444, %449 : vector<2x22x16xf32>
    %c76 = arith.constant 76 : index
    %451 = memref.load %arg5[%c76] : memref<98xf32, #tpu.memory_space<smem>>
    %452 = vector.extract_strided_slice %109 {offsets = [0, 1, 0, 0], sizes = [2, 1, 22, 16], strides = [1, 1, 1, 1]} : vector<2x2x22x16xf32> to vector<2x1x22x16xf32>
    %453 = vector.shape_cast %452 : vector<2x1x22x16xf32> to vector<2x22x16xf32>
    %454 = vector.broadcast %451 : f32 to vector<2x22x16xf32>
    %455 = arith.mulf %454, %453 : vector<2x22x16xf32>
    %456 = arith.addf %450, %455 : vector<2x22x16xf32>
    %457 = vector.extract_strided_slice %456 {offsets = [0, 3, 0], sizes = [2, 16, 16], strides = [1, 1, 1]} : vector<2x22x16xf32> to vector<2x16x16xf32>
    %458 = arith.addf %371, %457 : vector<2x16x16xf32>
    %cst_98 = arith.constant 0.000000e+00 : f32
    %459 = vector.broadcast %cst_98 : f32 to vector<2x22x16xf32>
    %c28 = arith.constant 28 : index
    %460 = memref.load %arg5[%c28] : memref<98xf32, #tpu.memory_space<smem>>
    %461 = vector.extract_strided_slice %103 {offsets = [0, 0, 0, 0], sizes = [2, 1, 22, 16], strides = [1, 1, 1, 1]} : vector<2x2x22x16xf32> to vector<2x1x22x16xf32>
    %462 = vector.shape_cast %461 : vector<2x1x22x16xf32> to vector<2x22x16xf32>
    %463 = vector.broadcast %460 : f32 to vector<2x22x16xf32>
    %464 = arith.mulf %463, %462 : vector<2x22x16xf32>
    %465 = arith.addf %459, %464 : vector<2x22x16xf32>
    %c77 = arith.constant 77 : index
    %466 = memref.load %arg5[%c77] : memref<98xf32, #tpu.memory_space<smem>>
    %467 = vector.extract_strided_slice %103 {offsets = [0, 1, 0, 0], sizes = [2, 1, 22, 16], strides = [1, 1, 1, 1]} : vector<2x2x22x16xf32> to vector<2x1x22x16xf32>
    %468 = vector.shape_cast %467 : vector<2x1x22x16xf32> to vector<2x22x16xf32>
    %469 = vector.broadcast %466 : f32 to vector<2x22x16xf32>
    %470 = arith.mulf %469, %468 : vector<2x22x16xf32>
    %471 = arith.addf %465, %470 : vector<2x22x16xf32>
    %c29 = arith.constant 29 : index
    %472 = memref.load %arg5[%c29] : memref<98xf32, #tpu.memory_space<smem>>
    %473 = vector.extract_strided_slice %104 {offsets = [0, 0, 0, 0], sizes = [2, 1, 22, 16], strides = [1, 1, 1, 1]} : vector<2x2x22x16xf32> to vector<2x1x22x16xf32>
    %474 = vector.shape_cast %473 : vector<2x1x22x16xf32> to vector<2x22x16xf32>
    %475 = vector.broadcast %472 : f32 to vector<2x22x16xf32>
    %476 = arith.mulf %475, %474 : vector<2x22x16xf32>
    %477 = arith.addf %471, %476 : vector<2x22x16xf32>
    %c78 = arith.constant 78 : index
    %478 = memref.load %arg5[%c78] : memref<98xf32, #tpu.memory_space<smem>>
    %479 = vector.extract_strided_slice %104 {offsets = [0, 1, 0, 0], sizes = [2, 1, 22, 16], strides = [1, 1, 1, 1]} : vector<2x2x22x16xf32> to vector<2x1x22x16xf32>
    %480 = vector.shape_cast %479 : vector<2x1x22x16xf32> to vector<2x22x16xf32>
    %481 = vector.broadcast %478 : f32 to vector<2x22x16xf32>
    %482 = arith.mulf %481, %480 : vector<2x22x16xf32>
    %483 = arith.addf %477, %482 : vector<2x22x16xf32>
    %c30 = arith.constant 30 : index
    %484 = memref.load %arg5[%c30] : memref<98xf32, #tpu.memory_space<smem>>
    %485 = vector.extract_strided_slice %105 {offsets = [0, 0, 0, 0], sizes = [2, 1, 22, 16], strides = [1, 1, 1, 1]} : vector<2x2x22x16xf32> to vector<2x1x22x16xf32>
    %486 = vector.shape_cast %485 : vector<2x1x22x16xf32> to vector<2x22x16xf32>
    %487 = vector.broadcast %484 : f32 to vector<2x22x16xf32>
    %488 = arith.mulf %487, %486 : vector<2x22x16xf32>
    %489 = arith.addf %483, %488 : vector<2x22x16xf32>
    %c79 = arith.constant 79 : index
    %490 = memref.load %arg5[%c79] : memref<98xf32, #tpu.memory_space<smem>>
    %491 = vector.extract_strided_slice %105 {offsets = [0, 1, 0, 0], sizes = [2, 1, 22, 16], strides = [1, 1, 1, 1]} : vector<2x2x22x16xf32> to vector<2x1x22x16xf32>
    %492 = vector.shape_cast %491 : vector<2x1x22x16xf32> to vector<2x22x16xf32>
    %493 = vector.broadcast %490 : f32 to vector<2x22x16xf32>
    %494 = arith.mulf %493, %492 : vector<2x22x16xf32>
    %495 = arith.addf %489, %494 : vector<2x22x16xf32>
    %c31 = arith.constant 31 : index
    %496 = memref.load %arg5[%c31] : memref<98xf32, #tpu.memory_space<smem>>
    %497 = vector.extract_strided_slice %106 {offsets = [0, 0, 0, 0], sizes = [2, 1, 22, 16], strides = [1, 1, 1, 1]} : vector<2x2x22x16xf32> to vector<2x1x22x16xf32>
    %498 = vector.shape_cast %497 : vector<2x1x22x16xf32> to vector<2x22x16xf32>
    %499 = vector.broadcast %496 : f32 to vector<2x22x16xf32>
    %500 = arith.mulf %499, %498 : vector<2x22x16xf32>
    %501 = arith.addf %495, %500 : vector<2x22x16xf32>
    %c80 = arith.constant 80 : index
    %502 = memref.load %arg5[%c80] : memref<98xf32, #tpu.memory_space<smem>>
    %503 = vector.extract_strided_slice %106 {offsets = [0, 1, 0, 0], sizes = [2, 1, 22, 16], strides = [1, 1, 1, 1]} : vector<2x2x22x16xf32> to vector<2x1x22x16xf32>
    %504 = vector.shape_cast %503 : vector<2x1x22x16xf32> to vector<2x22x16xf32>
    %505 = vector.broadcast %502 : f32 to vector<2x22x16xf32>
    %506 = arith.mulf %505, %504 : vector<2x22x16xf32>
    %507 = arith.addf %501, %506 : vector<2x22x16xf32>
    %c32 = arith.constant 32 : index
    %508 = memref.load %arg5[%c32] : memref<98xf32, #tpu.memory_space<smem>>
    %509 = vector.extract_strided_slice %107 {offsets = [0, 0, 0, 0], sizes = [2, 1, 22, 16], strides = [1, 1, 1, 1]} : vector<2x2x22x16xf32> to vector<2x1x22x16xf32>
    %510 = vector.shape_cast %509 : vector<2x1x22x16xf32> to vector<2x22x16xf32>
    %511 = vector.broadcast %508 : f32 to vector<2x22x16xf32>
    %512 = arith.mulf %511, %510 : vector<2x22x16xf32>
    %513 = arith.addf %507, %512 : vector<2x22x16xf32>
    %c81 = arith.constant 81 : index
    %514 = memref.load %arg5[%c81] : memref<98xf32, #tpu.memory_space<smem>>
    %515 = vector.extract_strided_slice %107 {offsets = [0, 1, 0, 0], sizes = [2, 1, 22, 16], strides = [1, 1, 1, 1]} : vector<2x2x22x16xf32> to vector<2x1x22x16xf32>
    %516 = vector.shape_cast %515 : vector<2x1x22x16xf32> to vector<2x22x16xf32>
    %517 = vector.broadcast %514 : f32 to vector<2x22x16xf32>
    %518 = arith.mulf %517, %516 : vector<2x22x16xf32>
    %519 = arith.addf %513, %518 : vector<2x22x16xf32>
    %c33 = arith.constant 33 : index
    %520 = memref.load %arg5[%c33] : memref<98xf32, #tpu.memory_space<smem>>
    %521 = vector.extract_strided_slice %108 {offsets = [0, 0, 0, 0], sizes = [2, 1, 22, 16], strides = [1, 1, 1, 1]} : vector<2x2x22x16xf32> to vector<2x1x22x16xf32>
    %522 = vector.shape_cast %521 : vector<2x1x22x16xf32> to vector<2x22x16xf32>
    %523 = vector.broadcast %520 : f32 to vector<2x22x16xf32>
    %524 = arith.mulf %523, %522 : vector<2x22x16xf32>
    %525 = arith.addf %519, %524 : vector<2x22x16xf32>
    %c82 = arith.constant 82 : index
    %526 = memref.load %arg5[%c82] : memref<98xf32, #tpu.memory_space<smem>>
    %527 = vector.extract_strided_slice %108 {offsets = [0, 1, 0, 0], sizes = [2, 1, 22, 16], strides = [1, 1, 1, 1]} : vector<2x2x22x16xf32> to vector<2x1x22x16xf32>
    %528 = vector.shape_cast %527 : vector<2x1x22x16xf32> to vector<2x22x16xf32>
    %529 = vector.broadcast %526 : f32 to vector<2x22x16xf32>
    %530 = arith.mulf %529, %528 : vector<2x22x16xf32>
    %531 = arith.addf %525, %530 : vector<2x22x16xf32>
    %c34 = arith.constant 34 : index
    %532 = memref.load %arg5[%c34] : memref<98xf32, #tpu.memory_space<smem>>
    %533 = vector.extract_strided_slice %109 {offsets = [0, 0, 0, 0], sizes = [2, 1, 22, 16], strides = [1, 1, 1, 1]} : vector<2x2x22x16xf32> to vector<2x1x22x16xf32>
    %534 = vector.shape_cast %533 : vector<2x1x22x16xf32> to vector<2x22x16xf32>
    %535 = vector.broadcast %532 : f32 to vector<2x22x16xf32>
    %536 = arith.mulf %535, %534 : vector<2x22x16xf32>
    %537 = arith.addf %531, %536 : vector<2x22x16xf32>
    %c83 = arith.constant 83 : index
    %538 = memref.load %arg5[%c83] : memref<98xf32, #tpu.memory_space<smem>>
    %539 = vector.extract_strided_slice %109 {offsets = [0, 1, 0, 0], sizes = [2, 1, 22, 16], strides = [1, 1, 1, 1]} : vector<2x2x22x16xf32> to vector<2x1x22x16xf32>
    %540 = vector.shape_cast %539 : vector<2x1x22x16xf32> to vector<2x22x16xf32>
    %541 = vector.broadcast %538 : f32 to vector<2x22x16xf32>
    %542 = arith.mulf %541, %540 : vector<2x22x16xf32>
    %543 = arith.addf %537, %542 : vector<2x22x16xf32>
    %544 = vector.extract_strided_slice %543 {offsets = [0, 4, 0], sizes = [2, 16, 16], strides = [1, 1, 1]} : vector<2x22x16xf32> to vector<2x16x16xf32>
    %545 = arith.addf %458, %544 : vector<2x16x16xf32>
    %cst_99 = arith.constant 0.000000e+00 : f32
    %546 = vector.broadcast %cst_99 : f32 to vector<2x22x16xf32>
    %c35 = arith.constant 35 : index
    %547 = memref.load %arg5[%c35] : memref<98xf32, #tpu.memory_space<smem>>
    %548 = vector.extract_strided_slice %103 {offsets = [0, 0, 0, 0], sizes = [2, 1, 22, 16], strides = [1, 1, 1, 1]} : vector<2x2x22x16xf32> to vector<2x1x22x16xf32>
    %549 = vector.shape_cast %548 : vector<2x1x22x16xf32> to vector<2x22x16xf32>
    %550 = vector.broadcast %547 : f32 to vector<2x22x16xf32>
    %551 = arith.mulf %550, %549 : vector<2x22x16xf32>
    %552 = arith.addf %546, %551 : vector<2x22x16xf32>
    %c84 = arith.constant 84 : index
    %553 = memref.load %arg5[%c84] : memref<98xf32, #tpu.memory_space<smem>>
    %554 = vector.extract_strided_slice %103 {offsets = [0, 1, 0, 0], sizes = [2, 1, 22, 16], strides = [1, 1, 1, 1]} : vector<2x2x22x16xf32> to vector<2x1x22x16xf32>
    %555 = vector.shape_cast %554 : vector<2x1x22x16xf32> to vector<2x22x16xf32>
    %556 = vector.broadcast %553 : f32 to vector<2x22x16xf32>
    %557 = arith.mulf %556, %555 : vector<2x22x16xf32>
    %558 = arith.addf %552, %557 : vector<2x22x16xf32>
    %c36 = arith.constant 36 : index
    %559 = memref.load %arg5[%c36] : memref<98xf32, #tpu.memory_space<smem>>
    %560 = vector.extract_strided_slice %104 {offsets = [0, 0, 0, 0], sizes = [2, 1, 22, 16], strides = [1, 1, 1, 1]} : vector<2x2x22x16xf32> to vector<2x1x22x16xf32>
    %561 = vector.shape_cast %560 : vector<2x1x22x16xf32> to vector<2x22x16xf32>
    %562 = vector.broadcast %559 : f32 to vector<2x22x16xf32>
    %563 = arith.mulf %562, %561 : vector<2x22x16xf32>
    %564 = arith.addf %558, %563 : vector<2x22x16xf32>
    %c85 = arith.constant 85 : index
    %565 = memref.load %arg5[%c85] : memref<98xf32, #tpu.memory_space<smem>>
    %566 = vector.extract_strided_slice %104 {offsets = [0, 1, 0, 0], sizes = [2, 1, 22, 16], strides = [1, 1, 1, 1]} : vector<2x2x22x16xf32> to vector<2x1x22x16xf32>
    %567 = vector.shape_cast %566 : vector<2x1x22x16xf32> to vector<2x22x16xf32>
    %568 = vector.broadcast %565 : f32 to vector<2x22x16xf32>
    %569 = arith.mulf %568, %567 : vector<2x22x16xf32>
    %570 = arith.addf %564, %569 : vector<2x22x16xf32>
    %c37 = arith.constant 37 : index
    %571 = memref.load %arg5[%c37] : memref<98xf32, #tpu.memory_space<smem>>
    %572 = vector.extract_strided_slice %105 {offsets = [0, 0, 0, 0], sizes = [2, 1, 22, 16], strides = [1, 1, 1, 1]} : vector<2x2x22x16xf32> to vector<2x1x22x16xf32>
    %573 = vector.shape_cast %572 : vector<2x1x22x16xf32> to vector<2x22x16xf32>
    %574 = vector.broadcast %571 : f32 to vector<2x22x16xf32>
    %575 = arith.mulf %574, %573 : vector<2x22x16xf32>
    %576 = arith.addf %570, %575 : vector<2x22x16xf32>
    %c86 = arith.constant 86 : index
    %577 = memref.load %arg5[%c86] : memref<98xf32, #tpu.memory_space<smem>>
    %578 = vector.extract_strided_slice %105 {offsets = [0, 1, 0, 0], sizes = [2, 1, 22, 16], strides = [1, 1, 1, 1]} : vector<2x2x22x16xf32> to vector<2x1x22x16xf32>
    %579 = vector.shape_cast %578 : vector<2x1x22x16xf32> to vector<2x22x16xf32>
    %580 = vector.broadcast %577 : f32 to vector<2x22x16xf32>
    %581 = arith.mulf %580, %579 : vector<2x22x16xf32>
    %582 = arith.addf %576, %581 : vector<2x22x16xf32>
    %c38 = arith.constant 38 : index
    %583 = memref.load %arg5[%c38] : memref<98xf32, #tpu.memory_space<smem>>
    %584 = vector.extract_strided_slice %106 {offsets = [0, 0, 0, 0], sizes = [2, 1, 22, 16], strides = [1, 1, 1, 1]} : vector<2x2x22x16xf32> to vector<2x1x22x16xf32>
    %585 = vector.shape_cast %584 : vector<2x1x22x16xf32> to vector<2x22x16xf32>
    %586 = vector.broadcast %583 : f32 to vector<2x22x16xf32>
    %587 = arith.mulf %586, %585 : vector<2x22x16xf32>
    %588 = arith.addf %582, %587 : vector<2x22x16xf32>
    %c87 = arith.constant 87 : index
    %589 = memref.load %arg5[%c87] : memref<98xf32, #tpu.memory_space<smem>>
    %590 = vector.extract_strided_slice %106 {offsets = [0, 1, 0, 0], sizes = [2, 1, 22, 16], strides = [1, 1, 1, 1]} : vector<2x2x22x16xf32> to vector<2x1x22x16xf32>
    %591 = vector.shape_cast %590 : vector<2x1x22x16xf32> to vector<2x22x16xf32>
    %592 = vector.broadcast %589 : f32 to vector<2x22x16xf32>
    %593 = arith.mulf %592, %591 : vector<2x22x16xf32>
    %594 = arith.addf %588, %593 : vector<2x22x16xf32>
    %c39 = arith.constant 39 : index
    %595 = memref.load %arg5[%c39] : memref<98xf32, #tpu.memory_space<smem>>
    %596 = vector.extract_strided_slice %107 {offsets = [0, 0, 0, 0], sizes = [2, 1, 22, 16], strides = [1, 1, 1, 1]} : vector<2x2x22x16xf32> to vector<2x1x22x16xf32>
    %597 = vector.shape_cast %596 : vector<2x1x22x16xf32> to vector<2x22x16xf32>
    %598 = vector.broadcast %595 : f32 to vector<2x22x16xf32>
    %599 = arith.mulf %598, %597 : vector<2x22x16xf32>
    %600 = arith.addf %594, %599 : vector<2x22x16xf32>
    %c88 = arith.constant 88 : index
    %601 = memref.load %arg5[%c88] : memref<98xf32, #tpu.memory_space<smem>>
    %602 = vector.extract_strided_slice %107 {offsets = [0, 1, 0, 0], sizes = [2, 1, 22, 16], strides = [1, 1, 1, 1]} : vector<2x2x22x16xf32> to vector<2x1x22x16xf32>
    %603 = vector.shape_cast %602 : vector<2x1x22x16xf32> to vector<2x22x16xf32>
    %604 = vector.broadcast %601 : f32 to vector<2x22x16xf32>
    %605 = arith.mulf %604, %603 : vector<2x22x16xf32>
    %606 = arith.addf %600, %605 : vector<2x22x16xf32>
    %c40 = arith.constant 40 : index
    %607 = memref.load %arg5[%c40] : memref<98xf32, #tpu.memory_space<smem>>
    %608 = vector.extract_strided_slice %108 {offsets = [0, 0, 0, 0], sizes = [2, 1, 22, 16], strides = [1, 1, 1, 1]} : vector<2x2x22x16xf32> to vector<2x1x22x16xf32>
    %609 = vector.shape_cast %608 : vector<2x1x22x16xf32> to vector<2x22x16xf32>
    %610 = vector.broadcast %607 : f32 to vector<2x22x16xf32>
    %611 = arith.mulf %610, %609 : vector<2x22x16xf32>
    %612 = arith.addf %606, %611 : vector<2x22x16xf32>
    %c89 = arith.constant 89 : index
    %613 = memref.load %arg5[%c89] : memref<98xf32, #tpu.memory_space<smem>>
    %614 = vector.extract_strided_slice %108 {offsets = [0, 1, 0, 0], sizes = [2, 1, 22, 16], strides = [1, 1, 1, 1]} : vector<2x2x22x16xf32> to vector<2x1x22x16xf32>
    %615 = vector.shape_cast %614 : vector<2x1x22x16xf32> to vector<2x22x16xf32>
    %616 = vector.broadcast %613 : f32 to vector<2x22x16xf32>
    %617 = arith.mulf %616, %615 : vector<2x22x16xf32>
    %618 = arith.addf %612, %617 : vector<2x22x16xf32>
    %c41 = arith.constant 41 : index
    %619 = memref.load %arg5[%c41] : memref<98xf32, #tpu.memory_space<smem>>
    %620 = vector.extract_strided_slice %109 {offsets = [0, 0, 0, 0], sizes = [2, 1, 22, 16], strides = [1, 1, 1, 1]} : vector<2x2x22x16xf32> to vector<2x1x22x16xf32>
    %621 = vector.shape_cast %620 : vector<2x1x22x16xf32> to vector<2x22x16xf32>
    %622 = vector.broadcast %619 : f32 to vector<2x22x16xf32>
    %623 = arith.mulf %622, %621 : vector<2x22x16xf32>
    %624 = arith.addf %618, %623 : vector<2x22x16xf32>
    %c90 = arith.constant 90 : index
    %625 = memref.load %arg5[%c90] : memref<98xf32, #tpu.memory_space<smem>>
    %626 = vector.extract_strided_slice %109 {offsets = [0, 1, 0, 0], sizes = [2, 1, 22, 16], strides = [1, 1, 1, 1]} : vector<2x2x22x16xf32> to vector<2x1x22x16xf32>
    %627 = vector.shape_cast %626 : vector<2x1x22x16xf32> to vector<2x22x16xf32>
    %628 = vector.broadcast %625 : f32 to vector<2x22x16xf32>
    %629 = arith.mulf %628, %627 : vector<2x22x16xf32>
    %630 = arith.addf %624, %629 : vector<2x22x16xf32>
    %631 = vector.extract_strided_slice %630 {offsets = [0, 5, 0], sizes = [2, 16, 16], strides = [1, 1, 1]} : vector<2x22x16xf32> to vector<2x16x16xf32>
    %632 = arith.addf %545, %631 : vector<2x16x16xf32>
    %cst_100 = arith.constant 0.000000e+00 : f32
    %633 = vector.broadcast %cst_100 : f32 to vector<2x22x16xf32>
    %c42 = arith.constant 42 : index
    %634 = memref.load %arg5[%c42] : memref<98xf32, #tpu.memory_space<smem>>
    %635 = vector.extract_strided_slice %103 {offsets = [0, 0, 0, 0], sizes = [2, 1, 22, 16], strides = [1, 1, 1, 1]} : vector<2x2x22x16xf32> to vector<2x1x22x16xf32>
    %636 = vector.shape_cast %635 : vector<2x1x22x16xf32> to vector<2x22x16xf32>
    %637 = vector.broadcast %634 : f32 to vector<2x22x16xf32>
    %638 = arith.mulf %637, %636 : vector<2x22x16xf32>
    %639 = arith.addf %633, %638 : vector<2x22x16xf32>
    %c91 = arith.constant 91 : index
    %640 = memref.load %arg5[%c91] : memref<98xf32, #tpu.memory_space<smem>>
    %641 = vector.extract_strided_slice %103 {offsets = [0, 1, 0, 0], sizes = [2, 1, 22, 16], strides = [1, 1, 1, 1]} : vector<2x2x22x16xf32> to vector<2x1x22x16xf32>
    %642 = vector.shape_cast %641 : vector<2x1x22x16xf32> to vector<2x22x16xf32>
    %643 = vector.broadcast %640 : f32 to vector<2x22x16xf32>
    %644 = arith.mulf %643, %642 : vector<2x22x16xf32>
    %645 = arith.addf %639, %644 : vector<2x22x16xf32>
    %c43 = arith.constant 43 : index
    %646 = memref.load %arg5[%c43] : memref<98xf32, #tpu.memory_space<smem>>
    %647 = vector.extract_strided_slice %104 {offsets = [0, 0, 0, 0], sizes = [2, 1, 22, 16], strides = [1, 1, 1, 1]} : vector<2x2x22x16xf32> to vector<2x1x22x16xf32>
    %648 = vector.shape_cast %647 : vector<2x1x22x16xf32> to vector<2x22x16xf32>
    %649 = vector.broadcast %646 : f32 to vector<2x22x16xf32>
    %650 = arith.mulf %649, %648 : vector<2x22x16xf32>
    %651 = arith.addf %645, %650 : vector<2x22x16xf32>
    %c92 = arith.constant 92 : index
    %652 = memref.load %arg5[%c92] : memref<98xf32, #tpu.memory_space<smem>>
    %653 = vector.extract_strided_slice %104 {offsets = [0, 1, 0, 0], sizes = [2, 1, 22, 16], strides = [1, 1, 1, 1]} : vector<2x2x22x16xf32> to vector<2x1x22x16xf32>
    %654 = vector.shape_cast %653 : vector<2x1x22x16xf32> to vector<2x22x16xf32>
    %655 = vector.broadcast %652 : f32 to vector<2x22x16xf32>
    %656 = arith.mulf %655, %654 : vector<2x22x16xf32>
    %657 = arith.addf %651, %656 : vector<2x22x16xf32>
    %c44 = arith.constant 44 : index
    %658 = memref.load %arg5[%c44] : memref<98xf32, #tpu.memory_space<smem>>
    %659 = vector.extract_strided_slice %105 {offsets = [0, 0, 0, 0], sizes = [2, 1, 22, 16], strides = [1, 1, 1, 1]} : vector<2x2x22x16xf32> to vector<2x1x22x16xf32>
    %660 = vector.shape_cast %659 : vector<2x1x22x16xf32> to vector<2x22x16xf32>
    %661 = vector.broadcast %658 : f32 to vector<2x22x16xf32>
    %662 = arith.mulf %661, %660 : vector<2x22x16xf32>
    %663 = arith.addf %657, %662 : vector<2x22x16xf32>
    %c93 = arith.constant 93 : index
    %664 = memref.load %arg5[%c93] : memref<98xf32, #tpu.memory_space<smem>>
    %665 = vector.extract_strided_slice %105 {offsets = [0, 1, 0, 0], sizes = [2, 1, 22, 16], strides = [1, 1, 1, 1]} : vector<2x2x22x16xf32> to vector<2x1x22x16xf32>
    %666 = vector.shape_cast %665 : vector<2x1x22x16xf32> to vector<2x22x16xf32>
    %667 = vector.broadcast %664 : f32 to vector<2x22x16xf32>
    %668 = arith.mulf %667, %666 : vector<2x22x16xf32>
    %669 = arith.addf %663, %668 : vector<2x22x16xf32>
    %c45 = arith.constant 45 : index
    %670 = memref.load %arg5[%c45] : memref<98xf32, #tpu.memory_space<smem>>
    %671 = vector.extract_strided_slice %106 {offsets = [0, 0, 0, 0], sizes = [2, 1, 22, 16], strides = [1, 1, 1, 1]} : vector<2x2x22x16xf32> to vector<2x1x22x16xf32>
    %672 = vector.shape_cast %671 : vector<2x1x22x16xf32> to vector<2x22x16xf32>
    %673 = vector.broadcast %670 : f32 to vector<2x22x16xf32>
    %674 = arith.mulf %673, %672 : vector<2x22x16xf32>
    %675 = arith.addf %669, %674 : vector<2x22x16xf32>
    %c94 = arith.constant 94 : index
    %676 = memref.load %arg5[%c94] : memref<98xf32, #tpu.memory_space<smem>>
    %677 = vector.extract_strided_slice %106 {offsets = [0, 1, 0, 0], sizes = [2, 1, 22, 16], strides = [1, 1, 1, 1]} : vector<2x2x22x16xf32> to vector<2x1x22x16xf32>
    %678 = vector.shape_cast %677 : vector<2x1x22x16xf32> to vector<2x22x16xf32>
    %679 = vector.broadcast %676 : f32 to vector<2x22x16xf32>
    %680 = arith.mulf %679, %678 : vector<2x22x16xf32>
    %681 = arith.addf %675, %680 : vector<2x22x16xf32>
    %c46 = arith.constant 46 : index
    %682 = memref.load %arg5[%c46] : memref<98xf32, #tpu.memory_space<smem>>
    %683 = vector.extract_strided_slice %107 {offsets = [0, 0, 0, 0], sizes = [2, 1, 22, 16], strides = [1, 1, 1, 1]} : vector<2x2x22x16xf32> to vector<2x1x22x16xf32>
    %684 = vector.shape_cast %683 : vector<2x1x22x16xf32> to vector<2x22x16xf32>
    %685 = vector.broadcast %682 : f32 to vector<2x22x16xf32>
    %686 = arith.mulf %685, %684 : vector<2x22x16xf32>
    %687 = arith.addf %681, %686 : vector<2x22x16xf32>
    %c95 = arith.constant 95 : index
    %688 = memref.load %arg5[%c95] : memref<98xf32, #tpu.memory_space<smem>>
    %689 = vector.extract_strided_slice %107 {offsets = [0, 1, 0, 0], sizes = [2, 1, 22, 16], strides = [1, 1, 1, 1]} : vector<2x2x22x16xf32> to vector<2x1x22x16xf32>
    %690 = vector.shape_cast %689 : vector<2x1x22x16xf32> to vector<2x22x16xf32>
    %691 = vector.broadcast %688 : f32 to vector<2x22x16xf32>
    %692 = arith.mulf %691, %690 : vector<2x22x16xf32>
    %693 = arith.addf %687, %692 : vector<2x22x16xf32>
    %c47 = arith.constant 47 : index
    %694 = memref.load %arg5[%c47] : memref<98xf32, #tpu.memory_space<smem>>
    %695 = vector.extract_strided_slice %108 {offsets = [0, 0, 0, 0], sizes = [2, 1, 22, 16], strides = [1, 1, 1, 1]} : vector<2x2x22x16xf32> to vector<2x1x22x16xf32>
    %696 = vector.shape_cast %695 : vector<2x1x22x16xf32> to vector<2x22x16xf32>
    %697 = vector.broadcast %694 : f32 to vector<2x22x16xf32>
    %698 = arith.mulf %697, %696 : vector<2x22x16xf32>
    %699 = arith.addf %693, %698 : vector<2x22x16xf32>
    %c96 = arith.constant 96 : index
    %700 = memref.load %arg5[%c96] : memref<98xf32, #tpu.memory_space<smem>>
    %701 = vector.extract_strided_slice %108 {offsets = [0, 1, 0, 0], sizes = [2, 1, 22, 16], strides = [1, 1, 1, 1]} : vector<2x2x22x16xf32> to vector<2x1x22x16xf32>
    %702 = vector.shape_cast %701 : vector<2x1x22x16xf32> to vector<2x22x16xf32>
    %703 = vector.broadcast %700 : f32 to vector<2x22x16xf32>
    %704 = arith.mulf %703, %702 : vector<2x22x16xf32>
    %705 = arith.addf %699, %704 : vector<2x22x16xf32>
    %c48 = arith.constant 48 : index
    %706 = memref.load %arg5[%c48] : memref<98xf32, #tpu.memory_space<smem>>
    %707 = vector.extract_strided_slice %109 {offsets = [0, 0, 0, 0], sizes = [2, 1, 22, 16], strides = [1, 1, 1, 1]} : vector<2x2x22x16xf32> to vector<2x1x22x16xf32>
    %708 = vector.shape_cast %707 : vector<2x1x22x16xf32> to vector<2x22x16xf32>
    %709 = vector.broadcast %706 : f32 to vector<2x22x16xf32>
    %710 = arith.mulf %709, %708 : vector<2x22x16xf32>
    %711 = arith.addf %705, %710 : vector<2x22x16xf32>
    %c97 = arith.constant 97 : index
    %712 = memref.load %arg5[%c97] : memref<98xf32, #tpu.memory_space<smem>>
    %713 = vector.extract_strided_slice %109 {offsets = [0, 1, 0, 0], sizes = [2, 1, 22, 16], strides = [1, 1, 1, 1]} : vector<2x2x22x16xf32> to vector<2x1x22x16xf32>
    %714 = vector.shape_cast %713 : vector<2x1x22x16xf32> to vector<2x22x16xf32>
    %715 = vector.broadcast %712 : f32 to vector<2x22x16xf32>
    %716 = arith.mulf %715, %714 : vector<2x22x16xf32>
    %717 = arith.addf %711, %716 : vector<2x22x16xf32>
    %718 = vector.extract_strided_slice %717 {offsets = [0, 6, 0], sizes = [2, 16, 16], strides = [1, 1, 1]} : vector<2x22x16xf32> to vector<2x16x16xf32>
    %719 = arith.addf %632, %718 : vector<2x16x16xf32>
    %720 = vector.shape_cast %719 : vector<2x16x16xf32> to vector<1x2x16x16xf32>
    %cst_101 = arith.constant dense<0.000000e+00> : vector<1xf32>
    %721 = vector.multi_reduction <add>, %720, %cst_101 [1, 2, 3] : vector<1x2x16x16xf32> to vector<1xf32>
    %722 = vector.shape_cast %721 : vector<1xf32> to vector<1x1x1x1xf32>
    %723 = vector.extract %722[0, 0, 0, 0] : f32 from vector<1x1x1x1xf32>
    %724 = arith.mulf %719, %719 : vector<2x16x16xf32>
    %725 = vector.shape_cast %724 : vector<2x16x16xf32> to vector<1x2x16x16xf32>
    %cst_102 = arith.constant dense<0.000000e+00> : vector<1xf32>
    %726 = vector.multi_reduction <add>, %725, %cst_102 [1, 2, 3] : vector<1x2x16x16xf32> to vector<1xf32>
    %727 = vector.shape_cast %726 : vector<1xf32> to vector<1x1x1x1xf32>
    %728 = vector.extract %727[0, 0, 0, 0] : f32 from vector<1x1x1x1xf32>
    %cst_103 = arith.constant 5.120000e+02 : f32
    %729 = arith.divf %723, %cst_103 : f32
    %cst_104 = arith.constant 5.120000e+02 : f32
    %730 = arith.divf %728, %cst_104 : f32
    %731 = arith.mulf %729, %729 : f32
    %732 = arith.subf %730, %731 : f32
    %733 = vector.broadcast %729 : f32 to vector<2x16x16xf32>
    %734 = arith.subf %719, %733 : vector<2x16x16xf32>
    %cst_105 = arith.constant 9.99999974E-6 : f32
    %735 = arith.addf %732, %cst_105 : f32
    %736 = math.rsqrt %735 : f32
    %737 = vector.broadcast %736 : f32 to vector<2x16x16xf32>
    %738 = arith.mulf %734, %737 : vector<2x16x16xf32>
    %c0_106 = arith.constant 0 : index
    %739 = memref.load %arg6[%c0_106] : memref<2xf32, #tpu.memory_space<smem>>
    %740 = vector.broadcast %739 : f32 to vector<2x16x16xf32>
    %741 = arith.mulf %738, %740 : vector<2x16x16xf32>
    %c1_107 = arith.constant 1 : index
    %742 = memref.load %arg6[%c1_107] : memref<2xf32, #tpu.memory_space<smem>>
    %743 = vector.broadcast %742 : f32 to vector<2x16x16xf32>
    %744 = arith.addf %741, %743 : vector<2x16x16xf32>
    %745 = arith.negf %744 : vector<2x16x16xf32>
    %746 = math.exp %745 : vector<2x16x16xf32>
    %cst_108 = arith.constant 1.000000e+00 : f32
    %747 = vector.broadcast %cst_108 : f32 to vector<2x16x16xf32>
    %748 = arith.addf %747, %746 : vector<2x16x16xf32>
    %749 = arith.divf %747, %748 : vector<2x16x16xf32>
    %750 = vector.extract_strided_slice %749 {offsets = [0, 0, 0], sizes = [2, 1, 16], strides = [1, 1, 1]} : vector<2x16x16xf32> to vector<2x1x16xf32>
    %751 = vector.shape_cast %750 : vector<2x1x16xf32> to vector<2x16xf32>
    %752 = vector.extract_strided_slice %749 {offsets = [0, 1, 0], sizes = [2, 1, 16], strides = [1, 1, 1]} : vector<2x16x16xf32> to vector<2x1x16xf32>
    %753 = vector.shape_cast %752 : vector<2x1x16xf32> to vector<2x16xf32>
    %754 = vector.extract_strided_slice %749 {offsets = [0, 2, 0], sizes = [2, 1, 16], strides = [1, 1, 1]} : vector<2x16x16xf32> to vector<2x1x16xf32>
    %755 = vector.shape_cast %754 : vector<2x1x16xf32> to vector<2x16xf32>
    %756 = vector.extract_strided_slice %749 {offsets = [0, 3, 0], sizes = [2, 1, 16], strides = [1, 1, 1]} : vector<2x16x16xf32> to vector<2x1x16xf32>
    %757 = vector.shape_cast %756 : vector<2x1x16xf32> to vector<2x16xf32>
    %758 = vector.extract_strided_slice %749 {offsets = [0, 4, 0], sizes = [2, 1, 16], strides = [1, 1, 1]} : vector<2x16x16xf32> to vector<2x1x16xf32>
    %759 = vector.shape_cast %758 : vector<2x1x16xf32> to vector<2x16xf32>
    %760 = vector.extract_strided_slice %749 {offsets = [0, 5, 0], sizes = [2, 1, 16], strides = [1, 1, 1]} : vector<2x16x16xf32> to vector<2x1x16xf32>
    %761 = vector.shape_cast %760 : vector<2x1x16xf32> to vector<2x16xf32>
    %762 = vector.extract_strided_slice %749 {offsets = [0, 6, 0], sizes = [2, 1, 16], strides = [1, 1, 1]} : vector<2x16x16xf32> to vector<2x1x16xf32>
    %763 = vector.shape_cast %762 : vector<2x1x16xf32> to vector<2x16xf32>
    %764 = vector.extract_strided_slice %749 {offsets = [0, 7, 0], sizes = [2, 1, 16], strides = [1, 1, 1]} : vector<2x16x16xf32> to vector<2x1x16xf32>
    %765 = vector.shape_cast %764 : vector<2x1x16xf32> to vector<2x16xf32>
    %766 = vector.extract_strided_slice %749 {offsets = [0, 8, 0], sizes = [2, 1, 16], strides = [1, 1, 1]} : vector<2x16x16xf32> to vector<2x1x16xf32>
    %767 = vector.shape_cast %766 : vector<2x1x16xf32> to vector<2x16xf32>
    %768 = vector.extract_strided_slice %749 {offsets = [0, 9, 0], sizes = [2, 1, 16], strides = [1, 1, 1]} : vector<2x16x16xf32> to vector<2x1x16xf32>
    %769 = vector.shape_cast %768 : vector<2x1x16xf32> to vector<2x16xf32>
    %770 = vector.extract_strided_slice %749 {offsets = [0, 10, 0], sizes = [2, 1, 16], strides = [1, 1, 1]} : vector<2x16x16xf32> to vector<2x1x16xf32>
    %771 = vector.shape_cast %770 : vector<2x1x16xf32> to vector<2x16xf32>
    %772 = vector.extract_strided_slice %749 {offsets = [0, 11, 0], sizes = [2, 1, 16], strides = [1, 1, 1]} : vector<2x16x16xf32> to vector<2x1x16xf32>
    %773 = vector.shape_cast %772 : vector<2x1x16xf32> to vector<2x16xf32>
    %774 = vector.extract_strided_slice %749 {offsets = [0, 12, 0], sizes = [2, 1, 16], strides = [1, 1, 1]} : vector<2x16x16xf32> to vector<2x1x16xf32>
    %775 = vector.shape_cast %774 : vector<2x1x16xf32> to vector<2x16xf32>
    %776 = vector.extract_strided_slice %749 {offsets = [0, 13, 0], sizes = [2, 1, 16], strides = [1, 1, 1]} : vector<2x16x16xf32> to vector<2x1x16xf32>
    %777 = vector.shape_cast %776 : vector<2x1x16xf32> to vector<2x16xf32>
    %778 = vector.extract_strided_slice %749 {offsets = [0, 14, 0], sizes = [2, 1, 16], strides = [1, 1, 1]} : vector<2x16x16xf32> to vector<2x1x16xf32>
    %779 = vector.shape_cast %778 : vector<2x1x16xf32> to vector<2x16xf32>
    %780 = vector.extract_strided_slice %749 {offsets = [0, 15, 0], sizes = [2, 1, 16], strides = [1, 1, 1]} : vector<2x16x16xf32> to vector<2x1x16xf32>
    %781 = vector.shape_cast %780 : vector<2x1x16xf32> to vector<2x16xf32>
    %782 = tpu.concatenate %751, %753, %755, %757, %759, %761, %763, %765, %767, %769, %771, %773, %775, %777, %779, %781 in 1 : vector<2x16xf32>, vector<2x16xf32>, vector<2x16xf32>, vector<2x16xf32>, vector<2x16xf32>, vector<2x16xf32>, vector<2x16xf32>, vector<2x16xf32>, vector<2x16xf32>, vector<2x16xf32>, vector<2x16xf32>, vector<2x16xf32>, vector<2x16xf32>, vector<2x16xf32>, vector<2x16xf32>, vector<2x16xf32> -> vector<2x256xf32>
    %783 = vector.shape_cast %782 : vector<2x256xf32> to vector<2x1x256xf32>
    %784 = vector.broadcast %783 : vector<2x1x256xf32> to vector<2x32x256xf32>
    %785 = arith.mulf %28, %784 : vector<2x32x256xf32>
    %c0_109 = arith.constant 0 : index
    %c0_110 = arith.constant 0 : index
    %c0_111 = arith.constant 0 : index
    %786 = vector.load %arg7[%c0_109, %c0_110, %c0_111] : memref<2x32x256xf32, #tpu.memory_space<vmem>>, vector<2x32x256xf32>
    tpu.vector_store %arg7[%c0_109, %c0_110, %c0_111], %785 {strides = array<i32>} : memref<2x32x256xf32, #tpu.memory_space<vmem>>, vector<2x32x256xf32>,
    return
  }
}

</mosaic_0001>

<llo_original>
// kernel: cbam_forward.1
$region0: #{cbam_forward.1}
  #allocation0 [shape = 'u32[]', space=smem, size = 0x4, offset = 0x4, fixed_abs, tag = 'smem constant byte address 0x4 - core index']
  #allocation1 [shape = 'u32[144,128]{1,0:T(1,128)}', space=vmem, size = 0x12000, scoped, tag = 'internal scratch']
  #allocation2 [shape = 'f32[2,2,22,22]{3,2,1,0:T(8,128)}', space=vmem, size = 0xc000, scoped, tag = 'scratch operand']
  %s0 = inlined_call_operand.vmem [shape: f32[2,32,256], index: 0, kind: input, shape index: {}]
  %s1 = inlined_call_operand.vmem [shape: f32[32,2], index: 1, kind: input, shape index: {}]
  %s2 = inlined_call_operand.vmem [shape: f32[1,2], index: 2, kind: input, shape index: {}]
  %s3 = inlined_call_operand.vmem [shape: f32[2,32], index: 3, kind: input, shape index: {}]
  %s4 = inlined_call_operand.vmem [shape: f32[1,32], index: 4, kind: input, shape index: {}]
  %s5 = inlined_call_operand.vmem [shape: f32[98], index: 5, kind: input, shape index: {}]
  %s6 = inlined_call_operand.vmem [shape: f32[2], index: 6, kind: input, shape index: {}]
  %s7 = inlined_call_operand.vmem [shape: f32[2,32,256], index: 7, kind: output, shape index: {}]
  %s8 = sld [smem:[#allocation0]]
  $region46: #{cbam_forward.1} parent=0
    _
  %s10 = ssub.s32 1, %s8
  %s11 = scalar_select 0, %s10, %s8
  $region1: #{cbam_forward.1} parent=0
    #allocation3 [shape = 'u8[512]{0}', space=smem, size = 0x200, scoped, tag = 'input window, operand 5, single buffered']
    #allocation4 [shape = 's32[1]{0}', space=sflag, size = 0x4, scoped, tag = 'scoped memory for cbam_forward.1']
    #allocation5 [shape = 'u8[512]{0}', space=smem, size = 0x200, scoped, tag = 'input window, operand 6, single buffered']
    #allocation6 [shape = 's32[1]{0}', space=sflag, size = 0x4, scoped, tag = 'scoped memory for cbam_forward.1']
    %12 = vsyncpa [#allocation4], 0
    %13 = vsyncpa [#allocation6], 0
    // Predicated region
    $region2: #{cbam_forward.1} parent=1 // pred_check
      _
    $region3: #{cbam_forward.1} parent=1 // pred_check_branch
      %15 = sbr.rel (0) target = $region5
    $region4: #{cbam_forward.1} parent=1 // pred_region
      _
    $region5: #{cbam_forward.1} parent=1 // pred_fallthru
      _
    // Predicated region
    $region6: #{cbam_forward.1} parent=1 // pred_check
      _
    $region7: #{cbam_forward.1} parent=1 // pred_check_branch
      %17 = sbr.rel (0) target = $region9
    $region8: #{cbam_forward.1} parent=1 // pred_region
      _
    $region9: #{cbam_forward.1} parent=1 // pred_fallthru
      _
    // Predicated region
    $region10: #{cbam_forward.1} parent=1 // pred_check
      _
    $region11: #{cbam_forward.1} parent=1 // pred_check_branch
      %19 = sbr.rel (0) target = $region13
    $region12: #{cbam_forward.1} parent=1 // pred_region
      _
    $region13: #{cbam_forward.1} parent=1 // pred_fallthru
      _
    // Predicated region
    $region14: #{cbam_forward.1} parent=1 // pred_check
      _
    $region15: #{cbam_forward.1} parent=1 // pred_check_branch
      %21 = sbr.rel (0) target = $region17
    $region16: #{cbam_forward.1} parent=1 // pred_region
      _
    $region17: #{cbam_forward.1} parent=1 // pred_fallthru
      _
    // Predicated region
    $region18: #{cbam_forward.1} parent=1 // pred_check
      _
    $region19: #{cbam_forward.1} parent=1 // pred_check_branch
      %23 = sbr.rel (0) target = $region21
    $region20: #{cbam_forward.1} parent=1 // pred_region
      _
    $region21: #{cbam_forward.1} parent=1 // pred_fallthru
      _
    // Predicated region
    $region22: #{cbam_forward.1} parent=1 // pred_check
      _
    $region23: #{cbam_forward.1} parent=1 // pred_check_branch
      %25 = sbr.rel (0) target = $region25
    $region24: #{cbam_forward.1} parent=1 // pred_region
      %s27 = ssub.s32 16, 16
      %28 = vsyncadd [#allocation4], %s27
      %s30 = sshll.u32 %s5, 4
      %s31 = int_to_ptr.vmem [resolvable:$true] %s30
      %33 = dma.vmem_to_smem %s31, 16, [#allocation3], [#allocation4]
    $region25: #{cbam_forward.1} parent=1 // pred_fallthru
      _
    // Predicated region
    $region26: #{cbam_forward.1} parent=1 // pred_check
      _
    $region27: #{cbam_forward.1} parent=1 // pred_check_branch
      %35 = sbr.rel (0) target = $region29
    $region28: #{cbam_forward.1} parent=1 // pred_region
      %s37 = ssub.s32 16, 16
      %38 = vsyncadd [#allocation6], %s37
      %s40 = sshll.u32 %s6, 4
      %s41 = int_to_ptr.vmem [resolvable:$true] %s40
      %43 = dma.vmem_to_smem %s41, 16, [#allocation5], [#allocation6]
    $region29: #{cbam_forward.1} parent=1 // pred_fallthru
      _
    // Predicated region
    $region30: #{cbam_forward.1} parent=1 // pred_check
      _
    $region31: #{cbam_forward.1} parent=1 // pred_check_branch
      %45 = sbr.rel (0) target = $region33
    $region32: #{cbam_forward.1} parent=1 // pred_region
      %46 = dma.done [#allocation4], 16
    $region33: #{cbam_forward.1} parent=1 // pred_fallthru
      _
    // Predicated region
    $region34: #{cbam_forward.1} parent=1 // pred_check
      _
    $region35: #{cbam_forward.1} parent=1 // pred_check_branch
      %48 = sbr.rel (0) target = $region37
    $region36: #{cbam_forward.1} parent=1 // pred_region
      %49 = dma.done [#allocation6], 16
    $region37: #{cbam_forward.1} parent=1 // pred_fallthru
      _
    %50 = sfence
    %v51 = vld [vmem:[%s0] sm:$0xff]
    %v52 = vld [vmem:[%s0 + $0x8] sm:$0xff]
    %v53 = vld [vmem:[%s0 + $0x10] sm:$0xff]
    %v54 = vld [vmem:[%s0 + $0x18] sm:$0xff]
    %v55 = vld [vmem:[%s0 + $0x20] sm:$0xff]
    %v56 = vld [vmem:[%s0 + $0x28] sm:$0xff]
    %v57 = vld [vmem:[%s0 + $0x30] sm:$0xff]
    %v58 = vld [vmem:[%s0 + $0x38] sm:$0xff]
    %v59 = vld [vmem:[%s0 + $0x40] sm:$0xff]
    %v60 = vld [vmem:[%s0 + $0x48] sm:$0xff]
    %v61 = vld [vmem:[%s0 + $0x50] sm:$0xff]
    %v62 = vld [vmem:[%s0 + $0x58] sm:$0xff]
    %v63 = vld [vmem:[%s0 + $0x60] sm:$0xff]
    %v64 = vld [vmem:[%s0 + $0x68] sm:$0xff]
    %v65 = vld [vmem:[%s0 + $0x70] sm:$0xff]
    %v66 = vld [vmem:[%s0 + $0x78] sm:$0xff]
    %v67 = vadd.f32 %v51, %v52
    %68 = vadd.xlane.f32.xlu0 %v67
    %v69 = vpop.xlane.xlu0 %68
    %v70 = vadd.f32 %v53, %v54
    %71 = vadd.xlane.f32.xlu0 %v70
    %v72 = vpop.xlane.xlu0 %71
    %v73 = vadd.f32 %v55, %v56
    %74 = vadd.xlane.f32.xlu0 %v73
    %v75 = vpop.xlane.xlu0 %74
    %v76 = vadd.f32 %v57, %v58
    %77 = vadd.xlane.f32.xlu0 %v76
    %v78 = vpop.xlane.xlu0 %77
    %v79 = vadd.f32 %v59, %v60
    %80 = vadd.xlane.f32.xlu0 %v79
    %v81 = vpop.xlane.xlu0 %80
    %v82 = vadd.f32 %v61, %v62
    %83 = vadd.xlane.f32.xlu0 %v82
    %v84 = vpop.xlane.xlu0 %83
    %v85 = vadd.f32 %v63, %v64
    %86 = vadd.xlane.f32.xlu0 %v85
    %v87 = vpop.xlane.xlu0 %86
    %v88 = vadd.f32 %v65, %v66
    %89 = vadd.xlane.f32.xlu0 %v88
    %v90 = vpop.xlane.xlu0 %89
    %v91 = vrcp.pop 256.0
    %v92 = vmul.f32 %v69, %v91
    %v93 = vmul.f32 %v72, %v91
    %v94 = vmul.f32 %v75, %v91
    %v95 = vmul.f32 %v78, %v91
    %v96 = vmul.f32 %v81, %v91
    %v97 = vmul.f32 %v84, %v91
    %v98 = vmul.f32 %v87, %v91
    %v99 = vmul.f32 %v90, %v91
    %v100 = vmax.f32 %v51, %v52
    %101 = vmax.xlane.f32.xlu0 %v100
    %v102 = vpop.xlane.xlu0 %101
    %v103 = vmax.f32 %v53, %v54
    %104 = vmax.xlane.f32.xlu0 %v103
    %v105 = vpop.xlane.xlu0 %104
    %v106 = vmax.f32 %v55, %v56
    %107 = vmax.xlane.f32.xlu0 %v106
    %v108 = vpop.xlane.xlu0 %107
    %v109 = vmax.f32 %v57, %v58
    %110 = vmax.xlane.f32.xlu0 %v109
    %v111 = vpop.xlane.xlu0 %110
    %v112 = vmax.f32 %v59, %v60
    %113 = vmax.xlane.f32.xlu0 %v112
    %v114 = vpop.xlane.xlu0 %113
    %v115 = vmax.f32 %v61, %v62
    %116 = vmax.xlane.f32.xlu0 %v115
    %v117 = vpop.xlane.xlu0 %116
    %v118 = vmax.f32 %v63, %v64
    %119 = vmax.xlane.f32.xlu0 %v118
    %v120 = vpop.xlane.xlu0 %119
    %v121 = vmax.f32 %v65, %v66
    %122 = vmax.xlane.f32.xlu0 %v121
    %v123 = vpop.xlane.xlu0 %122
    %v132 = vlaneseq
    %v133 = vand.u32 %v132, 127
    %v134 = vlaneseq
    %v135 = vshrl.u32 %v134, 7
    %v136 = vsub.s32 %v133, %v135
    %v137 = vrot.slane %v92, %v136
    %v138 = vadd.s32 %v133, 4294967288
    %v139 = vlaneseq
    %v140 = vshrl.u32 %v139, 7
    %v141 = vsub.s32 %v138, %v140
    %v142 = vrot.slane %v93, %v141
    %vm143 = vcmask 130112
    %v144 = vsel %vm143, %v142, %v137
    %v145 = vadd.s32 %v133, 4294967280
    %v146 = vlaneseq
    %v147 = vshrl.u32 %v146, 7
    %v148 = vsub.s32 %v145, %v147
    %v149 = vrot.slane %v94, %v148
    %vm150 = vcmask 195712
    %v151 = vsel %vm150, %v149, %v144
    %v152 = vadd.s32 %v133, 4294967272
    %v153 = vlaneseq
    %v154 = vshrl.u32 %v153, 7
    %v155 = vsub.s32 %v152, %v154
    %v156 = vrot.slane %v95, %v155
    %vm157 = vcmask 261312
    %v158 = vsel %vm157, %v156, %v151
    %v159 = vlaneseq
    %v160 = vshrl.u32 %v159, 7
    %v161 = vsub.s32 %v133, %v160
    %v162 = vrot.slane %v96, %v161
    %v163 = vlaneseq
    %v164 = vshrl.u32 %v163, 7
    %v165 = vsub.s32 %v138, %v164
    %v166 = vrot.slane %v97, %v165
    %v167 = vsel %vm143, %v166, %v162
    %v168 = vlaneseq
    %v169 = vshrl.u32 %v168, 7
    %v170 = vsub.s32 %v145, %v169
    %v171 = vrot.slane %v98, %v170
    %v172 = vsel %vm150, %v171, %v167
    %v173 = vlaneseq
    %v174 = vshrl.u32 %v173, 7
    %v175 = vsub.s32 %v152, %v174
    %v176 = vrot.slane %v99, %v175
    %v177 = vsel %vm157, %v176, %v172
    %vm178 = vcmask 1041409
    %v179 = vsel %vm178, %v177, %v158
    %v189 = vlaneseq
    %v190 = vshrl.u32 %v189, 7
    %v191 = vsub.s32 %v133, %v190
    %v192 = vrot.slane %v102, %v191
    %v193 = vlaneseq
    %v194 = vshrl.u32 %v193, 7
    %v195 = vsub.s32 %v138, %v194
    %v196 = vrot.slane %v105, %v195
    %v197 = vsel %vm143, %v196, %v192
    %v198 = vlaneseq
    %v199 = vshrl.u32 %v198, 7
    %v200 = vsub.s32 %v145, %v199
    %v201 = vrot.slane %v108, %v200
    %v202 = vsel %vm150, %v201, %v197
    %v203 = vlaneseq
    %v204 = vshrl.u32 %v203, 7
    %v205 = vsub.s32 %v152, %v204
    %v206 = vrot.slane %v111, %v205
    %v207 = vsel %vm157, %v206, %v202
    %v208 = vlaneseq
    %v209 = vshrl.u32 %v208, 7
    %v210 = vsub.s32 %v133, %v209
    %v211 = vrot.slane %v114, %v210
    %v212 = vlaneseq
    %v213 = vshrl.u32 %v212, 7
    %v214 = vsub.s32 %v138, %v213
    %v215 = vrot.slane %v117, %v214
    %v216 = vsel %vm143, %v215, %v211
    %v217 = vlaneseq
    %v218 = vshrl.u32 %v217, 7
    %v219 = vsub.s32 %v145, %v218
    %v220 = vrot.slane %v120, %v219
    %v221 = vsel %vm150, %v220, %v216
    %v222 = vlaneseq
    %v223 = vshrl.u32 %v222, 7
    %v224 = vsub.s32 %v152, %v223
    %v225 = vrot.slane %v123, %v224
    %v226 = vsel %vm157, %v225, %v221
    %vm227 = vcmask 1043459
    %v228 = vsel %vm227, %v226, %v207
    %vm230 = vcmask 1041408
    %v231 = vsel %vm230, %v179, %v228
    %v232 = vld [vmem:[%s1] sm:$0xff]
    %v233 = vld [vmem:[%s1 + $0x8] sm:$0xff]
    %v234 = vld [vmem:[%s1 + $0x10] sm:$0xff]
    %v235 = vld [vmem:[%s1 + $0x18] sm:$0xff]
    %v236 = vld [vmem:[%s2] sm:$0x1]
    %v238 = vlaneseq
    %v239 = vshrl.u32 %v238, 7
    %v240 = vsub.s32 0, %v239
    %v241 = vrot.slane %v236, %v240
    %vm243 = vcmask 261120
    %v245 = vsel %vm243, %v231, 0
    %247 = vmatprep.subr.mxu0 0.0
    %248 = vmatpush1.msra.mxu0 0.0
    %249 = vmatprep.subr.mxu0 0.0
    %250 = vmatpush1.msra.mxu0 0.0
    %251 = vmatprep.subr.mxu0 0.0
    %252 = vmatpush1.msra.mxu0 0.0
    %253 = vmatprep.subr.mxu0 0.0
    %254 = vmatpush1.msra.mxu0 0.0
    %255 = vmatprep.subr.mxu0 0.0
    %256 = vmatpush1.msra.mxu0 0.0
    %257 = vmatprep.subr.mxu0 0.0
    %258 = vmatpush1.msra.mxu0 0.0
    %259 = vmatprep.subr.mxu0 0.0
    %260 = vmatpush1.msra.mxu0 0.0
    %261 = vmatprep.subr.mxu0 0.0
    %262 = vmatpush1.msra.mxu0 0.0
    %263 = vmatprep.subr.mxu0 0.0
    %264 = vmatpush1.msra.mxu0 0.0
    %265 = vmatprep.subr.mxu0 0.0
    %266 = vmatpush1.msra.mxu0 0.0
    %267 = vmatprep.subr.mxu0 0.0
    %268 = vmatpush1.msra.mxu0 0.0
    %269 = vmatprep.subr.mxu0 0.0
    %270 = vmatpush1.msra.mxu0 0.0
    %271 = vmatprep.subr.mxu0 0.0
    %272 = vmatpush1.msra.mxu0 %v235
    %273 = vmatprep.subr.mxu0 0.0
    %274 = vmatpush1.msra.mxu0 %v234
    %275 = vmatprep.subr.mxu0 0.0
    %276 = vmatpush1.msra.mxu0 %v233
    %277 = vmatprep.subr.mxu0 0.0
    %278 = vmatpush1.msra.mxu0 %v232
    %279 = vmatprep.subr.mxu0 0.0
    %280 = vmatpush2.msra.mxu0 0.0
    %281 = vmatprep.subr.mxu0 0.0
    %282 = vmatpush2.msra.mxu0 0.0
    %283 = vmatprep.subr.mxu0 0.0
    %284 = vmatpush2.msra.mxu0 0.0
    %285 = vmatprep.subr.mxu0 0.0
    %286 = vmatpush2.msra.mxu0 0.0
    %287 = vmatprep.subr.mxu0 0.0
    %288 = vmatpush2.msra.mxu0 0.0
    %289 = vmatprep.subr.mxu0 0.0
    %290 = vmatpush2.msra.mxu0 0.0
    %291 = vmatprep.subr.mxu0 0.0
    %292 = vmatpush2.msra.mxu0 0.0
    %293 = vmatprep.subr.mxu0 0.0
    %294 = vmatpush2.msra.mxu0 0.0
    %295 = vmatprep.subr.mxu0 0.0
    %296 = vmatpush2.msra.mxu0 0.0
    %297 = vmatprep.subr.mxu0 0.0
    %298 = vmatpush2.msra.mxu0 0.0
    %299 = vmatprep.subr.mxu0 0.0
    %300 = vmatpush2.msra.mxu0 0.0
    %301 = vmatprep.subr.mxu0 0.0
    %302 = vmatpush2.msra.mxu0 0.0
    %303 = vmatprep.subr.mxu0 0.0
    %304 = vmatpush2.msra.mxu0 0.0
    %305 = vmatprep.subr.mxu0 0.0
    %306 = vmatpush2.msra.mxu0 0.0
    %307 = vmatprep.subr.mxu0 0.0
    %308 = vmatpush2.msra.mxu0 0.0
    %309 = vmatprep.subr.mxu0 0.0
    %310 = vmatpush2.msra.mxu0 0.0
    %311 = vmatprep.mubr.f32.mxu0 0.0
    %312 = vmatmul.mubr.f32.gmra.mxu0 %v245
    %v313 = vpop.f32.mrf.mxu0
    %v314 = vadd.f32 %v241, %v313
    %v315 = vpop.f32.mrf.mxu0
    %316 = vdwg.mxu0
    %v317 = vmax.f32 %v314, 0.0
    %v318 = vld [vmem:[%s3] sm:$0x3]
    %v319 = vld [vmem:[%s4] sm:$0x1]
    %v321 = vlaneseq
    %v322 = vshrl.u32 %v321, 7
    %v323 = vsub.s32 0, %v322
    %v324 = vrot.slane %v319, %v323
    %vm326 = vcmask 15360
    %v328 = vsel %vm326, %v317, 0
    %v331 = vsel %vm230, %v318, 0
    %333 = vmatprep.subr.mxu0 0.0
    %334 = vmatpush1.msra.mxu0 0.0
    %335 = vmatprep.subr.mxu0 0.0
    %336 = vmatpush1.msra.mxu0 0.0
    %337 = vmatprep.subr.mxu0 0.0
    %338 = vmatpush1.msra.mxu0 0.0
    %339 = vmatprep.subr.mxu0 0.0
    %340 = vmatpush1.msra.mxu0 0.0
    %341 = vmatprep.subr.mxu0 0.0
    %342 = vmatpush1.msra.mxu0 0.0
    %343 = vmatprep.subr.mxu0 0.0
    %344 = vmatpush1.msra.mxu0 0.0
    %345 = vmatprep.subr.mxu0 0.0
    %346 = vmatpush1.msra.mxu0 0.0
    %347 = vmatprep.subr.mxu0 0.0
    %348 = vmatpush1.msra.mxu0 0.0
    %349 = vmatprep.subr.mxu0 0.0
    %350 = vmatpush1.msra.mxu0 0.0
    %351 = vmatprep.subr.mxu0 0.0
    %352 = vmatpush1.msra.mxu0 0.0
    %353 = vmatprep.subr.mxu0 0.0
    %354 = vmatpush1.msra.mxu0 0.0
    %355 = vmatprep.subr.mxu0 0.0
    %356 = vmatpush1.msra.mxu0 0.0
    %357 = vmatprep.subr.mxu0 0.0
    %358 = vmatpush1.msra.mxu0 0.0
    %359 = vmatprep.subr.mxu0 0.0
    %360 = vmatpush1.msra.mxu0 0.0
    %361 = vmatprep.subr.mxu0 0.0
    %362 = vmatpush1.msra.mxu0 0.0
    %363 = vmatprep.subr.mxu0 0.0
    %364 = vmatpush1.msra.mxu0 %v331
    %365 = vmatprep.subr.mxu0 0.0
    %366 = vmatpush2.msra.mxu0 0.0
    %367 = vmatprep.subr.mxu0 0.0
    %368 = vmatpush2.msra.mxu0 0.0
    %369 = vmatprep.subr.mxu0 0.0
    %370 = vmatpush2.msra.mxu0 0.0
    %371 = vmatprep.subr.mxu0 0.0
    %372 = vmatpush2.msra.mxu0 0.0
    %373 = vmatprep.subr.mxu0 0.0
    %374 = vmatpush2.msra.mxu0 0.0
    %375 = vmatprep.subr.mxu0 0.0
    %376 = vmatpush2.msra.mxu0 0.0
    %377 = vmatprep.subr.mxu0 0.0
    %378 = vmatpush2.msra.mxu0 0.0
    %379 = vmatprep.subr.mxu0 0.0
    %380 = vmatpush2.msra.mxu0 0.0
    %381 = vmatprep.subr.mxu0 0.0
    %382 = vmatpush2.msra.mxu0 0.0
    %383 = vmatprep.subr.mxu0 0.0
    %384 = vmatpush2.msra.mxu0 0.0
    %385 = vmatprep.subr.mxu0 0.0
    %386 = vmatpush2.msra.mxu0 0.0
    %387 = vmatprep.subr.mxu0 0.0
    %388 = vmatpush2.msra.mxu0 0.0
    %389 = vmatprep.subr.mxu0 0.0
    %390 = vmatpush2.msra.mxu0 0.0
    %391 = vmatprep.subr.mxu0 0.0
    %392 = vmatpush2.msra.mxu0 0.0
    %393 = vmatprep.subr.mxu0 0.0
    %394 = vmatpush2.msra.mxu0 0.0
    %395 = vmatprep.subr.mxu0 0.0
    %396 = vmatpush2.msra.mxu0 0.0
    %397 = vmatprep.mubr.f32.mxu0 0.0
    %398 = vmatmul.mubr.f32.gmra.mxu0 %v328
    %v399 = vpop.f32.mrf.mxu0
    %v400 = vadd.f32 %v324, %v399
    %v401 = vpop.f32.mrf.mxu0
    %402 = vdwg.mxu0
    %v404 = vrot.slane %v400, 2
    %v406 = vadd.f32 %v400, %v404
    %v407 = vxor.u32 %v406, 2147483648
    %v408 = vmul.f32 %v407, 1.442695
    %v409 = vpow.pop %v408
    %v410 = vadd.f32 %v409, 1.0
    %v411 = vrcp.pop %v410
    %v412 = vmul.f32 1.0, %v411
    %v413 = vlaneseq
    %v414 = vshrl.u32 %v413, 7
    %v415 = vsub.s32 0, %v414
    %v416 = vrot.slane %v412, %v415
    %418 = vbcast.lane.b32.xlu0 %v416, 256
    %v419 = vpop.permute.xlu0 %418
    %s421 = sor.u32 256, 8
    %422 = vbcast.lane.b32.xlu0 %v416, %s421
    %v423 = vpop.permute.xlu0 %422
    %s425 = sor.u32 256, 16
    %426 = vbcast.lane.b32.xlu0 %v416, %s425
    %v427 = vpop.permute.xlu0 %426
    %s429 = sor.u32 256, 24
    %430 = vbcast.lane.b32.xlu0 %v416, %s429
    %v431 = vpop.permute.xlu0 %430
    %v432 = vlaneseq
    %v433 = vshrl.u32 %v432, 7
    %v434 = vsub.s32 1, %v433
    %v435 = vrot.slane %v412, %v434
    %437 = vbcast.lane.b32.xlu0 %v435, 256
    %v438 = vpop.permute.xlu0 %437
    %s440 = sor.u32 256, 8
    %441 = vbcast.lane.b32.xlu0 %v435, %s440
    %v442 = vpop.permute.xlu0 %441
    %s444 = sor.u32 256, 16
    %445 = vbcast.lane.b32.xlu0 %v435, %s444
    %v446 = vpop.permute.xlu0 %445
    %s448 = sor.u32 256, 24
    %449 = vbcast.lane.b32.xlu0 %v435, %s448
    %v450 = vpop.permute.xlu0 %449
    %v451 = vmul.f32 %v51, %v419
    %v452 = vmul.f32 %v52, %v419
    %v453 = vmul.f32 %v53, %v423
    %v454 = vmul.f32 %v54, %v423
    %v455 = vmul.f32 %v55, %v427
    %v456 = vmul.f32 %v56, %v427
    %v457 = vmul.f32 %v57, %v431
    %v458 = vmul.f32 %v58, %v431
    %v459 = vmul.f32 %v59, %v438
    %v460 = vmul.f32 %v60, %v438
    %v461 = vmul.f32 %v61, %v442
    %v462 = vmul.f32 %v62, %v442
    %v463 = vmul.f32 %v63, %v446
    %v464 = vmul.f32 %v64, %v446
    %v465 = vmul.f32 %v65, %v450
    %v466 = vmul.f32 %v66, %v450
    %v467 = vadd.f32 %v451, %v453
    %v468 = vadd.f32 %v467, %v455
    %v469 = vadd.f32 %v468, %v457
    %v470 = vrot.slane %v469, 4
    %v471 = vadd.f32 %v469, %v470
    %v472 = vrot.slane %v471, 2
    %v473 = vadd.f32 %v471, %v472
    %v474 = vrot.slane %v473, 1
    %v475 = vadd.f32 %v473, %v474
    %v476 = vadd.f32 %v452, %v454
    %v477 = vadd.f32 %v476, %v456
    %v478 = vadd.f32 %v477, %v458
    %v479 = vrot.slane %v478, 4
    %v480 = vadd.f32 %v478, %v479
    %v481 = vrot.slane %v480, 2
    %v482 = vadd.f32 %v480, %v481
    %v483 = vrot.slane %v482, 1
    %v484 = vadd.f32 %v482, %v483
    %v485 = vadd.f32 %v459, %v461
    %v486 = vadd.f32 %v485, %v463
    %v487 = vadd.f32 %v486, %v465
    %v488 = vrot.slane %v487, 4
    %v489 = vadd.f32 %v487, %v488
    %v490 = vrot.slane %v489, 2
    %v491 = vadd.f32 %v489, %v490
    %v492 = vrot.slane %v491, 1
    %v493 = vadd.f32 %v491, %v492
    %v494 = vadd.f32 %v460, %v462
    %v495 = vadd.f32 %v494, %v464
    %v496 = vadd.f32 %v495, %v466
    %v497 = vrot.slane %v496, 4
    %v498 = vadd.f32 %v496, %v497
    %v499 = vrot.slane %v498, 2
    %v500 = vadd.f32 %v498, %v499
    %v501 = vrot.slane %v500, 1
    %v502 = vadd.f32 %v500, %v501
    %v503 = vrcp.pop 32.0
    %v504 = vmul.f32 %v475, %v503
    %v505 = vmul.f32 %v484, %v503
    %v506 = vmul.f32 %v493, %v503
    %v507 = vmul.f32 %v502, %v503
    %v508 = vmax.f32 %v451, %v453
    %v509 = vmax.f32 %v508, %v455
    %v510 = vmax.f32 %v509, %v457
    %v511 = vrot.slane %v510, 4
    %v512 = vmax.f32 %v510, %v511
    %v513 = vrot.slane %v512, 2
    %v514 = vmax.f32 %v512, %v513
    %v515 = vrot.slane %v514, 1
    %v516 = vmax.f32 %v514, %v515
    %v517 = vmax.f32 %v452, %v454
    %v518 = vmax.f32 %v517, %v456
    %v519 = vmax.f32 %v518, %v458
    %v520 = vrot.slane %v519, 4
    %v521 = vmax.f32 %v519, %v520
    %v522 = vrot.slane %v521, 2
    %v523 = vmax.f32 %v521, %v522
    %v524 = vrot.slane %v523, 1
    %v525 = vmax.f32 %v523, %v524
    %v526 = vmax.f32 %v459, %v461
    %v527 = vmax.f32 %v526, %v463
    %v528 = vmax.f32 %v527, %v465
    %v529 = vrot.slane %v528, 4
    %v530 = vmax.f32 %v528, %v529
    %v531 = vrot.slane %v530, 2
    %v532 = vmax.f32 %v530, %v531
    %v533 = vrot.slane %v532, 1
    %v534 = vmax.f32 %v532, %v533
    %v535 = vmax.f32 %v460, %v462
    %v536 = vmax.f32 %v535, %v464
    %v537 = vmax.f32 %v536, %v466
    %v538 = vrot.slane %v537, 4
    %v539 = vmax.f32 %v537, %v538
    %v540 = vrot.slane %v539, 2
    %v541 = vmax.f32 %v539, %v540
    %v542 = vrot.slane %v541, 1
    %v543 = vmax.f32 %v541, %v542
    %vm544 = vcmask 1040384
    %v545 = vsel %vm544, %v504, %v516
    %v546 = vsel %vm544, %v505, %v525
    %v547 = vsel %vm544, %v506, %v534
    %v548 = vsel %vm544, %v507, %v543
    %vm549 = vcmask 179200
    %550 = vst.msk [vmem:[#allocation2] sm:$0xff] %vm549, 0.0
    %551 = vst.msk [vmem:[#allocation2 + $0x8] sm:$0xff] %vm549, 0.0
    %vm552 = vcmask 177152
    %553 = vst.msk [vmem:[#allocation2 + $0x10] sm:$0x3f] %vm552, 0.0
    %554 = vst.msk [vmem:[#allocation2 + $0x18] sm:$0xff] %vm549, 0.0
    %555 = vst.msk [vmem:[#allocation2 + $0x20] sm:$0xff] %vm549, 0.0
    %556 = vst.msk [vmem:[#allocation2 + $0x28] sm:$0x3f] %vm552, 0.0
    %557 = vst.msk [vmem:[#allocation2 + $0x30] sm:$0xff] %vm549, 0.0
    %558 = vst.msk [vmem:[#allocation2 + $0x38] sm:$0xff] %vm549, 0.0
    %559 = vst.msk [vmem:[#allocation2 + $0x40] sm:$0x3f] %vm552, 0.0
    %560 = vst.msk [vmem:[#allocation2 + $0x48] sm:$0xff] %vm549, 0.0
    %561 = vst.msk [vmem:[#allocation2 + $0x50] sm:$0xff] %vm549, 0.0
    %562 = vst.msk [vmem:[#allocation2 + $0x58] sm:$0x3f] %vm552, 0.0
    %v566 = vunpack.c.l.s4 1966171168
    %v567 = vunpack.c.0.s8 %v566
    %v568 = vlaneseq
    %v569 = vshrl.u32 %v568, 7
    %v570 = vsub.s32 %v567, %v569
    %v571 = vrot.slane %v545, %v570
    %v572 = vcombine.high %v571, %v571
    %v574 = vunpack.c.l.s4 1966171168
    %v575 = vunpack.c.0.s8 %v574
    %v576 = vlaneseq
    %v577 = vshrl.u32 %v576, 7
    %v578 = vsub.s32 %v575, %v577
    %v579 = vrot.slane %v571, %v578
    %v581 = vunpack.c.l.s4 1966171168
    %v582 = vunpack.c.0.s8 %v581
    %v583 = vlaneseq
    %v584 = vshrl.u32 %v583, 7
    %v585 = vsub.s32 %v582, %v584
    %v586 = vrot.slane %v572, %v585
    %v588 = vunpack.c.l.s4 1966171168
    %v589 = vunpack.c.0.s8 %v588
    %v590 = vlaneseq
    %v591 = vshrl.u32 %v590, 7
    %v592 = vsub.s32 %v589, %v591
    %v593 = vrot.slane %v547, %v592
    %v594 = vcombine.high %v593, %v593
    %v596 = vunpack.c.l.s4 1966171168
    %v597 = vunpack.c.0.s8 %v596
    %v598 = vlaneseq
    %v599 = vshrl.u32 %v598, 7
    %v600 = vsub.s32 %v597, %v599
    %v601 = vrot.slane %v593, %v600
    %v603 = vunpack.c.l.s4 1966171168
    %v604 = vunpack.c.0.s8 %v603
    %v605 = vlaneseq
    %v606 = vshrl.u32 %v605, 7
    %v607 = vsub.s32 %v604, %v606
    %v608 = vrot.slane %v594, %v607
    %v609 = vlaneseq
    %v610 = vshrl.u32 %v609, 7
    %v611 = vsub.s32 0, %v610
    %v612 = vrot.slane %v579, %v611
    %v613 = vlaneseq
    %v614 = vshrl.u32 %v613, 7
    %v615 = vsub.s32 0, %v614
    %v616 = vrot.slane %v586, %v615
    %v617 = vlaneseq
    %v618 = vshrl.u32 %v617, 7
    %v619 = vsub.s32 0, %v618
    %v620 = vrot.slane %v601, %v619
    %v621 = vlaneseq
    %v622 = vshrl.u32 %v621, 7
    %v623 = vsub.s32 0, %v622
    %v624 = vrot.slane %v608, %v623
    %625 = vrot.lane.b32.xlu0 %v612, 3
    %v626 = vpop.permute.xlu0 %625
    %627 = vrot.lane.b32.xlu0 %v616, 3
    %v628 = vpop.permute.xlu0 %627
    %629 = vrot.lane.b32.xlu0 %v620, 3
    %v630 = vpop.permute.xlu0 %629
    %631 = vrot.lane.b32.xlu0 %v624, 3
    %v632 = vpop.permute.xlu0 %631
    %vm637 = vcmask 147480
    %638 = vst.msk [vmem:[#allocation2 + $0x3] sm:$0x1] %vm637, %v626
    %639 = vst.msk [vmem:[#allocation2 + $0x1b] sm:$0x1] %vm637, %v628
    %640 = vst.msk [vmem:[#allocation2 + $0x33] sm:$0x1] %vm637, %v630
    %641 = vst.msk [vmem:[#allocation2 + $0x4b] sm:$0x1] %vm637, %v632
    %642 = vrot.lane.b32.xlu0 %v612, 115
    %v643 = vpop.permute.xlu0 %642
    %644 = vrot.lane.b32.xlu0 %v616, 115
    %v645 = vpop.permute.xlu0 %644
    %646 = vrot.lane.b32.xlu0 %v620, 115
    %v647 = vpop.permute.xlu0 %646
    %648 = vrot.lane.b32.xlu0 %v624, 115
    %v649 = vpop.permute.xlu0 %648
    %654 = vst.msk [vmem:[#allocation2 + $0x4] sm:$0x1] %vm637, %v643
    %655 = vst.msk [vmem:[#allocation2 + $0x1c] sm:$0x1] %vm637, %v645
    %656 = vst.msk [vmem:[#allocation2 + $0x34] sm:$0x1] %vm637, %v647
    %657 = vst.msk [vmem:[#allocation2 + $0x4c] sm:$0x1] %vm637, %v649
    %658 = vrot.lane.b32.xlu0 %v612, 99
    %v659 = vpop.permute.xlu0 %658
    %660 = vrot.lane.b32.xlu0 %v616, 99
    %v661 = vpop.permute.xlu0 %660
    %662 = vrot.lane.b32.xlu0 %v620, 99
    %v663 = vpop.permute.xlu0 %662
    %664 = vrot.lane.b32.xlu0 %v624, 99
    %v665 = vpop.permute.xlu0 %664
    %670 = vst.msk [vmem:[#allocation2 + $0x5] sm:$0x1] %vm637, %v659
    %671 = vst.msk [vmem:[#allocation2 + $0x1d] sm:$0x1] %vm637, %v661
    %672 = vst.msk [vmem:[#allocation2 + $0x35] sm:$0x1] %vm637, %v663
    %673 = vst.msk [vmem:[#allocation2 + $0x4d] sm:$0x1] %vm637, %v665
    %674 = vrot.lane.b32.xlu0 %v612, 83
    %v675 = vpop.permute.xlu0 %674
    %676 = vrot.lane.b32.xlu0 %v616, 83
    %v677 = vpop.permute.xlu0 %676
    %678 = vrot.lane.b32.xlu0 %v620, 83
    %v679 = vpop.permute.xlu0 %678
    %680 = vrot.lane.b32.xlu0 %v624, 83
    %v681 = vpop.permute.xlu0 %680
    %686 = vst.msk [vmem:[#allocation2 + $0x6] sm:$0x1] %vm637, %v675
    %687 = vst.msk [vmem:[#allocation2 + $0x1e] sm:$0x1] %vm637, %v677
    %688 = vst.msk [vmem:[#allocation2 + $0x36] sm:$0x1] %vm637, %v679
    %689 = vst.msk [vmem:[#allocation2 + $0x4e] sm:$0x1] %vm637, %v681
    %690 = vrot.lane.b32.xlu0 %v612, 67
    %v691 = vpop.permute.xlu0 %690
    %692 = vrot.lane.b32.xlu0 %v616, 67
    %v693 = vpop.permute.xlu0 %692
    %694 = vrot.lane.b32.xlu0 %v620, 67
    %v695 = vpop.permute.xlu0 %694
    %696 = vrot.lane.b32.xlu0 %v624, 67
    %v697 = vpop.permute.xlu0 %696
    %702 = vst.msk [vmem:[#allocation2 + $0x7] sm:$0x1] %vm637, %v691
    %703 = vst.msk [vmem:[#allocation2 + $0x1f] sm:$0x1] %vm637, %v693
    %704 = vst.msk [vmem:[#allocation2 + $0x37] sm:$0x1] %vm637, %v695
    %705 = vst.msk [vmem:[#allocation2 + $0x4f] sm:$0x1] %vm637, %v697
    %706 = vrot.lane.b32.xlu0 %v612, 51
    %v707 = vpop.permute.xlu0 %706
    %708 = vrot.lane.b32.xlu0 %v616, 51
    %v709 = vpop.permute.xlu0 %708
    %710 = vrot.lane.b32.xlu0 %v620, 51
    %v711 = vpop.permute.xlu0 %710
    %712 = vrot.lane.b32.xlu0 %v624, 51
    %v713 = vpop.permute.xlu0 %712
    %718 = vst.msk [vmem:[#allocation2 + $0x8] sm:$0x1] %vm637, %v707
    %719 = vst.msk [vmem:[#allocation2 + $0x20] sm:$0x1] %vm637, %v709
    %720 = vst.msk [vmem:[#allocation2 + $0x38] sm:$0x1] %vm637, %v711
    %721 = vst.msk [vmem:[#allocation2 + $0x50] sm:$0x1] %vm637, %v713
    %722 = vrot.lane.b32.xlu0 %v612, 35
    %v723 = vpop.permute.xlu0 %722
    %724 = vrot.lane.b32.xlu0 %v616, 35
    %v725 = vpop.permute.xlu0 %724
    %726 = vrot.lane.b32.xlu0 %v620, 35
    %v727 = vpop.permute.xlu0 %726
    %728 = vrot.lane.b32.xlu0 %v624, 35
    %v729 = vpop.permute.xlu0 %728
    %734 = vst.msk [vmem:[#allocation2 + $0x9] sm:$0x1] %vm637, %v723
    %735 = vst.msk [vmem:[#allocation2 + $0x21] sm:$0x1] %vm637, %v725
    %736 = vst.msk [vmem:[#allocation2 + $0x39] sm:$0x1] %vm637, %v727
    %737 = vst.msk [vmem:[#allocation2 + $0x51] sm:$0x1] %vm637, %v729
    %738 = vrot.lane.b32.xlu0 %v612, 19
    %v739 = vpop.permute.xlu0 %738
    %740 = vrot.lane.b32.xlu0 %v616, 19
    %v741 = vpop.permute.xlu0 %740
    %742 = vrot.lane.b32.xlu0 %v620, 19
    %v743 = vpop.permute.xlu0 %742
    %744 = vrot.lane.b32.xlu0 %v624, 19
    %v745 = vpop.permute.xlu0 %744
    %750 = vst.msk [vmem:[#allocation2 + $0xa] sm:$0x1] %vm637, %v739
    %751 = vst.msk [vmem:[#allocation2 + $0x22] sm:$0x1] %vm637, %v741
    %752 = vst.msk [vmem:[#allocation2 + $0x3a] sm:$0x1] %vm637, %v743
    %753 = vst.msk [vmem:[#allocation2 + $0x52] sm:$0x1] %vm637, %v745
    %v757 = vunpack.c.l.s4 1966171168
    %v758 = vunpack.c.0.s8 %v757
    %v759 = vlaneseq
    %v760 = vshrl.u32 %v759, 7
    %v761 = vsub.s32 %v758, %v760
    %v762 = vrot.slane %v546, %v761
    %v763 = vcombine.high %v762, %v762
    %v765 = vunpack.c.l.s4 1966171168
    %v766 = vunpack.c.0.s8 %v765
    %v767 = vlaneseq
    %v768 = vshrl.u32 %v767, 7
    %v769 = vsub.s32 %v766, %v768
    %v770 = vrot.slane %v762, %v769
    %v772 = vunpack.c.l.s4 1966171168
    %v773 = vunpack.c.0.s8 %v772
    %v774 = vlaneseq
    %v775 = vshrl.u32 %v774, 7
    %v776 = vsub.s32 %v773, %v775
    %v777 = vrot.slane %v763, %v776
    %v779 = vunpack.c.l.s4 1966171168
    %v780 = vunpack.c.0.s8 %v779
    %v781 = vlaneseq
    %v782 = vshrl.u32 %v781, 7
    %v783 = vsub.s32 %v780, %v782
    %v784 = vrot.slane %v548, %v783
    %v785 = vcombine.high %v784, %v784
    %v787 = vunpack.c.l.s4 1966171168
    %v788 = vunpack.c.0.s8 %v787
    %v789 = vlaneseq
    %v790 = vshrl.u32 %v789, 7
    %v791 = vsub.s32 %v788, %v790
    %v792 = vrot.slane %v784, %v791
    %v794 = vunpack.c.l.s4 1966171168
    %v795 = vunpack.c.0.s8 %v794
    %v796 = vlaneseq
    %v797 = vshrl.u32 %v796, 7
    %v798 = vsub.s32 %v795, %v797
    %v799 = vrot.slane %v785, %v798
    %v800 = vlaneseq
    %v801 = vshrl.u32 %v800, 7
    %v802 = vsub.s32 0, %v801
    %v803 = vrot.slane %v770, %v802
    %v804 = vlaneseq
    %v805 = vshrl.u32 %v804, 7
    %v806 = vsub.s32 0, %v805
    %v807 = vrot.slane %v777, %v806
    %v808 = vlaneseq
    %v809 = vshrl.u32 %v808, 7
    %v810 = vsub.s32 0, %v809
    %v811 = vrot.slane %v792, %v810
    %v812 = vlaneseq
    %v813 = vshrl.u32 %v812, 7
    %v814 = vsub.s32 0, %v813
    %v815 = vrot.slane %v799, %v814
    %816 = vrot.lane.b32.xlu0 %v803, 3
    %v817 = vpop.permute.xlu0 %816
    %818 = vrot.lane.b32.xlu0 %v807, 3
    %v819 = vpop.permute.xlu0 %818
    %820 = vrot.lane.b32.xlu0 %v811, 3
    %v821 = vpop.permute.xlu0 %820
    %822 = vrot.lane.b32.xlu0 %v815, 3
    %v823 = vpop.permute.xlu0 %822
    %828 = vst.msk [vmem:[#allocation2 + $0xb] sm:$0x1] %vm637, %v817
    %829 = vst.msk [vmem:[#allocation2 + $0x23] sm:$0x1] %vm637, %v819
    %830 = vst.msk [vmem:[#allocation2 + $0x3b] sm:$0x1] %vm637, %v821
    %831 = vst.msk [vmem:[#allocation2 + $0x53] sm:$0x1] %vm637, %v823
    %832 = vrot.lane.b32.xlu0 %v803, 115
    %v833 = vpop.permute.xlu0 %832
    %834 = vrot.lane.b32.xlu0 %v807, 115
    %v835 = vpop.permute.xlu0 %834
    %836 = vrot.lane.b32.xlu0 %v811, 115
    %v837 = vpop.permute.xlu0 %836
    %838 = vrot.lane.b32.xlu0 %v815, 115
    %v839 = vpop.permute.xlu0 %838
    %844 = vst.msk [vmem:[#allocation2 + $0xc] sm:$0x1] %vm637, %v833
    %845 = vst.msk [vmem:[#allocation2 + $0x24] sm:$0x1] %vm637, %v835
    %846 = vst.msk [vmem:[#allocation2 + $0x3c] sm:$0x1] %vm637, %v837
    %847 = vst.msk [vmem:[#allocation2 + $0x54] sm:$0x1] %vm637, %v839
    %848 = vrot.lane.b32.xlu0 %v803, 99
    %v849 = vpop.permute.xlu0 %848
    %850 = vrot.lane.b32.xlu0 %v807, 99
    %v851 = vpop.permute.xlu0 %850
    %852 = vrot.lane.b32.xlu0 %v811, 99
    %v853 = vpop.permute.xlu0 %852
    %854 = vrot.lane.b32.xlu0 %v815, 99
    %v855 = vpop.permute.xlu0 %854
    %860 = vst.msk [vmem:[#allocation2 + $0xd] sm:$0x1] %vm637, %v849
    %861 = vst.msk [vmem:[#allocation2 + $0x25] sm:$0x1] %vm637, %v851
    %862 = vst.msk [vmem:[#allocation2 + $0x3d] sm:$0x1] %vm637, %v853
    %863 = vst.msk [vmem:[#allocation2 + $0x55] sm:$0x1] %vm637, %v855
    %864 = vrot.lane.b32.xlu0 %v803, 83
    %v865 = vpop.permute.xlu0 %864
    %866 = vrot.lane.b32.xlu0 %v807, 83
    %v867 = vpop.permute.xlu0 %866
    %868 = vrot.lane.b32.xlu0 %v811, 83
    %v869 = vpop.permute.xlu0 %868
    %870 = vrot.lane.b32.xlu0 %v815, 83
    %v871 = vpop.permute.xlu0 %870
    %876 = vst.msk [vmem:[#allocation2 + $0xe] sm:$0x1] %vm637, %v865
    %877 = vst.msk [vmem:[#allocation2 + $0x26] sm:$0x1] %vm637, %v867
    %878 = vst.msk [vmem:[#allocation2 + $0x3e] sm:$0x1] %vm637, %v869
    %879 = vst.msk [vmem:[#allocation2 + $0x56] sm:$0x1] %vm637, %v871
    %880 = vrot.lane.b32.xlu0 %v803, 67
    %v881 = vpop.permute.xlu0 %880
    %882 = vrot.lane.b32.xlu0 %v807, 67
    %v883 = vpop.permute.xlu0 %882
    %884 = vrot.lane.b32.xlu0 %v811, 67
    %v885 = vpop.permute.xlu0 %884
    %886 = vrot.lane.b32.xlu0 %v815, 67
    %v887 = vpop.permute.xlu0 %886
    %892 = vst.msk [vmem:[#allocation2 + $0xf] sm:$0x1] %vm637, %v881
    %893 = vst.msk [vmem:[#allocation2 + $0x27] sm:$0x1] %vm637, %v883
    %894 = vst.msk [vmem:[#allocation2 + $0x3f] sm:$0x1] %vm637, %v885
    %895 = vst.msk [vmem:[#allocation2 + $0x57] sm:$0x1] %vm637, %v887
    %896 = vrot.lane.b32.xlu0 %v803, 51
    %v897 = vpop.permute.xlu0 %896
    %898 = vrot.lane.b32.xlu0 %v807, 51
    %v899 = vpop.permute.xlu0 %898
    %900 = vrot.lane.b32.xlu0 %v811, 51
    %v901 = vpop.permute.xlu0 %900
    %902 = vrot.lane.b32.xlu0 %v815, 51
    %v903 = vpop.permute.xlu0 %902
    %908 = vst.msk [vmem:[#allocation2 + $0x10] sm:$0x1] %vm637, %v897
    %909 = vst.msk [vmem:[#allocation2 + $0x28] sm:$0x1] %vm637, %v899
    %910 = vst.msk [vmem:[#allocation2 + $0x40] sm:$0x1] %vm637, %v901
    %911 = vst.msk [vmem:[#allocation2 + $0x58] sm:$0x1] %vm637, %v903
    %912 = vrot.lane.b32.xlu0 %v803, 35
    %v913 = vpop.permute.xlu0 %912
    %914 = vrot.lane.b32.xlu0 %v807, 35
    %v915 = vpop.permute.xlu0 %914
    %916 = vrot.lane.b32.xlu0 %v811, 35
    %v917 = vpop.permute.xlu0 %916
    %918 = vrot.lane.b32.xlu0 %v815, 35
    %v919 = vpop.permute.xlu0 %918
    %924 = vst.msk [vmem:[#allocation2 + $0x11] sm:$0x1] %vm637, %v913
    %925 = vst.msk [vmem:[#allocation2 + $0x29] sm:$0x1] %vm637, %v915
    %926 = vst.msk [vmem:[#allocation2 + $0x41] sm:$0x1] %vm637, %v917
    %927 = vst.msk [vmem:[#allocation2 + $0x59] sm:$0x1] %vm637, %v919
    %928 = vrot.lane.b32.xlu0 %v803, 19
    %v929 = vpop.permute.xlu0 %928
    %930 = vrot.lane.b32.xlu0 %v807, 19
    %v931 = vpop.permute.xlu0 %930
    %932 = vrot.lane.b32.xlu0 %v811, 19
    %v933 = vpop.permute.xlu0 %932
    %934 = vrot.lane.b32.xlu0 %v815, 19
    %v935 = vpop.permute.xlu0 %934
    %940 = vst.msk [vmem:[#allocation2 + $0x12] sm:$0x1] %vm637, %v929
    %941 = vst.msk [vmem:[#allocation2 + $0x2a] sm:$0x1] %vm637, %v931
    %942 = vst.msk [vmem:[#allocation2 + $0x42] sm:$0x1] %vm637, %v933
    %943 = vst.msk [vmem:[#allocation2 + $0x5a] sm:$0x1] %vm637, %v935
    %v944 = vld [vmem:[#allocation2] sm:$0xff]
    %v945 = vld [vmem:[#allocation2 + $0x8] sm:$0xff]
    %v946 = vld [vmem:[#allocation2 + $0x10] sm:$0x3f]
    %v947 = vld [vmem:[#allocation2 + $0x18] sm:$0xff]
    %v948 = vld [vmem:[#allocation2 + $0x20] sm:$0xff]
    %v949 = vld [vmem:[#allocation2 + $0x28] sm:$0x3f]
    %v950 = vld [vmem:[#allocation2 + $0x30] sm:$0xff]
    %v951 = vld [vmem:[#allocation2 + $0x38] sm:$0xff]
    %v952 = vld [vmem:[#allocation2 + $0x40] sm:$0x3f]
    %v953 = vld [vmem:[#allocation2 + $0x48] sm:$0xff]
    %v954 = vld [vmem:[#allocation2 + $0x50] sm:$0xff]
    %v955 = vld [vmem:[#allocation2 + $0x58] sm:$0x3f]
    %s956 = sld [smem:[#allocation3]]
    %v957 = vstv %s956
    %v958 = vmul.f32 %v957, %v944
    %v959 = vmul.f32 %v957, %v945
    %v960 = vmul.f32 %v957, %v950
    %v961 = vmul.f32 %v957, %v951
    %v962 = vadd.f32 %v958, 0.0
    %v963 = vadd.f32 %v959, 0.0
    %v964 = vadd.f32 %v960, 0.0
    %v965 = vadd.f32 %v961, 0.0
    %s966 = sld [smem:[#allocation3 + $0x31]]
    %v967 = vstv %s966
    %v968 = vmul.f32 %v967, %v947
    %v969 = vmul.f32 %v967, %v948
    %v970 = vmul.f32 %v967, %v953
    %v971 = vmul.f32 %v967, %v954
    %v972 = vadd.f32 %v962, %v968
    %v973 = vadd.f32 %v963, %v969
    %v974 = vadd.f32 %v964, %v970
    %v975 = vadd.f32 %v965, %v971
    %s976 = sld [smem:[#allocation3 + $0x1]]
    %v977 = vstv %s976
    %v978 = vmul.f32 %v977, %v944
    %v979 = vmul.f32 %v977, %v945
    %v980 = vmul.f32 %v977, %v950
    %v981 = vmul.f32 %v977, %v951
    %986 = vrot.lane.b32.xlu0 %v978, 127
    %v987 = vpop.permute.xlu0 %986
    %988 = vrot.lane.b32.xlu0 %v979, 127
    %v989 = vpop.permute.xlu0 %988
    %990 = vrot.lane.b32.xlu0 %v980, 127
    %v991 = vpop.permute.xlu0 %990
    %992 = vrot.lane.b32.xlu0 %v981, 127
    %v993 = vpop.permute.xlu0 %992
    %v998 = vadd.f32 %v972, %v987
    %v999 = vadd.f32 %v973, %v989
    %v1000 = vadd.f32 %v974, %v991
    %v1001 = vadd.f32 %v975, %v993
    %s1002 = sld [smem:[#allocation3 + $0x32]]
    %v1003 = vstv %s1002
    %v1004 = vmul.f32 %v1003, %v947
    %v1005 = vmul.f32 %v1003, %v948
    %v1006 = vmul.f32 %v1003, %v953
    %v1007 = vmul.f32 %v1003, %v954
    %1012 = vrot.lane.b32.xlu0 %v1004, 127
    %v1013 = vpop.permute.xlu0 %1012
    %1014 = vrot.lane.b32.xlu0 %v1005, 127
    %v1015 = vpop.permute.xlu0 %1014
    %1016 = vrot.lane.b32.xlu0 %v1006, 127
    %v1017 = vpop.permute.xlu0 %1016
    %1018 = vrot.lane.b32.xlu0 %v1007, 127
    %v1019 = vpop.permute.xlu0 %1018
    %v1024 = vadd.f32 %v998, %v1013
    %v1025 = vadd.f32 %v999, %v1015
    %v1026 = vadd.f32 %v1000, %v1017
    %v1027 = vadd.f32 %v1001, %v1019
    %s1028 = sld [smem:[#allocation3 + $0x2]]
    %v1029 = vstv %s1028
    %v1030 = vmul.f32 %v1029, %v944
    %v1031 = vmul.f32 %v1029, %v945
    %v1032 = vmul.f32 %v1029, %v950
    %v1033 = vmul.f32 %v1029, %v951
    %1038 = vrot.lane.b32.xlu0 %v1030, 126
    %v1039 = vpop.permute.xlu0 %1038
    %1040 = vrot.lane.b32.xlu0 %v1031, 126
    %v1041 = vpop.permute.xlu0 %1040
    %1042 = vrot.lane.b32.xlu0 %v1032, 126
    %v1043 = vpop.permute.xlu0 %1042
    %1044 = vrot.lane.b32.xlu0 %v1033, 126
    %v1045 = vpop.permute.xlu0 %1044
    %v1050 = vadd.f32 %v1024, %v1039
    %v1051 = vadd.f32 %v1025, %v1041
    %v1052 = vadd.f32 %v1026, %v1043
    %v1053 = vadd.f32 %v1027, %v1045
    %s1054 = sld [smem:[#allocation3 + $0x33]]
    %v1055 = vstv %s1054
    %v1056 = vmul.f32 %v1055, %v947
    %v1057 = vmul.f32 %v1055, %v948
    %v1058 = vmul.f32 %v1055, %v953
    %v1059 = vmul.f32 %v1055, %v954
    %1064 = vrot.lane.b32.xlu0 %v1056, 126
    %v1065 = vpop.permute.xlu0 %1064
    %1066 = vrot.lane.b32.xlu0 %v1057, 126
    %v1067 = vpop.permute.xlu0 %1066
    %1068 = vrot.lane.b32.xlu0 %v1058, 126
    %v1069 = vpop.permute.xlu0 %1068
    %1070 = vrot.lane.b32.xlu0 %v1059, 126
    %v1071 = vpop.permute.xlu0 %1070
    %v1076 = vadd.f32 %v1050, %v1065
    %v1077 = vadd.f32 %v1051, %v1067
    %v1078 = vadd.f32 %v1052, %v1069
    %v1079 = vadd.f32 %v1053, %v1071
    %s1080 = sld [smem:[#allocation3 + $0x3]]
    %v1081 = vstv %s1080
    %v1082 = vmul.f32 %v1081, %v944
    %v1083 = vmul.f32 %v1081, %v945
    %v1084 = vmul.f32 %v1081, %v950
    %v1085 = vmul.f32 %v1081, %v951
    %1090 = vrot.lane.b32.xlu0 %v1082, 125
    %v1091 = vpop.permute.xlu0 %1090
    %1092 = vrot.lane.b32.xlu0 %v1083, 125
    %v1093 = vpop.permute.xlu0 %1092
    %1094 = vrot.lane.b32.xlu0 %v1084, 125
    %v1095 = vpop.permute.xlu0 %1094
    %1096 = vrot.lane.b32.xlu0 %v1085, 125
    %v1097 = vpop.permute.xlu0 %1096
    %v1102 = vadd.f32 %v1076, %v1091
    %v1103 = vadd.f32 %v1077, %v1093
    %v1104 = vadd.f32 %v1078, %v1095
    %v1105 = vadd.f32 %v1079, %v1097
    %s1106 = sld [smem:[#allocation3 + $0x34]]
    %v1107 = vstv %s1106
    %v1108 = vmul.f32 %v1107, %v947
    %v1109 = vmul.f32 %v1107, %v948
    %v1110 = vmul.f32 %v1107, %v953
    %v1111 = vmul.f32 %v1107, %v954
    %1116 = vrot.lane.b32.xlu0 %v1108, 125
    %v1117 = vpop.permute.xlu0 %1116
    %1118 = vrot.lane.b32.xlu0 %v1109, 125
    %v1119 = vpop.permute.xlu0 %1118
    %1120 = vrot.lane.b32.xlu0 %v1110, 125
    %v1121 = vpop.permute.xlu0 %1120
    %1122 = vrot.lane.b32.xlu0 %v1111, 125
    %v1123 = vpop.permute.xlu0 %1122
    %v1128 = vadd.f32 %v1102, %v1117
    %v1129 = vadd.f32 %v1103, %v1119
    %v1130 = vadd.f32 %v1104, %v1121
    %v1131 = vadd.f32 %v1105, %v1123
    %s1132 = sld [smem:[#allocation3 + $0x4]]
    %v1133 = vstv %s1132
    %v1134 = vmul.f32 %v1133, %v944
    %v1135 = vmul.f32 %v1133, %v945
    %v1136 = vmul.f32 %v1133, %v950
    %v1137 = vmul.f32 %v1133, %v951
    %1142 = vrot.lane.b32.xlu0 %v1134, 124
    %v1143 = vpop.permute.xlu0 %1142
    %1144 = vrot.lane.b32.xlu0 %v1135, 124
    %v1145 = vpop.permute.xlu0 %1144
    %1146 = vrot.lane.b32.xlu0 %v1136, 124
    %v1147 = vpop.permute.xlu0 %1146
    %1148 = vrot.lane.b32.xlu0 %v1137, 124
    %v1149 = vpop.permute.xlu0 %1148
    %v1154 = vadd.f32 %v1128, %v1143
    %v1155 = vadd.f32 %v1129, %v1145
    %v1156 = vadd.f32 %v1130, %v1147
    %v1157 = vadd.f32 %v1131, %v1149
    %s1158 = sld [smem:[#allocation3 + $0x35]]
    %v1159 = vstv %s1158
    %v1160 = vmul.f32 %v1159, %v947
    %v1161 = vmul.f32 %v1159, %v948
    %v1162 = vmul.f32 %v1159, %v953
    %v1163 = vmul.f32 %v1159, %v954
    %1168 = vrot.lane.b32.xlu0 %v1160, 124
    %v1169 = vpop.permute.xlu0 %1168
    %1170 = vrot.lane.b32.xlu0 %v1161, 124
    %v1171 = vpop.permute.xlu0 %1170
    %1172 = vrot.lane.b32.xlu0 %v1162, 124
    %v1173 = vpop.permute.xlu0 %1172
    %1174 = vrot.lane.b32.xlu0 %v1163, 124
    %v1175 = vpop.permute.xlu0 %1174
    %v1180 = vadd.f32 %v1154, %v1169
    %v1181 = vadd.f32 %v1155, %v1171
    %v1182 = vadd.f32 %v1156, %v1173
    %v1183 = vadd.f32 %v1157, %v1175
    %s1184 = sld [smem:[#allocation3 + $0x5]]
    %v1185 = vstv %s1184
    %v1186 = vmul.f32 %v1185, %v944
    %v1187 = vmul.f32 %v1185, %v945
    %v1188 = vmul.f32 %v1185, %v950
    %v1189 = vmul.f32 %v1185, %v951
    %1194 = vrot.lane.b32.xlu0 %v1186, 123
    %v1195 = vpop.permute.xlu0 %1194
    %1196 = vrot.lane.b32.xlu0 %v1187, 123
    %v1197 = vpop.permute.xlu0 %1196
    %1198 = vrot.lane.b32.xlu0 %v1188, 123
    %v1199 = vpop.permute.xlu0 %1198
    %1200 = vrot.lane.b32.xlu0 %v1189, 123
    %v1201 = vpop.permute.xlu0 %1200
    %v1206 = vadd.f32 %v1180, %v1195
    %v1207 = vadd.f32 %v1181, %v1197
    %v1208 = vadd.f32 %v1182, %v1199
    %v1209 = vadd.f32 %v1183, %v1201
    %s1210 = sld [smem:[#allocation3 + $0x36]]
    %v1211 = vstv %s1210
    %v1212 = vmul.f32 %v1211, %v947
    %v1213 = vmul.f32 %v1211, %v948
    %v1214 = vmul.f32 %v1211, %v953
    %v1215 = vmul.f32 %v1211, %v954
    %1220 = vrot.lane.b32.xlu0 %v1212, 123
    %v1221 = vpop.permute.xlu0 %1220
    %1222 = vrot.lane.b32.xlu0 %v1213, 123
    %v1223 = vpop.permute.xlu0 %1222
    %1224 = vrot.lane.b32.xlu0 %v1214, 123
    %v1225 = vpop.permute.xlu0 %1224
    %1226 = vrot.lane.b32.xlu0 %v1215, 123
    %v1227 = vpop.permute.xlu0 %1226
    %v1232 = vadd.f32 %v1206, %v1221
    %v1233 = vadd.f32 %v1207, %v1223
    %v1234 = vadd.f32 %v1208, %v1225
    %v1235 = vadd.f32 %v1209, %v1227
    %s1236 = sld [smem:[#allocation3 + $0x6]]
    %v1237 = vstv %s1236
    %v1238 = vmul.f32 %v1237, %v944
    %v1239 = vmul.f32 %v1237, %v945
    %v1240 = vmul.f32 %v1237, %v950
    %v1241 = vmul.f32 %v1237, %v951
    %1246 = vrot.lane.b32.xlu0 %v1238, 122
    %v1247 = vpop.permute.xlu0 %1246
    %1248 = vrot.lane.b32.xlu0 %v1239, 122
    %v1249 = vpop.permute.xlu0 %1248
    %1250 = vrot.lane.b32.xlu0 %v1240, 122
    %v1251 = vpop.permute.xlu0 %1250
    %1252 = vrot.lane.b32.xlu0 %v1241, 122
    %v1253 = vpop.permute.xlu0 %1252
    %v1258 = vadd.f32 %v1232, %v1247
    %v1259 = vadd.f32 %v1233, %v1249
    %v1260 = vadd.f32 %v1234, %v1251
    %v1261 = vadd.f32 %v1235, %v1253
    %s1262 = sld [smem:[#allocation3 + $0x37]]
    %v1263 = vstv %s1262
    %v1264 = vmul.f32 %v1263, %v947
    %v1265 = vmul.f32 %v1263, %v948
    %v1266 = vmul.f32 %v1263, %v953
    %v1267 = vmul.f32 %v1263, %v954
    %1272 = vrot.lane.b32.xlu0 %v1264, 122
    %v1273 = vpop.permute.xlu0 %1272
    %1274 = vrot.lane.b32.xlu0 %v1265, 122
    %v1275 = vpop.permute.xlu0 %1274
    %1276 = vrot.lane.b32.xlu0 %v1266, 122
    %v1277 = vpop.permute.xlu0 %1276
    %1278 = vrot.lane.b32.xlu0 %v1267, 122
    %v1279 = vpop.permute.xlu0 %1278
    %v1284 = vadd.f32 %v1258, %v1273
    %v1285 = vadd.f32 %v1259, %v1275
    %v1286 = vadd.f32 %v1260, %v1277
    %v1287 = vadd.f32 %v1261, %v1279
    %v1288 = vadd.f32 %v1284, 0.0
    %v1289 = vadd.f32 %v1285, 0.0
    %v1290 = vadd.f32 %v1286, 0.0
    %v1291 = vadd.f32 %v1287, 0.0
    %s1292 = sld [smem:[#allocation3 + $0x7]]
    %v1293 = vstv %s1292
    %v1294 = vmul.f32 %v1293, %v944
    %v1295 = vmul.f32 %v1293, %v945
    %v1296 = vmul.f32 %v1293, %v946
    %v1297 = vmul.f32 %v1293, %v950
    %v1298 = vmul.f32 %v1293, %v951
    %v1299 = vmul.f32 %v1293, %v952
    %v1300 = vadd.f32 %v1294, 0.0
    %v1301 = vadd.f32 %v1295, 0.0
    %v1302 = vadd.f32 %v1296, 0.0
    %v1303 = vadd.f32 %v1297, 0.0
    %v1304 = vadd.f32 %v1298, 0.0
    %v1305 = vadd.f32 %v1299, 0.0
    %s1306 = sld [smem:[#allocation3 + $0x38]]
    %v1307 = vstv %s1306
    %v1308 = vmul.f32 %v1307, %v947
    %v1309 = vmul.f32 %v1307, %v948
    %v1310 = vmul.f32 %v1307, %v949
    %v1311 = vmul.f32 %v1307, %v953
    %v1312 = vmul.f32 %v1307, %v954
    %v1313 = vmul.f32 %v1307, %v955
    %v1314 = vadd.f32 %v1300, %v1308
    %v1315 = vadd.f32 %v1301, %v1309
    %v1316 = vadd.f32 %v1302, %v1310
    %v1317 = vadd.f32 %v1303, %v1311
    %v1318 = vadd.f32 %v1304, %v1312
    %v1319 = vadd.f32 %v1305, %v1313
    %s1320 = sld [smem:[#allocation3 + $0x8]]
    %v1321 = vstv %s1320
    %v1322 = vmul.f32 %v1321, %v944
    %v1323 = vmul.f32 %v1321, %v945
    %v1324 = vmul.f32 %v1321, %v946
    %v1325 = vmul.f32 %v1321, %v950
    %v1326 = vmul.f32 %v1321, %v951
    %v1327 = vmul.f32 %v1321, %v952
    %1334 = vrot.lane.b32.xlu0 %v1322, 127
    %v1335 = vpop.permute.xlu0 %1334
    %1336 = vrot.lane.b32.xlu0 %v1323, 127
    %v1337 = vpop.permute.xlu0 %1336
    %1338 = vrot.lane.b32.xlu0 %v1324, 127
    %v1339 = vpop.permute.xlu0 %1338
    %1340 = vrot.lane.b32.xlu0 %v1325, 127
    %v1341 = vpop.permute.xlu0 %1340
    %1342 = vrot.lane.b32.xlu0 %v1326, 127
    %v1343 = vpop.permute.xlu0 %1342
    %1344 = vrot.lane.b32.xlu0 %v1327, 127
    %v1345 = vpop.permute.xlu0 %1344
    %v1352 = vadd.f32 %v1314, %v1335
    %v1353 = vadd.f32 %v1315, %v1337
    %v1354 = vadd.f32 %v1316, %v1339
    %v1355 = vadd.f32 %v1317, %v1341
    %v1356 = vadd.f32 %v1318, %v1343
    %v1357 = vadd.f32 %v1319, %v1345
    %s1358 = sld [smem:[#allocation3 + $0x39]]
    %v1359 = vstv %s1358
    %v1360 = vmul.f32 %v1359, %v947
    %v1361 = vmul.f32 %v1359, %v948
    %v1362 = vmul.f32 %v1359, %v949
    %v1363 = vmul.f32 %v1359, %v953
    %v1364 = vmul.f32 %v1359, %v954
    %v1365 = vmul.f32 %v1359, %v955
    %1372 = vrot.lane.b32.xlu0 %v1360, 127
    %v1373 = vpop.permute.xlu0 %1372
    %1374 = vrot.lane.b32.xlu0 %v1361, 127
    %v1375 = vpop.permute.xlu0 %1374
    %1376 = vrot.lane.b32.xlu0 %v1362, 127
    %v1377 = vpop.permute.xlu0 %1376
    %1378 = vrot.lane.b32.xlu0 %v1363, 127
    %v1379 = vpop.permute.xlu0 %1378
    %1380 = vrot.lane.b32.xlu0 %v1364, 127
    %v1381 = vpop.permute.xlu0 %1380
    %1382 = vrot.lane.b32.xlu0 %v1365, 127
    %v1383 = vpop.permute.xlu0 %1382
    %v1390 = vadd.f32 %v1352, %v1373
    %v1391 = vadd.f32 %v1353, %v1375
    %v1392 = vadd.f32 %v1354, %v1377
    %v1393 = vadd.f32 %v1355, %v1379
    %v1394 = vadd.f32 %v1356, %v1381
    %v1395 = vadd.f32 %v1357, %v1383
    %s1396 = sld [smem:[#allocation3 + $0x9]]
    %v1397 = vstv %s1396
    %v1398 = vmul.f32 %v1397, %v944
    %v1399 = vmul.f32 %v1397, %v945
    %v1400 = vmul.f32 %v1397, %v946
    %v1401 = vmul.f32 %v1397, %v950
    %v1402 = vmul.f32 %v1397, %v951
    %v1403 = vmul.f32 %v1397, %v952
    %1410 = vrot.lane.b32.xlu0 %v1398, 126
    %v1411 = vpop.permute.xlu0 %1410
    %1412 = vrot.lane.b32.xlu0 %v1399, 126
    %v1413 = vpop.permute.xlu0 %1412
    %1414 = vrot.lane.b32.xlu0 %v1400, 126
    %v1415 = vpop.permute.xlu0 %1414
    %1416 = vrot.lane.b32.xlu0 %v1401, 126
    %v1417 = vpop.permute.xlu0 %1416
    %1418 = vrot.lane.b32.xlu0 %v1402, 126
    %v1419 = vpop.permute.xlu0 %1418
    %1420 = vrot.lane.b32.xlu0 %v1403, 126
    %v1421 = vpop.permute.xlu0 %1420
    %v1428 = vadd.f32 %v1390, %v1411
    %v1429 = vadd.f32 %v1391, %v1413
    %v1430 = vadd.f32 %v1392, %v1415
    %v1431 = vadd.f32 %v1393, %v1417
    %v1432 = vadd.f32 %v1394, %v1419
    %v1433 = vadd.f32 %v1395, %v1421
    %s1434 = sld [smem:[#allocation3 + $0x3a]]
    %v1435 = vstv %s1434
    %v1436 = vmul.f32 %v1435, %v947
    %v1437 = vmul.f32 %v1435, %v948
    %v1438 = vmul.f32 %v1435, %v949
    %v1439 = vmul.f32 %v1435, %v953
    %v1440 = vmul.f32 %v1435, %v954
    %v1441 = vmul.f32 %v1435, %v955
    %1448 = vrot.lane.b32.xlu0 %v1436, 126
    %v1449 = vpop.permute.xlu0 %1448
    %1450 = vrot.lane.b32.xlu0 %v1437, 126
    %v1451 = vpop.permute.xlu0 %1450
    %1452 = vrot.lane.b32.xlu0 %v1438, 126
    %v1453 = vpop.permute.xlu0 %1452
    %1454 = vrot.lane.b32.xlu0 %v1439, 126
    %v1455 = vpop.permute.xlu0 %1454
    %1456 = vrot.lane.b32.xlu0 %v1440, 126
    %v1457 = vpop.permute.xlu0 %1456
    %1458 = vrot.lane.b32.xlu0 %v1441, 126
    %v1459 = vpop.permute.xlu0 %1458
    %v1466 = vadd.f32 %v1428, %v1449
    %v1467 = vadd.f32 %v1429, %v1451
    %v1468 = vadd.f32 %v1430, %v1453
    %v1469 = vadd.f32 %v1431, %v1455
    %v1470 = vadd.f32 %v1432, %v1457
    %v1471 = vadd.f32 %v1433, %v1459
    %s1472 = sld [smem:[#allocation3 + $0xa]]
    %v1473 = vstv %s1472
    %v1474 = vmul.f32 %v1473, %v944
    %v1475 = vmul.f32 %v1473, %v945
    %v1476 = vmul.f32 %v1473, %v946
    %v1477 = vmul.f32 %v1473, %v950
    %v1478 = vmul.f32 %v1473, %v951
    %v1479 = vmul.f32 %v1473, %v952
    %1486 = vrot.lane.b32.xlu0 %v1474, 125
    %v1487 = vpop.permute.xlu0 %1486
    %1488 = vrot.lane.b32.xlu0 %v1475, 125
    %v1489 = vpop.permute.xlu0 %1488
    %1490 = vrot.lane.b32.xlu0 %v1476, 125
    %v1491 = vpop.permute.xlu0 %1490
    %1492 = vrot.lane.b32.xlu0 %v1477, 125
    %v1493 = vpop.permute.xlu0 %1492
    %1494 = vrot.lane.b32.xlu0 %v1478, 125
    %v1495 = vpop.permute.xlu0 %1494
    %1496 = vrot.lane.b32.xlu0 %v1479, 125
    %v1497 = vpop.permute.xlu0 %1496
    %v1504 = vadd.f32 %v1466, %v1487
    %v1505 = vadd.f32 %v1467, %v1489
    %v1506 = vadd.f32 %v1468, %v1491
    %v1507 = vadd.f32 %v1469, %v1493
    %v1508 = vadd.f32 %v1470, %v1495
    %v1509 = vadd.f32 %v1471, %v1497
    %s1510 = sld [smem:[#allocation3 + $0x3b]]
    %v1511 = vstv %s1510
    %v1512 = vmul.f32 %v1511, %v947
    %v1513 = vmul.f32 %v1511, %v948
    %v1514 = vmul.f32 %v1511, %v949
    %v1515 = vmul.f32 %v1511, %v953
    %v1516 = vmul.f32 %v1511, %v954
    %v1517 = vmul.f32 %v1511, %v955
    %1524 = vrot.lane.b32.xlu0 %v1512, 125
    %v1525 = vpop.permute.xlu0 %1524
    %1526 = vrot.lane.b32.xlu0 %v1513, 125
    %v1527 = vpop.permute.xlu0 %1526
    %1528 = vrot.lane.b32.xlu0 %v1514, 125
    %v1529 = vpop.permute.xlu0 %1528
    %1530 = vrot.lane.b32.xlu0 %v1515, 125
    %v1531 = vpop.permute.xlu0 %1530
    %1532 = vrot.lane.b32.xlu0 %v1516, 125
    %v1533 = vpop.permute.xlu0 %1532
    %1534 = vrot.lane.b32.xlu0 %v1517, 125
    %v1535 = vpop.permute.xlu0 %1534
    %v1542 = vadd.f32 %v1504, %v1525
    %v1543 = vadd.f32 %v1505, %v1527
    %v1544 = vadd.f32 %v1506, %v1529
    %v1545 = vadd.f32 %v1507, %v1531
    %v1546 = vadd.f32 %v1508, %v1533
    %v1547 = vadd.f32 %v1509, %v1535
    %s1548 = sld [smem:[#allocation3 + $0xb]]
    %v1549 = vstv %s1548
    %v1550 = vmul.f32 %v1549, %v944
    %v1551 = vmul.f32 %v1549, %v945
    %v1552 = vmul.f32 %v1549, %v946
    %v1553 = vmul.f32 %v1549, %v950
    %v1554 = vmul.f32 %v1549, %v951
    %v1555 = vmul.f32 %v1549, %v952
    %1562 = vrot.lane.b32.xlu0 %v1550, 124
    %v1563 = vpop.permute.xlu0 %1562
    %1564 = vrot.lane.b32.xlu0 %v1551, 124
    %v1565 = vpop.permute.xlu0 %1564
    %1566 = vrot.lane.b32.xlu0 %v1552, 124
    %v1567 = vpop.permute.xlu0 %1566
    %1568 = vrot.lane.b32.xlu0 %v1553, 124
    %v1569 = vpop.permute.xlu0 %1568
    %1570 = vrot.lane.b32.xlu0 %v1554, 124
    %v1571 = vpop.permute.xlu0 %1570
    %1572 = vrot.lane.b32.xlu0 %v1555, 124
    %v1573 = vpop.permute.xlu0 %1572
    %v1580 = vadd.f32 %v1542, %v1563
    %v1581 = vadd.f32 %v1543, %v1565
    %v1582 = vadd.f32 %v1544, %v1567
    %v1583 = vadd.f32 %v1545, %v1569
    %v1584 = vadd.f32 %v1546, %v1571
    %v1585 = vadd.f32 %v1547, %v1573
    %s1586 = sld [smem:[#allocation3 + $0x3c]]
    %v1587 = vstv %s1586
    %v1588 = vmul.f32 %v1587, %v947
    %v1589 = vmul.f32 %v1587, %v948
    %v1590 = vmul.f32 %v1587, %v949
    %v1591 = vmul.f32 %v1587, %v953
    %v1592 = vmul.f32 %v1587, %v954
    %v1593 = vmul.f32 %v1587, %v955
    %1600 = vrot.lane.b32.xlu0 %v1588, 124
    %v1601 = vpop.permute.xlu0 %1600
    %1602 = vrot.lane.b32.xlu0 %v1589, 124
    %v1603 = vpop.permute.xlu0 %1602
    %1604 = vrot.lane.b32.xlu0 %v1590, 124
    %v1605 = vpop.permute.xlu0 %1604
    %1606 = vrot.lane.b32.xlu0 %v1591, 124
    %v1607 = vpop.permute.xlu0 %1606
    %1608 = vrot.lane.b32.xlu0 %v1592, 124
    %v1609 = vpop.permute.xlu0 %1608
    %1610 = vrot.lane.b32.xlu0 %v1593, 124
    %v1611 = vpop.permute.xlu0 %1610
    %v1618 = vadd.f32 %v1580, %v1601
    %v1619 = vadd.f32 %v1581, %v1603
    %v1620 = vadd.f32 %v1582, %v1605
    %v1621 = vadd.f32 %v1583, %v1607
    %v1622 = vadd.f32 %v1584, %v1609
    %v1623 = vadd.f32 %v1585, %v1611
    %s1624 = sld [smem:[#allocation3 + $0xc]]
    %v1625 = vstv %s1624
    %v1626 = vmul.f32 %v1625, %v944
    %v1627 = vmul.f32 %v1625, %v945
    %v1628 = vmul.f32 %v1625, %v946
    %v1629 = vmul.f32 %v1625, %v950
    %v1630 = vmul.f32 %v1625, %v951
    %v1631 = vmul.f32 %v1625, %v952
    %1638 = vrot.lane.b32.xlu0 %v1626, 123
    %v1639 = vpop.permute.xlu0 %1638
    %1640 = vrot.lane.b32.xlu0 %v1627, 123
    %v1641 = vpop.permute.xlu0 %1640
    %1642 = vrot.lane.b32.xlu0 %v1628, 123
    %v1643 = vpop.permute.xlu0 %1642
    %1644 = vrot.lane.b32.xlu0 %v1629, 123
    %v1645 = vpop.permute.xlu0 %1644
    %1646 = vrot.lane.b32.xlu0 %v1630, 123
    %v1647 = vpop.permute.xlu0 %1646
    %1648 = vrot.lane.b32.xlu0 %v1631, 123
    %v1649 = vpop.permute.xlu0 %1648
    %v1656 = vadd.f32 %v1618, %v1639
    %v1657 = vadd.f32 %v1619, %v1641
    %v1658 = vadd.f32 %v1620, %v1643
    %v1659 = vadd.f32 %v1621, %v1645
    %v1660 = vadd.f32 %v1622, %v1647
    %v1661 = vadd.f32 %v1623, %v1649
    %s1662 = sld [smem:[#allocation3 + $0x3d]]
    %v1663 = vstv %s1662
    %v1664 = vmul.f32 %v1663, %v947
    %v1665 = vmul.f32 %v1663, %v948
    %v1666 = vmul.f32 %v1663, %v949
    %v1667 = vmul.f32 %v1663, %v953
    %v1668 = vmul.f32 %v1663, %v954
    %v1669 = vmul.f32 %v1663, %v955
    %1676 = vrot.lane.b32.xlu0 %v1664, 123
    %v1677 = vpop.permute.xlu0 %1676
    %1678 = vrot.lane.b32.xlu0 %v1665, 123
    %v1679 = vpop.permute.xlu0 %1678
    %1680 = vrot.lane.b32.xlu0 %v1666, 123
    %v1681 = vpop.permute.xlu0 %1680
    %1682 = vrot.lane.b32.xlu0 %v1667, 123
    %v1683 = vpop.permute.xlu0 %1682
    %1684 = vrot.lane.b32.xlu0 %v1668, 123
    %v1685 = vpop.permute.xlu0 %1684
    %1686 = vrot.lane.b32.xlu0 %v1669, 123
    %v1687 = vpop.permute.xlu0 %1686
    %v1694 = vadd.f32 %v1656, %v1677
    %v1695 = vadd.f32 %v1657, %v1679
    %v1696 = vadd.f32 %v1658, %v1681
    %v1697 = vadd.f32 %v1659, %v1683
    %v1698 = vadd.f32 %v1660, %v1685
    %v1699 = vadd.f32 %v1661, %v1687
    %s1700 = sld [smem:[#allocation3 + $0xd]]
    %v1701 = vstv %s1700
    %v1702 = vmul.f32 %v1701, %v944
    %v1703 = vmul.f32 %v1701, %v945
    %v1704 = vmul.f32 %v1701, %v946
    %v1705 = vmul.f32 %v1701, %v950
    %v1706 = vmul.f32 %v1701, %v951
    %v1707 = vmul.f32 %v1701, %v952
    %1714 = vrot.lane.b32.xlu0 %v1702, 122
    %v1715 = vpop.permute.xlu0 %1714
    %1716 = vrot.lane.b32.xlu0 %v1703, 122
    %v1717 = vpop.permute.xlu0 %1716
    %1718 = vrot.lane.b32.xlu0 %v1704, 122
    %v1719 = vpop.permute.xlu0 %1718
    %1720 = vrot.lane.b32.xlu0 %v1705, 122
    %v1721 = vpop.permute.xlu0 %1720
    %1722 = vrot.lane.b32.xlu0 %v1706, 122
    %v1723 = vpop.permute.xlu0 %1722
    %1724 = vrot.lane.b32.xlu0 %v1707, 122
    %v1725 = vpop.permute.xlu0 %1724
    %v1732 = vadd.f32 %v1694, %v1715
    %v1733 = vadd.f32 %v1695, %v1717
    %v1734 = vadd.f32 %v1696, %v1719
    %v1735 = vadd.f32 %v1697, %v1721
    %v1736 = vadd.f32 %v1698, %v1723
    %v1737 = vadd.f32 %v1699, %v1725
    %s1738 = sld [smem:[#allocation3 + $0x3e]]
    %v1739 = vstv %s1738
    %v1740 = vmul.f32 %v1739, %v947
    %v1741 = vmul.f32 %v1739, %v948
    %v1742 = vmul.f32 %v1739, %v949
    %v1743 = vmul.f32 %v1739, %v953
    %v1744 = vmul.f32 %v1739, %v954
    %v1745 = vmul.f32 %v1739, %v955
    %1752 = vrot.lane.b32.xlu0 %v1740, 122
    %v1753 = vpop.permute.xlu0 %1752
    %1754 = vrot.lane.b32.xlu0 %v1741, 122
    %v1755 = vpop.permute.xlu0 %1754
    %1756 = vrot.lane.b32.xlu0 %v1742, 122
    %v1757 = vpop.permute.xlu0 %1756
    %1758 = vrot.lane.b32.xlu0 %v1743, 122
    %v1759 = vpop.permute.xlu0 %1758
    %1760 = vrot.lane.b32.xlu0 %v1744, 122
    %v1761 = vpop.permute.xlu0 %1760
    %1762 = vrot.lane.b32.xlu0 %v1745, 122
    %v1763 = vpop.permute.xlu0 %1762
    %v1770 = vadd.f32 %v1732, %v1753
    %v1771 = vadd.f32 %v1733, %v1755
    %v1772 = vadd.f32 %v1734, %v1757
    %v1773 = vadd.f32 %v1735, %v1759
    %v1774 = vadd.f32 %v1736, %v1761
    %v1775 = vadd.f32 %v1737, %v1763
    %vm1782 = vcmask 1046528
    %v1783 = vrot.slane %v1770, 1
    %v1784 = vrot.slane %v1771, 1
    %v1785 = vsel %vm1782, %v1783, %v1784
    %v1786 = vrot.slane %v1772, 1
    %v1787 = vsel %vm1782, %v1784, %v1786
    %v1788 = vrot.slane %v1773, 1
    %v1789 = vrot.slane %v1774, 1
    %v1790 = vsel %vm1782, %v1788, %v1789
    %v1791 = vrot.slane %v1775, 1
    %v1792 = vsel %vm1782, %v1789, %v1791
    %v1797 = vadd.f32 %v1288, %v1785
    %v1798 = vadd.f32 %v1289, %v1787
    %v1799 = vadd.f32 %v1290, %v1790
    %v1800 = vadd.f32 %v1291, %v1792
    %s1801 = sld [smem:[#allocation3 + $0xe]]
    %v1802 = vstv %s1801
    %v1803 = vmul.f32 %v1802, %v944
    %v1804 = vmul.f32 %v1802, %v945
    %v1805 = vmul.f32 %v1802, %v946
    %v1806 = vmul.f32 %v1802, %v950
    %v1807 = vmul.f32 %v1802, %v951
    %v1808 = vmul.f32 %v1802, %v952
    %v1809 = vadd.f32 %v1803, 0.0
    %v1810 = vadd.f32 %v1804, 0.0
    %v1811 = vadd.f32 %v1805, 0.0
    %v1812 = vadd.f32 %v1806, 0.0
    %v1813 = vadd.f32 %v1807, 0.0
    %v1814 = vadd.f32 %v1808, 0.0
    %s1815 = sld [smem:[#allocation3 + $0x3f]]
    %v1816 = vstv %s1815
    %v1817 = vmul.f32 %v1816, %v947
    %v1818 = vmul.f32 %v1816, %v948
    %v1819 = vmul.f32 %v1816, %v949
    %v1820 = vmul.f32 %v1816, %v953
    %v1821 = vmul.f32 %v1816, %v954
    %v1822 = vmul.f32 %v1816, %v955
    %v1823 = vadd.f32 %v1809, %v1817
    %v1824 = vadd.f32 %v1810, %v1818
    %v1825 = vadd.f32 %v1811, %v1819
    %v1826 = vadd.f32 %v1812, %v1820
    %v1827 = vadd.f32 %v1813, %v1821
    %v1828 = vadd.f32 %v1814, %v1822
    %s1829 = sld [smem:[#allocation3 + $0xf]]
    %v1830 = vstv %s1829
    %v1831 = vmul.f32 %v1830, %v944
    %v1832 = vmul.f32 %v1830, %v945
    %v1833 = vmul.f32 %v1830, %v946
    %v1834 = vmul.f32 %v1830, %v950
    %v1835 = vmul.f32 %v1830, %v951
    %v1836 = vmul.f32 %v1830, %v952
    %1843 = vrot.lane.b32.xlu0 %v1831, 127
    %v1844 = vpop.permute.xlu0 %1843
    %1845 = vrot.lane.b32.xlu0 %v1832, 127
    %v1846 = vpop.permute.xlu0 %1845
    %1847 = vrot.lane.b32.xlu0 %v1833, 127
    %v1848 = vpop.permute.xlu0 %1847
    %1849 = vrot.lane.b32.xlu0 %v1834, 127
    %v1850 = vpop.permute.xlu0 %1849
    %1851 = vrot.lane.b32.xlu0 %v1835, 127
    %v1852 = vpop.permute.xlu0 %1851
    %1853 = vrot.lane.b32.xlu0 %v1836, 127
    %v1854 = vpop.permute.xlu0 %1853
    %v1861 = vadd.f32 %v1823, %v1844
    %v1862 = vadd.f32 %v1824, %v1846
    %v1863 = vadd.f32 %v1825, %v1848
    %v1864 = vadd.f32 %v1826, %v1850
    %v1865 = vadd.f32 %v1827, %v1852
    %v1866 = vadd.f32 %v1828, %v1854
    %s1867 = sld [smem:[#allocation3 + $0x40]]
    %v1868 = vstv %s1867
    %v1869 = vmul.f32 %v1868, %v947
    %v1870 = vmul.f32 %v1868, %v948
    %v1871 = vmul.f32 %v1868, %v949
    %v1872 = vmul.f32 %v1868, %v953
    %v1873 = vmul.f32 %v1868, %v954
    %v1874 = vmul.f32 %v1868, %v955
    %1881 = vrot.lane.b32.xlu0 %v1869, 127
    %v1882 = vpop.permute.xlu0 %1881
    %1883 = vrot.lane.b32.xlu0 %v1870, 127
    %v1884 = vpop.permute.xlu0 %1883
    %1885 = vrot.lane.b32.xlu0 %v1871, 127
    %v1886 = vpop.permute.xlu0 %1885
    %1887 = vrot.lane.b32.xlu0 %v1872, 127
    %v1888 = vpop.permute.xlu0 %1887
    %1889 = vrot.lane.b32.xlu0 %v1873, 127
    %v1890 = vpop.permute.xlu0 %1889
    %1891 = vrot.lane.b32.xlu0 %v1874, 127
    %v1892 = vpop.permute.xlu0 %1891
    %v1899 = vadd.f32 %v1861, %v1882
    %v1900 = vadd.f32 %v1862, %v1884
    %v1901 = vadd.f32 %v1863, %v1886
    %v1902 = vadd.f32 %v1864, %v1888
    %v1903 = vadd.f32 %v1865, %v1890
    %v1904 = vadd.f32 %v1866, %v1892
    %s1905 = sld [smem:[#allocation3 + $0x10]]
    %v1906 = vstv %s1905
    %v1907 = vmul.f32 %v1906, %v944
    %v1908 = vmul.f32 %v1906, %v945
    %v1909 = vmul.f32 %v1906, %v946
    %v1910 = vmul.f32 %v1906, %v950
    %v1911 = vmul.f32 %v1906, %v951
    %v1912 = vmul.f32 %v1906, %v952
    %1919 = vrot.lane.b32.xlu0 %v1907, 126
    %v1920 = vpop.permute.xlu0 %1919
    %1921 = vrot.lane.b32.xlu0 %v1908, 126
    %v1922 = vpop.permute.xlu0 %1921
    %1923 = vrot.lane.b32.xlu0 %v1909, 126
    %v1924 = vpop.permute.xlu0 %1923
    %1925 = vrot.lane.b32.xlu0 %v1910, 126
    %v1926 = vpop.permute.xlu0 %1925
    %1927 = vrot.lane.b32.xlu0 %v1911, 126
    %v1928 = vpop.permute.xlu0 %1927
    %1929 = vrot.lane.b32.xlu0 %v1912, 126
    %v1930 = vpop.permute.xlu0 %1929
    %v1937 = vadd.f32 %v1899, %v1920
    %v1938 = vadd.f32 %v1900, %v1922
    %v1939 = vadd.f32 %v1901, %v1924
    %v1940 = vadd.f32 %v1902, %v1926
    %v1941 = vadd.f32 %v1903, %v1928
    %v1942 = vadd.f32 %v1904, %v1930
    %s1943 = sld [smem:[#allocation3 + $0x41]]
    %v1944 = vstv %s1943
    %v1945 = vmul.f32 %v1944, %v947
    %v1946 = vmul.f32 %v1944, %v948
    %v1947 = vmul.f32 %v1944, %v949
    %v1948 = vmul.f32 %v1944, %v953
    %v1949 = vmul.f32 %v1944, %v954
    %v1950 = vmul.f32 %v1944, %v955
    %1957 = vrot.lane.b32.xlu0 %v1945, 126
    %v1958 = vpop.permute.xlu0 %1957
    %1959 = vrot.lane.b32.xlu0 %v1946, 126
    %v1960 = vpop.permute.xlu0 %1959
    %1961 = vrot.lane.b32.xlu0 %v1947, 126
    %v1962 = vpop.permute.xlu0 %1961
    %1963 = vrot.lane.b32.xlu0 %v1948, 126
    %v1964 = vpop.permute.xlu0 %1963
    %1965 = vrot.lane.b32.xlu0 %v1949, 126
    %v1966 = vpop.permute.xlu0 %1965
    %1967 = vrot.lane.b32.xlu0 %v1950, 126
    %v1968 = vpop.permute.xlu0 %1967
    %v1975 = vadd.f32 %v1937, %v1958
    %v1976 = vadd.f32 %v1938, %v1960
    %v1977 = vadd.f32 %v1939, %v1962
    %v1978 = vadd.f32 %v1940, %v1964
    %v1979 = vadd.f32 %v1941, %v1966
    %v1980 = vadd.f32 %v1942, %v1968
    %s1981 = sld [smem:[#allocation3 + $0x11]]
    %v1982 = vstv %s1981
    %v1983 = vmul.f32 %v1982, %v944
    %v1984 = vmul.f32 %v1982, %v945
    %v1985 = vmul.f32 %v1982, %v946
    %v1986 = vmul.f32 %v1982, %v950
    %v1987 = vmul.f32 %v1982, %v951
    %v1988 = vmul.f32 %v1982, %v952
    %1995 = vrot.lane.b32.xlu0 %v1983, 125
    %v1996 = vpop.permute.xlu0 %1995
    %1997 = vrot.lane.b32.xlu0 %v1984, 125
    %v1998 = vpop.permute.xlu0 %1997
    %1999 = vrot.lane.b32.xlu0 %v1985, 125
    %v2000 = vpop.permute.xlu0 %1999
    %2001 = vrot.lane.b32.xlu0 %v1986, 125
    %v2002 = vpop.permute.xlu0 %2001
    %2003 = vrot.lane.b32.xlu0 %v1987, 125
    %v2004 = vpop.permute.xlu0 %2003
    %2005 = vrot.lane.b32.xlu0 %v1988, 125
    %v2006 = vpop.permute.xlu0 %2005
    %v2013 = vadd.f32 %v1975, %v1996
    %v2014 = vadd.f32 %v1976, %v1998
    %v2015 = vadd.f32 %v1977, %v2000
    %v2016 = vadd.f32 %v1978, %v2002
    %v2017 = vadd.f32 %v1979, %v2004
    %v2018 = vadd.f32 %v1980, %v2006
    %s2019 = sld [smem:[#allocation3 + $0x42]]
    %v2020 = vstv %s2019
    %v2021 = vmul.f32 %v2020, %v947
    %v2022 = vmul.f32 %v2020, %v948
    %v2023 = vmul.f32 %v2020, %v949
    %v2024 = vmul.f32 %v2020, %v953
    %v2025 = vmul.f32 %v2020, %v954
    %v2026 = vmul.f32 %v2020, %v955
    %2033 = vrot.lane.b32.xlu0 %v2021, 125
    %v2034 = vpop.permute.xlu0 %2033
    %2035 = vrot.lane.b32.xlu0 %v2022, 125
    %v2036 = vpop.permute.xlu0 %2035
    %2037 = vrot.lane.b32.xlu0 %v2023, 125
    %v2038 = vpop.permute.xlu0 %2037
    %2039 = vrot.lane.b32.xlu0 %v2024, 125
    %v2040 = vpop.permute.xlu0 %2039
    %2041 = vrot.lane.b32.xlu0 %v2025, 125
    %v2042 = vpop.permute.xlu0 %2041
    %2043 = vrot.lane.b32.xlu0 %v2026, 125
    %v2044 = vpop.permute.xlu0 %2043
    %v2051 = vadd.f32 %v2013, %v2034
    %v2052 = vadd.f32 %v2014, %v2036
    %v2053 = vadd.f32 %v2015, %v2038
    %v2054 = vadd.f32 %v2016, %v2040
    %v2055 = vadd.f32 %v2017, %v2042
    %v2056 = vadd.f32 %v2018, %v2044
    %s2057 = sld [smem:[#allocation3 + $0x12]]
    %v2058 = vstv %s2057
    %v2059 = vmul.f32 %v2058, %v944
    %v2060 = vmul.f32 %v2058, %v945
    %v2061 = vmul.f32 %v2058, %v946
    %v2062 = vmul.f32 %v2058, %v950
    %v2063 = vmul.f32 %v2058, %v951
    %v2064 = vmul.f32 %v2058, %v952
    %2071 = vrot.lane.b32.xlu0 %v2059, 124
    %v2072 = vpop.permute.xlu0 %2071
    %2073 = vrot.lane.b32.xlu0 %v2060, 124
    %v2074 = vpop.permute.xlu0 %2073
    %2075 = vrot.lane.b32.xlu0 %v2061, 124
    %v2076 = vpop.permute.xlu0 %2075
    %2077 = vrot.lane.b32.xlu0 %v2062, 124
    %v2078 = vpop.permute.xlu0 %2077
    %2079 = vrot.lane.b32.xlu0 %v2063, 124
    %v2080 = vpop.permute.xlu0 %2079
    %2081 = vrot.lane.b32.xlu0 %v2064, 124
    %v2082 = vpop.permute.xlu0 %2081
    %v2089 = vadd.f32 %v2051, %v2072
    %v2090 = vadd.f32 %v2052, %v2074
    %v2091 = vadd.f32 %v2053, %v2076
    %v2092 = vadd.f32 %v2054, %v2078
    %v2093 = vadd.f32 %v2055, %v2080
    %v2094 = vadd.f32 %v2056, %v2082
    %s2095 = sld [smem:[#allocation3 + $0x43]]
    %v2096 = vstv %s2095
    %v2097 = vmul.f32 %v2096, %v947
    %v2098 = vmul.f32 %v2096, %v948
    %v2099 = vmul.f32 %v2096, %v949
    %v2100 = vmul.f32 %v2096, %v953
    %v2101 = vmul.f32 %v2096, %v954
    %v2102 = vmul.f32 %v2096, %v955
    %2109 = vrot.lane.b32.xlu0 %v2097, 124
    %v2110 = vpop.permute.xlu0 %2109
    %2111 = vrot.lane.b32.xlu0 %v2098, 124
    %v2112 = vpop.permute.xlu0 %2111
    %2113 = vrot.lane.b32.xlu0 %v2099, 124
    %v2114 = vpop.permute.xlu0 %2113
    %2115 = vrot.lane.b32.xlu0 %v2100, 124
    %v2116 = vpop.permute.xlu0 %2115
    %2117 = vrot.lane.b32.xlu0 %v2101, 124
    %v2118 = vpop.permute.xlu0 %2117
    %2119 = vrot.lane.b32.xlu0 %v2102, 124
    %v2120 = vpop.permute.xlu0 %2119
    %v2127 = vadd.f32 %v2089, %v2110
    %v2128 = vadd.f32 %v2090, %v2112
    %v2129 = vadd.f32 %v2091, %v2114
    %v2130 = vadd.f32 %v2092, %v2116
    %v2131 = vadd.f32 %v2093, %v2118
    %v2132 = vadd.f32 %v2094, %v2120
    %s2133 = sld [smem:[#allocation3 + $0x13]]
    %v2134 = vstv %s2133
    %v2135 = vmul.f32 %v2134, %v944
    %v2136 = vmul.f32 %v2134, %v945
    %v2137 = vmul.f32 %v2134, %v946
    %v2138 = vmul.f32 %v2134, %v950
    %v2139 = vmul.f32 %v2134, %v951
    %v2140 = vmul.f32 %v2134, %v952
    %2147 = vrot.lane.b32.xlu0 %v2135, 123
    %v2148 = vpop.permute.xlu0 %2147
    %2149 = vrot.lane.b32.xlu0 %v2136, 123
    %v2150 = vpop.permute.xlu0 %2149
    %2151 = vrot.lane.b32.xlu0 %v2137, 123
    %v2152 = vpop.permute.xlu0 %2151
    %2153 = vrot.lane.b32.xlu0 %v2138, 123
    %v2154 = vpop.permute.xlu0 %2153
    %2155 = vrot.lane.b32.xlu0 %v2139, 123
    %v2156 = vpop.permute.xlu0 %2155
    %2157 = vrot.lane.b32.xlu0 %v2140, 123
    %v2158 = vpop.permute.xlu0 %2157
    %v2165 = vadd.f32 %v2127, %v2148
    %v2166 = vadd.f32 %v2128, %v2150
    %v2167 = vadd.f32 %v2129, %v2152
    %v2168 = vadd.f32 %v2130, %v2154
    %v2169 = vadd.f32 %v2131, %v2156
    %v2170 = vadd.f32 %v2132, %v2158
    %s2171 = sld [smem:[#allocation3 + $0x44]]
    %v2172 = vstv %s2171
    %v2173 = vmul.f32 %v2172, %v947
    %v2174 = vmul.f32 %v2172, %v948
    %v2175 = vmul.f32 %v2172, %v949
    %v2176 = vmul.f32 %v2172, %v953
    %v2177 = vmul.f32 %v2172, %v954
    %v2178 = vmul.f32 %v2172, %v955
    %2185 = vrot.lane.b32.xlu0 %v2173, 123
    %v2186 = vpop.permute.xlu0 %2185
    %2187 = vrot.lane.b32.xlu0 %v2174, 123
    %v2188 = vpop.permute.xlu0 %2187
    %2189 = vrot.lane.b32.xlu0 %v2175, 123
    %v2190 = vpop.permute.xlu0 %2189
    %2191 = vrot.lane.b32.xlu0 %v2176, 123
    %v2192 = vpop.permute.xlu0 %2191
    %2193 = vrot.lane.b32.xlu0 %v2177, 123
    %v2194 = vpop.permute.xlu0 %2193
    %2195 = vrot.lane.b32.xlu0 %v2178, 123
    %v2196 = vpop.permute.xlu0 %2195
    %v2203 = vadd.f32 %v2165, %v2186
    %v2204 = vadd.f32 %v2166, %v2188
    %v2205 = vadd.f32 %v2167, %v2190
    %v2206 = vadd.f32 %v2168, %v2192
    %v2207 = vadd.f32 %v2169, %v2194
    %v2208 = vadd.f32 %v2170, %v2196
    %s2209 = sld [smem:[#allocation3 + $0x14]]
    %v2210 = vstv %s2209
    %v2211 = vmul.f32 %v2210, %v944
    %v2212 = vmul.f32 %v2210, %v945
    %v2213 = vmul.f32 %v2210, %v946
    %v2214 = vmul.f32 %v2210, %v950
    %v2215 = vmul.f32 %v2210, %v951
    %v2216 = vmul.f32 %v2210, %v952
    %2223 = vrot.lane.b32.xlu0 %v2211, 122
    %v2224 = vpop.permute.xlu0 %2223
    %2225 = vrot.lane.b32.xlu0 %v2212, 122
    %v2226 = vpop.permute.xlu0 %2225
    %2227 = vrot.lane.b32.xlu0 %v2213, 122
    %v2228 = vpop.permute.xlu0 %2227
    %2229 = vrot.lane.b32.xlu0 %v2214, 122
    %v2230 = vpop.permute.xlu0 %2229
    %2231 = vrot.lane.b32.xlu0 %v2215, 122
    %v2232 = vpop.permute.xlu0 %2231
    %2233 = vrot.lane.b32.xlu0 %v2216, 122
    %v2234 = vpop.permute.xlu0 %2233
    %v2241 = vadd.f32 %v2203, %v2224
    %v2242 = vadd.f32 %v2204, %v2226
    %v2243 = vadd.f32 %v2205, %v2228
    %v2244 = vadd.f32 %v2206, %v2230
    %v2245 = vadd.f32 %v2207, %v2232
    %v2246 = vadd.f32 %v2208, %v2234
    %s2247 = sld [smem:[#allocation3 + $0x45]]
    %v2248 = vstv %s2247
    %v2249 = vmul.f32 %v2248, %v947
    %v2250 = vmul.f32 %v2248, %v948
    %v2251 = vmul.f32 %v2248, %v949
    %v2252 = vmul.f32 %v2248, %v953
    %v2253 = vmul.f32 %v2248, %v954
    %v2254 = vmul.f32 %v2248, %v955
    %2261 = vrot.lane.b32.xlu0 %v2249, 122
    %v2262 = vpop.permute.xlu0 %2261
    %2263 = vrot.lane.b32.xlu0 %v2250, 122
    %v2264 = vpop.permute.xlu0 %2263
    %2265 = vrot.lane.b32.xlu0 %v2251, 122
    %v2266 = vpop.permute.xlu0 %2265
    %2267 = vrot.lane.b32.xlu0 %v2252, 122
    %v2268 = vpop.permute.xlu0 %2267
    %2269 = vrot.lane.b32.xlu0 %v2253, 122
    %v2270 = vpop.permute.xlu0 %2269
    %2271 = vrot.lane.b32.xlu0 %v2254, 122
    %v2272 = vpop.permute.xlu0 %2271
    %v2279 = vadd.f32 %v2241, %v2262
    %v2280 = vadd.f32 %v2242, %v2264
    %v2281 = vadd.f32 %v2243, %v2266
    %v2282 = vadd.f32 %v2244, %v2268
    %v2283 = vadd.f32 %v2245, %v2270
    %v2284 = vadd.f32 %v2246, %v2272
    %vm2291 = vcmask 1045504
    %v2292 = vrot.slane %v2279, 2
    %v2293 = vrot.slane %v2280, 2
    %v2294 = vsel %vm2291, %v2292, %v2293
    %v2295 = vrot.slane %v2281, 2
    %v2296 = vsel %vm2291, %v2293, %v2295
    %v2297 = vrot.slane %v2282, 2
    %v2298 = vrot.slane %v2283, 2
    %v2299 = vsel %vm2291, %v2297, %v2298
    %v2300 = vrot.slane %v2284, 2
    %v2301 = vsel %vm2291, %v2298, %v2300
    %v2306 = vadd.f32 %v1797, %v2294
    %v2307 = vadd.f32 %v1798, %v2296
    %v2308 = vadd.f32 %v1799, %v2299
    %v2309 = vadd.f32 %v1800, %v2301
    %s2310 = sld [smem:[#allocation3 + $0x15]]
    %v2311 = vstv %s2310
    %v2312 = vmul.f32 %v2311, %v944
    %v2313 = vmul.f32 %v2311, %v945
    %v2314 = vmul.f32 %v2311, %v946
    %v2315 = vmul.f32 %v2311, %v950
    %v2316 = vmul.f32 %v2311, %v951
    %v2317 = vmul.f32 %v2311, %v952
    %v2318 = vadd.f32 %v2312, 0.0
    %v2319 = vadd.f32 %v2313, 0.0
    %v2320 = vadd.f32 %v2314, 0.0
    %v2321 = vadd.f32 %v2315, 0.0
    %v2322 = vadd.f32 %v2316, 0.0
    %v2323 = vadd.f32 %v2317, 0.0
    %s2324 = sld [smem:[#allocation3 + $0x46]]
    %v2325 = vstv %s2324
    %v2326 = vmul.f32 %v2325, %v947
    %v2327 = vmul.f32 %v2325, %v948
    %v2328 = vmul.f32 %v2325, %v949
    %v2329 = vmul.f32 %v2325, %v953
    %v2330 = vmul.f32 %v2325, %v954
    %v2331 = vmul.f32 %v2325, %v955
    %v2332 = vadd.f32 %v2318, %v2326
    %v2333 = vadd.f32 %v2319, %v2327
    %v2334 = vadd.f32 %v2320, %v2328
    %v2335 = vadd.f32 %v2321, %v2329
    %v2336 = vadd.f32 %v2322, %v2330
    %v2337 = vadd.f32 %v2323, %v2331
    %s2338 = sld [smem:[#allocation3 + $0x16]]
    %v2339 = vstv %s2338
    %v2340 = vmul.f32 %v2339, %v944
    %v2341 = vmul.f32 %v2339, %v945
    %v2342 = vmul.f32 %v2339, %v946
    %v2343 = vmul.f32 %v2339, %v950
    %v2344 = vmul.f32 %v2339, %v951
    %v2345 = vmul.f32 %v2339, %v952
    %2352 = vrot.lane.b32.xlu0 %v2340, 127
    %v2353 = vpop.permute.xlu0 %2352
    %2354 = vrot.lane.b32.xlu0 %v2341, 127
    %v2355 = vpop.permute.xlu0 %2354
    %2356 = vrot.lane.b32.xlu0 %v2342, 127
    %v2357 = vpop.permute.xlu0 %2356
    %2358 = vrot.lane.b32.xlu0 %v2343, 127
    %v2359 = vpop.permute.xlu0 %2358
    %2360 = vrot.lane.b32.xlu0 %v2344, 127
    %v2361 = vpop.permute.xlu0 %2360
    %2362 = vrot.lane.b32.xlu0 %v2345, 127
    %v2363 = vpop.permute.xlu0 %2362
    %v2370 = vadd.f32 %v2332, %v2353
    %v2371 = vadd.f32 %v2333, %v2355
    %v2372 = vadd.f32 %v2334, %v2357
    %v2373 = vadd.f32 %v2335, %v2359
    %v2374 = vadd.f32 %v2336, %v2361
    %v2375 = vadd.f32 %v2337, %v2363
    %s2376 = sld [smem:[#allocation3 + $0x47]]
    %v2377 = vstv %s2376
    %v2378 = vmul.f32 %v2377, %v947
    %v2379 = vmul.f32 %v2377, %v948
    %v2380 = vmul.f32 %v2377, %v949
    %v2381 = vmul.f32 %v2377, %v953
    %v2382 = vmul.f32 %v2377, %v954
    %v2383 = vmul.f32 %v2377, %v955
    %2390 = vrot.lane.b32.xlu0 %v2378, 127
    %v2391 = vpop.permute.xlu0 %2390
    %2392 = vrot.lane.b32.xlu0 %v2379, 127
    %v2393 = vpop.permute.xlu0 %2392
    %2394 = vrot.lane.b32.xlu0 %v2380, 127
    %v2395 = vpop.permute.xlu0 %2394
    %2396 = vrot.lane.b32.xlu0 %v2381, 127
    %v2397 = vpop.permute.xlu0 %2396
    %2398 = vrot.lane.b32.xlu0 %v2382, 127
    %v2399 = vpop.permute.xlu0 %2398
    %2400 = vrot.lane.b32.xlu0 %v2383, 127
    %v2401 = vpop.permute.xlu0 %2400
    %v2408 = vadd.f32 %v2370, %v2391
    %v2409 = vadd.f32 %v2371, %v2393
    %v2410 = vadd.f32 %v2372, %v2395
    %v2411 = vadd.f32 %v2373, %v2397
    %v2412 = vadd.f32 %v2374, %v2399
    %v2413 = vadd.f32 %v2375, %v2401
    %s2414 = sld [smem:[#allocation3 + $0x17]]
    %v2415 = vstv %s2414
    %v2416 = vmul.f32 %v2415, %v944
    %v2417 = vmul.f32 %v2415, %v945
    %v2418 = vmul.f32 %v2415, %v946
    %v2419 = vmul.f32 %v2415, %v950
    %v2420 = vmul.f32 %v2415, %v951
    %v2421 = vmul.f32 %v2415, %v952
    %2428 = vrot.lane.b32.xlu0 %v2416, 126
    %v2429 = vpop.permute.xlu0 %2428
    %2430 = vrot.lane.b32.xlu0 %v2417, 126
    %v2431 = vpop.permute.xlu0 %2430
    %2432 = vrot.lane.b32.xlu0 %v2418, 126
    %v2433 = vpop.permute.xlu0 %2432
    %2434 = vrot.lane.b32.xlu0 %v2419, 126
    %v2435 = vpop.permute.xlu0 %2434
    %2436 = vrot.lane.b32.xlu0 %v2420, 126
    %v2437 = vpop.permute.xlu0 %2436
    %2438 = vrot.lane.b32.xlu0 %v2421, 126
    %v2439 = vpop.permute.xlu0 %2438
    %v2446 = vadd.f32 %v2408, %v2429
    %v2447 = vadd.f32 %v2409, %v2431
    %v2448 = vadd.f32 %v2410, %v2433
    %v2449 = vadd.f32 %v2411, %v2435
    %v2450 = vadd.f32 %v2412, %v2437
    %v2451 = vadd.f32 %v2413, %v2439
    %s2452 = sld [smem:[#allocation3 + $0x48]]
    %v2453 = vstv %s2452
    %v2454 = vmul.f32 %v2453, %v947
    %v2455 = vmul.f32 %v2453, %v948
    %v2456 = vmul.f32 %v2453, %v949
    %v2457 = vmul.f32 %v2453, %v953
    %v2458 = vmul.f32 %v2453, %v954
    %v2459 = vmul.f32 %v2453, %v955
    %2466 = vrot.lane.b32.xlu0 %v2454, 126
    %v2467 = vpop.permute.xlu0 %2466
    %2468 = vrot.lane.b32.xlu0 %v2455, 126
    %v2469 = vpop.permute.xlu0 %2468
    %2470 = vrot.lane.b32.xlu0 %v2456, 126
    %v2471 = vpop.permute.xlu0 %2470
    %2472 = vrot.lane.b32.xlu0 %v2457, 126
    %v2473 = vpop.permute.xlu0 %2472
    %2474 = vrot.lane.b32.xlu0 %v2458, 126
    %v2475 = vpop.permute.xlu0 %2474
    %2476 = vrot.lane.b32.xlu0 %v2459, 126
    %v2477 = vpop.permute.xlu0 %2476
    %v2484 = vadd.f32 %v2446, %v2467
    %v2485 = vadd.f32 %v2447, %v2469
    %v2486 = vadd.f32 %v2448, %v2471
    %v2487 = vadd.f32 %v2449, %v2473
    %v2488 = vadd.f32 %v2450, %v2475
    %v2489 = vadd.f32 %v2451, %v2477
    %s2490 = sld [smem:[#allocation3 + $0x18]]
    %v2491 = vstv %s2490
    %v2492 = vmul.f32 %v2491, %v944
    %v2493 = vmul.f32 %v2491, %v945
    %v2494 = vmul.f32 %v2491, %v946
    %v2495 = vmul.f32 %v2491, %v950
    %v2496 = vmul.f32 %v2491, %v951
    %v2497 = vmul.f32 %v2491, %v952
    %2504 = vrot.lane.b32.xlu0 %v2492, 125
    %v2505 = vpop.permute.xlu0 %2504
    %2506 = vrot.lane.b32.xlu0 %v2493, 125
    %v2507 = vpop.permute.xlu0 %2506
    %2508 = vrot.lane.b32.xlu0 %v2494, 125
    %v2509 = vpop.permute.xlu0 %2508
    %2510 = vrot.lane.b32.xlu0 %v2495, 125
    %v2511 = vpop.permute.xlu0 %2510
    %2512 = vrot.lane.b32.xlu0 %v2496, 125
    %v2513 = vpop.permute.xlu0 %2512
    %2514 = vrot.lane.b32.xlu0 %v2497, 125
    %v2515 = vpop.permute.xlu0 %2514
    %v2522 = vadd.f32 %v2484, %v2505
    %v2523 = vadd.f32 %v2485, %v2507
    %v2524 = vadd.f32 %v2486, %v2509
    %v2525 = vadd.f32 %v2487, %v2511
    %v2526 = vadd.f32 %v2488, %v2513
    %v2527 = vadd.f32 %v2489, %v2515
    %s2528 = sld [smem:[#allocation3 + $0x49]]
    %v2529 = vstv %s2528
    %v2530 = vmul.f32 %v2529, %v947
    %v2531 = vmul.f32 %v2529, %v948
    %v2532 = vmul.f32 %v2529, %v949
    %v2533 = vmul.f32 %v2529, %v953
    %v2534 = vmul.f32 %v2529, %v954
    %v2535 = vmul.f32 %v2529, %v955
    %2542 = vrot.lane.b32.xlu0 %v2530, 125
    %v2543 = vpop.permute.xlu0 %2542
    %2544 = vrot.lane.b32.xlu0 %v2531, 125
    %v2545 = vpop.permute.xlu0 %2544
    %2546 = vrot.lane.b32.xlu0 %v2532, 125
    %v2547 = vpop.permute.xlu0 %2546
    %2548 = vrot.lane.b32.xlu0 %v2533, 125
    %v2549 = vpop.permute.xlu0 %2548
    %2550 = vrot.lane.b32.xlu0 %v2534, 125
    %v2551 = vpop.permute.xlu0 %2550
    %2552 = vrot.lane.b32.xlu0 %v2535, 125
    %v2553 = vpop.permute.xlu0 %2552
    %v2560 = vadd.f32 %v2522, %v2543
    %v2561 = vadd.f32 %v2523, %v2545
    %v2562 = vadd.f32 %v2524, %v2547
    %v2563 = vadd.f32 %v2525, %v2549
    %v2564 = vadd.f32 %v2526, %v2551
    %v2565 = vadd.f32 %v2527, %v2553
    %s2566 = sld [smem:[#allocation3 + $0x19]]
    %v2567 = vstv %s2566
    %v2568 = vmul.f32 %v2567, %v944
    %v2569 = vmul.f32 %v2567, %v945
    %v2570 = vmul.f32 %v2567, %v946
    %v2571 = vmul.f32 %v2567, %v950
    %v2572 = vmul.f32 %v2567, %v951
    %v2573 = vmul.f32 %v2567, %v952
    %2580 = vrot.lane.b32.xlu0 %v2568, 124
    %v2581 = vpop.permute.xlu0 %2580
    %2582 = vrot.lane.b32.xlu0 %v2569, 124
    %v2583 = vpop.permute.xlu0 %2582
    %2584 = vrot.lane.b32.xlu0 %v2570, 124
    %v2585 = vpop.permute.xlu0 %2584
    %2586 = vrot.lane.b32.xlu0 %v2571, 124
    %v2587 = vpop.permute.xlu0 %2586
    %2588 = vrot.lane.b32.xlu0 %v2572, 124
    %v2589 = vpop.permute.xlu0 %2588
    %2590 = vrot.lane.b32.xlu0 %v2573, 124
    %v2591 = vpop.permute.xlu0 %2590
    %v2598 = vadd.f32 %v2560, %v2581
    %v2599 = vadd.f32 %v2561, %v2583
    %v2600 = vadd.f32 %v2562, %v2585
    %v2601 = vadd.f32 %v2563, %v2587
    %v2602 = vadd.f32 %v2564, %v2589
    %v2603 = vadd.f32 %v2565, %v2591
    %s2604 = sld [smem:[#allocation3 + $0x4a]]
    %v2605 = vstv %s2604
    %v2606 = vmul.f32 %v2605, %v947
    %v2607 = vmul.f32 %v2605, %v948
    %v2608 = vmul.f32 %v2605, %v949
    %v2609 = vmul.f32 %v2605, %v953
    %v2610 = vmul.f32 %v2605, %v954
    %v2611 = vmul.f32 %v2605, %v955
    %2618 = vrot.lane.b32.xlu0 %v2606, 124
    %v2619 = vpop.permute.xlu0 %2618
    %2620 = vrot.lane.b32.xlu0 %v2607, 124
    %v2621 = vpop.permute.xlu0 %2620
    %2622 = vrot.lane.b32.xlu0 %v2608, 124
    %v2623 = vpop.permute.xlu0 %2622
    %2624 = vrot.lane.b32.xlu0 %v2609, 124
    %v2625 = vpop.permute.xlu0 %2624
    %2626 = vrot.lane.b32.xlu0 %v2610, 124
    %v2627 = vpop.permute.xlu0 %2626
    %2628 = vrot.lane.b32.xlu0 %v2611, 124
    %v2629 = vpop.permute.xlu0 %2628
    %v2636 = vadd.f32 %v2598, %v2619
    %v2637 = vadd.f32 %v2599, %v2621
    %v2638 = vadd.f32 %v2600, %v2623
    %v2639 = vadd.f32 %v2601, %v2625
    %v2640 = vadd.f32 %v2602, %v2627
    %v2641 = vadd.f32 %v2603, %v2629
    %s2642 = sld [smem:[#allocation3 + $0x1a]]
    %v2643 = vstv %s2642
    %v2644 = vmul.f32 %v2643, %v944
    %v2645 = vmul.f32 %v2643, %v945
    %v2646 = vmul.f32 %v2643, %v946
    %v2647 = vmul.f32 %v2643, %v950
    %v2648 = vmul.f32 %v2643, %v951
    %v2649 = vmul.f32 %v2643, %v952
    %2656 = vrot.lane.b32.xlu0 %v2644, 123
    %v2657 = vpop.permute.xlu0 %2656
    %2658 = vrot.lane.b32.xlu0 %v2645, 123
    %v2659 = vpop.permute.xlu0 %2658
    %2660 = vrot.lane.b32.xlu0 %v2646, 123
    %v2661 = vpop.permute.xlu0 %2660
    %2662 = vrot.lane.b32.xlu0 %v2647, 123
    %v2663 = vpop.permute.xlu0 %2662
    %2664 = vrot.lane.b32.xlu0 %v2648, 123
    %v2665 = vpop.permute.xlu0 %2664
    %2666 = vrot.lane.b32.xlu0 %v2649, 123
    %v2667 = vpop.permute.xlu0 %2666
    %v2674 = vadd.f32 %v2636, %v2657
    %v2675 = vadd.f32 %v2637, %v2659
    %v2676 = vadd.f32 %v2638, %v2661
    %v2677 = vadd.f32 %v2639, %v2663
    %v2678 = vadd.f32 %v2640, %v2665
    %v2679 = vadd.f32 %v2641, %v2667
    %s2680 = sld [smem:[#allocation3 + $0x4b]]
    %v2681 = vstv %s2680
    %v2682 = vmul.f32 %v2681, %v947
    %v2683 = vmul.f32 %v2681, %v948
    %v2684 = vmul.f32 %v2681, %v949
    %v2685 = vmul.f32 %v2681, %v953
    %v2686 = vmul.f32 %v2681, %v954
    %v2687 = vmul.f32 %v2681, %v955
    %2694 = vrot.lane.b32.xlu0 %v2682, 123
    %v2695 = vpop.permute.xlu0 %2694
    %2696 = vrot.lane.b32.xlu0 %v2683, 123
    %v2697 = vpop.permute.xlu0 %2696
    %2698 = vrot.lane.b32.xlu0 %v2684, 123
    %v2699 = vpop.permute.xlu0 %2698
    %2700 = vrot.lane.b32.xlu0 %v2685, 123
    %v2701 = vpop.permute.xlu0 %2700
    %2702 = vrot.lane.b32.xlu0 %v2686, 123
    %v2703 = vpop.permute.xlu0 %2702
    %2704 = vrot.lane.b32.xlu0 %v2687, 123
    %v2705 = vpop.permute.xlu0 %2704
    %v2712 = vadd.f32 %v2674, %v2695
    %v2713 = vadd.f32 %v2675, %v2697
    %v2714 = vadd.f32 %v2676, %v2699
    %v2715 = vadd.f32 %v2677, %v2701
    %v2716 = vadd.f32 %v2678, %v2703
    %v2717 = vadd.f32 %v2679, %v2705
    %s2718 = sld [smem:[#allocation3 + $0x1b]]
    %v2719 = vstv %s2718
    %v2720 = vmul.f32 %v2719, %v944
    %v2721 = vmul.f32 %v2719, %v945
    %v2722 = vmul.f32 %v2719, %v946
    %v2723 = vmul.f32 %v2719, %v950
    %v2724 = vmul.f32 %v2719, %v951
    %v2725 = vmul.f32 %v2719, %v952
    %2732 = vrot.lane.b32.xlu0 %v2720, 122
    %v2733 = vpop.permute.xlu0 %2732
    %2734 = vrot.lane.b32.xlu0 %v2721, 122
    %v2735 = vpop.permute.xlu0 %2734
    %2736 = vrot.lane.b32.xlu0 %v2722, 122
    %v2737 = vpop.permute.xlu0 %2736
    %2738 = vrot.lane.b32.xlu0 %v2723, 122
    %v2739 = vpop.permute.xlu0 %2738
    %2740 = vrot.lane.b32.xlu0 %v2724, 122
    %v2741 = vpop.permute.xlu0 %2740
    %2742 = vrot.lane.b32.xlu0 %v2725, 122
    %v2743 = vpop.permute.xlu0 %2742
    %v2750 = vadd.f32 %v2712, %v2733
    %v2751 = vadd.f32 %v2713, %v2735
    %v2752 = vadd.f32 %v2714, %v2737
    %v2753 = vadd.f32 %v2715, %v2739
    %v2754 = vadd.f32 %v2716, %v2741
    %v2755 = vadd.f32 %v2717, %v2743
    %s2756 = sld [smem:[#allocation3 + $0x4c]]
    %v2757 = vstv %s2756
    %v2758 = vmul.f32 %v2757, %v947
    %v2759 = vmul.f32 %v2757, %v948
    %v2760 = vmul.f32 %v2757, %v949
    %v2761 = vmul.f32 %v2757, %v953
    %v2762 = vmul.f32 %v2757, %v954
    %v2763 = vmul.f32 %v2757, %v955
    %2770 = vrot.lane.b32.xlu0 %v2758, 122
    %v2771 = vpop.permute.xlu0 %2770
    %2772 = vrot.lane.b32.xlu0 %v2759, 122
    %v2773 = vpop.permute.xlu0 %2772
    %2774 = vrot.lane.b32.xlu0 %v2760, 122
    %v2775 = vpop.permute.xlu0 %2774
    %2776 = vrot.lane.b32.xlu0 %v2761, 122
    %v2777 = vpop.permute.xlu0 %2776
    %2778 = vrot.lane.b32.xlu0 %v2762, 122
    %v2779 = vpop.permute.xlu0 %2778
    %2780 = vrot.lane.b32.xlu0 %v2763, 122
    %v2781 = vpop.permute.xlu0 %2780
    %v2788 = vadd.f32 %v2750, %v2771
    %v2789 = vadd.f32 %v2751, %v2773
    %v2790 = vadd.f32 %v2752, %v2775
    %v2791 = vadd.f32 %v2753, %v2777
    %v2792 = vadd.f32 %v2754, %v2779
    %v2793 = vadd.f32 %v2755, %v2781
    %vm2800 = vcmask 1044480
    %v2801 = vrot.slane %v2788, 3
    %v2802 = vrot.slane %v2789, 3
    %v2803 = vsel %vm2800, %v2801, %v2802
    %v2804 = vrot.slane %v2790, 3
    %v2805 = vsel %vm2800, %v2802, %v2804
    %v2806 = vrot.slane %v2791, 3
    %v2807 = vrot.slane %v2792, 3
    %v2808 = vsel %vm2800, %v2806, %v2807
    %v2809 = vrot.slane %v2793, 3
    %v2810 = vsel %vm2800, %v2807, %v2809
    %v2815 = vadd.f32 %v2306, %v2803
    %v2816 = vadd.f32 %v2307, %v2805
    %v2817 = vadd.f32 %v2308, %v2808
    %v2818 = vadd.f32 %v2309, %v2810
    %s2819 = sld [smem:[#allocation3 + $0x1c]]
    %v2820 = vstv %s2819
    %v2821 = vmul.f32 %v2820, %v944
    %v2822 = vmul.f32 %v2820, %v945
    %v2823 = vmul.f32 %v2820, %v946
    %v2824 = vmul.f32 %v2820, %v950
    %v2825 = vmul.f32 %v2820, %v951
    %v2826 = vmul.f32 %v2820, %v952
    %v2827 = vadd.f32 %v2821, 0.0
    %v2828 = vadd.f32 %v2822, 0.0
    %v2829 = vadd.f32 %v2823, 0.0
    %v2830 = vadd.f32 %v2824, 0.0
    %v2831 = vadd.f32 %v2825, 0.0
    %v2832 = vadd.f32 %v2826, 0.0
    %s2833 = sld [smem:[#allocation3 + $0x4d]]
    %v2834 = vstv %s2833
    %v2835 = vmul.f32 %v2834, %v947
    %v2836 = vmul.f32 %v2834, %v948
    %v2837 = vmul.f32 %v2834, %v949
    %v2838 = vmul.f32 %v2834, %v953
    %v2839 = vmul.f32 %v2834, %v954
    %v2840 = vmul.f32 %v2834, %v955
    %v2841 = vadd.f32 %v2827, %v2835
    %v2842 = vadd.f32 %v2828, %v2836
    %v2843 = vadd.f32 %v2829, %v2837
    %v2844 = vadd.f32 %v2830, %v2838
    %v2845 = vadd.f32 %v2831, %v2839
    %v2846 = vadd.f32 %v2832, %v2840
    %s2847 = sld [smem:[#allocation3 + $0x1d]]
    %v2848 = vstv %s2847
    %v2849 = vmul.f32 %v2848, %v944
    %v2850 = vmul.f32 %v2848, %v945
    %v2851 = vmul.f32 %v2848, %v946
    %v2852 = vmul.f32 %v2848, %v950
    %v2853 = vmul.f32 %v2848, %v951
    %v2854 = vmul.f32 %v2848, %v952
    %2861 = vrot.lane.b32.xlu0 %v2849, 127
    %v2862 = vpop.permute.xlu0 %2861
    %2863 = vrot.lane.b32.xlu0 %v2850, 127
    %v2864 = vpop.permute.xlu0 %2863
    %2865 = vrot.lane.b32.xlu0 %v2851, 127
    %v2866 = vpop.permute.xlu0 %2865
    %2867 = vrot.lane.b32.xlu0 %v2852, 127
    %v2868 = vpop.permute.xlu0 %2867
    %2869 = vrot.lane.b32.xlu0 %v2853, 127
    %v2870 = vpop.permute.xlu0 %2869
    %2871 = vrot.lane.b32.xlu0 %v2854, 127
    %v2872 = vpop.permute.xlu0 %2871
    %v2879 = vadd.f32 %v2841, %v2862
    %v2880 = vadd.f32 %v2842, %v2864
    %v2881 = vadd.f32 %v2843, %v2866
    %v2882 = vadd.f32 %v2844, %v2868
    %v2883 = vadd.f32 %v2845, %v2870
    %v2884 = vadd.f32 %v2846, %v2872
    %s2885 = sld [smem:[#allocation3 + $0x4e]]
    %v2886 = vstv %s2885
    %v2887 = vmul.f32 %v2886, %v947
    %v2888 = vmul.f32 %v2886, %v948
    %v2889 = vmul.f32 %v2886, %v949
    %v2890 = vmul.f32 %v2886, %v953
    %v2891 = vmul.f32 %v2886, %v954
    %v2892 = vmul.f32 %v2886, %v955
    %2899 = vrot.lane.b32.xlu0 %v2887, 127
    %v2900 = vpop.permute.xlu0 %2899
    %2901 = vrot.lane.b32.xlu0 %v2888, 127
    %v2902 = vpop.permute.xlu0 %2901
    %2903 = vrot.lane.b32.xlu0 %v2889, 127
    %v2904 = vpop.permute.xlu0 %2903
    %2905 = vrot.lane.b32.xlu0 %v2890, 127
    %v2906 = vpop.permute.xlu0 %2905
    %2907 = vrot.lane.b32.xlu0 %v2891, 127
    %v2908 = vpop.permute.xlu0 %2907
    %2909 = vrot.lane.b32.xlu0 %v2892, 127
    %v2910 = vpop.permute.xlu0 %2909
    %v2917 = vadd.f32 %v2879, %v2900
    %v2918 = vadd.f32 %v2880, %v2902
    %v2919 = vadd.f32 %v2881, %v2904
    %v2920 = vadd.f32 %v2882, %v2906
    %v2921 = vadd.f32 %v2883, %v2908
    %v2922 = vadd.f32 %v2884, %v2910
    %s2923 = sld [smem:[#allocation3 + $0x1e]]
    %v2924 = vstv %s2923
    %v2925 = vmul.f32 %v2924, %v944
    %v2926 = vmul.f32 %v2924, %v945
    %v2927 = vmul.f32 %v2924, %v946
    %v2928 = vmul.f32 %v2924, %v950
    %v2929 = vmul.f32 %v2924, %v951
    %v2930 = vmul.f32 %v2924, %v952
    %2937 = vrot.lane.b32.xlu0 %v2925, 126
    %v2938 = vpop.permute.xlu0 %2937
    %2939 = vrot.lane.b32.xlu0 %v2926, 126
    %v2940 = vpop.permute.xlu0 %2939
    %2941 = vrot.lane.b32.xlu0 %v2927, 126
    %v2942 = vpop.permute.xlu0 %2941
    %2943 = vrot.lane.b32.xlu0 %v2928, 126
    %v2944 = vpop.permute.xlu0 %2943
    %2945 = vrot.lane.b32.xlu0 %v2929, 126
    %v2946 = vpop.permute.xlu0 %2945
    %2947 = vrot.lane.b32.xlu0 %v2930, 126
    %v2948 = vpop.permute.xlu0 %2947
    %v2955 = vadd.f32 %v2917, %v2938
    %v2956 = vadd.f32 %v2918, %v2940
    %v2957 = vadd.f32 %v2919, %v2942
    %v2958 = vadd.f32 %v2920, %v2944
    %v2959 = vadd.f32 %v2921, %v2946
    %v2960 = vadd.f32 %v2922, %v2948
    %s2961 = sld [smem:[#allocation3 + $0x4f]]
    %v2962 = vstv %s2961
    %v2963 = vmul.f32 %v2962, %v947
    %v2964 = vmul.f32 %v2962, %v948
    %v2965 = vmul.f32 %v2962, %v949
    %v2966 = vmul.f32 %v2962, %v953
    %v2967 = vmul.f32 %v2962, %v954
    %v2968 = vmul.f32 %v2962, %v955
    %2975 = vrot.lane.b32.xlu0 %v2963, 126
    %v2976 = vpop.permute.xlu0 %2975
    %2977 = vrot.lane.b32.xlu0 %v2964, 126
    %v2978 = vpop.permute.xlu0 %2977
    %2979 = vrot.lane.b32.xlu0 %v2965, 126
    %v2980 = vpop.permute.xlu0 %2979
    %2981 = vrot.lane.b32.xlu0 %v2966, 126
    %v2982 = vpop.permute.xlu0 %2981
    %2983 = vrot.lane.b32.xlu0 %v2967, 126
    %v2984 = vpop.permute.xlu0 %2983
    %2985 = vrot.lane.b32.xlu0 %v2968, 126
    %v2986 = vpop.permute.xlu0 %2985
    %v2993 = vadd.f32 %v2955, %v2976
    %v2994 = vadd.f32 %v2956, %v2978
    %v2995 = vadd.f32 %v2957, %v2980
    %v2996 = vadd.f32 %v2958, %v2982
    %v2997 = vadd.f32 %v2959, %v2984
    %v2998 = vadd.f32 %v2960, %v2986
    %s2999 = sld [smem:[#allocation3 + $0x1f]]
    %v3000 = vstv %s2999
    %v3001 = vmul.f32 %v3000, %v944
    %v3002 = vmul.f32 %v3000, %v945
    %v3003 = vmul.f32 %v3000, %v946
    %v3004 = vmul.f32 %v3000, %v950
    %v3005 = vmul.f32 %v3000, %v951
    %v3006 = vmul.f32 %v3000, %v952
    %3013 = vrot.lane.b32.xlu0 %v3001, 125
    %v3014 = vpop.permute.xlu0 %3013
    %3015 = vrot.lane.b32.xlu0 %v3002, 125
    %v3016 = vpop.permute.xlu0 %3015
    %3017 = vrot.lane.b32.xlu0 %v3003, 125
    %v3018 = vpop.permute.xlu0 %3017
    %3019 = vrot.lane.b32.xlu0 %v3004, 125
    %v3020 = vpop.permute.xlu0 %3019
    %3021 = vrot.lane.b32.xlu0 %v3005, 125
    %v3022 = vpop.permute.xlu0 %3021
    %3023 = vrot.lane.b32.xlu0 %v3006, 125
    %v3024 = vpop.permute.xlu0 %3023
    %v3031 = vadd.f32 %v2993, %v3014
    %v3032 = vadd.f32 %v2994, %v3016
    %v3033 = vadd.f32 %v2995, %v3018
    %v3034 = vadd.f32 %v2996, %v3020
    %v3035 = vadd.f32 %v2997, %v3022
    %v3036 = vadd.f32 %v2998, %v3024
    %s3037 = sld [smem:[#allocation3 + $0x50]]
    %v3038 = vstv %s3037
    %v3039 = vmul.f32 %v3038, %v947
    %v3040 = vmul.f32 %v3038, %v948
    %v3041 = vmul.f32 %v3038, %v949
    %v3042 = vmul.f32 %v3038, %v953
    %v3043 = vmul.f32 %v3038, %v954
    %v3044 = vmul.f32 %v3038, %v955
    %3051 = vrot.lane.b32.xlu0 %v3039, 125
    %v3052 = vpop.permute.xlu0 %3051
    %3053 = vrot.lane.b32.xlu0 %v3040, 125
    %v3054 = vpop.permute.xlu0 %3053
    %3055 = vrot.lane.b32.xlu0 %v3041, 125
    %v3056 = vpop.permute.xlu0 %3055
    %3057 = vrot.lane.b32.xlu0 %v3042, 125
    %v3058 = vpop.permute.xlu0 %3057
    %3059 = vrot.lane.b32.xlu0 %v3043, 125
    %v3060 = vpop.permute.xlu0 %3059
    %3061 = vrot.lane.b32.xlu0 %v3044, 125
    %v3062 = vpop.permute.xlu0 %3061
    %v3069 = vadd.f32 %v3031, %v3052
    %v3070 = vadd.f32 %v3032, %v3054
    %v3071 = vadd.f32 %v3033, %v3056
    %v3072 = vadd.f32 %v3034, %v3058
    %v3073 = vadd.f32 %v3035, %v3060
    %v3074 = vadd.f32 %v3036, %v3062
    %s3075 = sld [smem:[#allocation3 + $0x20]]
    %v3076 = vstv %s3075
    %v3077 = vmul.f32 %v3076, %v944
    %v3078 = vmul.f32 %v3076, %v945
    %v3079 = vmul.f32 %v3076, %v946
    %v3080 = vmul.f32 %v3076, %v950
    %v3081 = vmul.f32 %v3076, %v951
    %v3082 = vmul.f32 %v3076, %v952
    %3089 = vrot.lane.b32.xlu0 %v3077, 124
    %v3090 = vpop.permute.xlu0 %3089
    %3091 = vrot.lane.b32.xlu0 %v3078, 124
    %v3092 = vpop.permute.xlu0 %3091
    %3093 = vrot.lane.b32.xlu0 %v3079, 124
    %v3094 = vpop.permute.xlu0 %3093
    %3095 = vrot.lane.b32.xlu0 %v3080, 124
    %v3096 = vpop.permute.xlu0 %3095
    %3097 = vrot.lane.b32.xlu0 %v3081, 124
    %v3098 = vpop.permute.xlu0 %3097
    %3099 = vrot.lane.b32.xlu0 %v3082, 124
    %v3100 = vpop.permute.xlu0 %3099
    %v3107 = vadd.f32 %v3069, %v3090
    %v3108 = vadd.f32 %v3070, %v3092
    %v3109 = vadd.f32 %v3071, %v3094
    %v3110 = vadd.f32 %v3072, %v3096
    %v3111 = vadd.f32 %v3073, %v3098
    %v3112 = vadd.f32 %v3074, %v3100
    %s3113 = sld [smem:[#allocation3 + $0x51]]
    %v3114 = vstv %s3113
    %v3115 = vmul.f32 %v3114, %v947
    %v3116 = vmul.f32 %v3114, %v948
    %v3117 = vmul.f32 %v3114, %v949
    %v3118 = vmul.f32 %v3114, %v953
    %v3119 = vmul.f32 %v3114, %v954
    %v3120 = vmul.f32 %v3114, %v955
    %3127 = vrot.lane.b32.xlu0 %v3115, 124
    %v3128 = vpop.permute.xlu0 %3127
    %3129 = vrot.lane.b32.xlu0 %v3116, 124
    %v3130 = vpop.permute.xlu0 %3129
    %3131 = vrot.lane.b32.xlu0 %v3117, 124
    %v3132 = vpop.permute.xlu0 %3131
    %3133 = vrot.lane.b32.xlu0 %v3118, 124
    %v3134 = vpop.permute.xlu0 %3133
    %3135 = vrot.lane.b32.xlu0 %v3119, 124
    %v3136 = vpop.permute.xlu0 %3135
    %3137 = vrot.lane.b32.xlu0 %v3120, 124
    %v3138 = vpop.permute.xlu0 %3137
    %v3145 = vadd.f32 %v3107, %v3128
    %v3146 = vadd.f32 %v3108, %v3130
    %v3147 = vadd.f32 %v3109, %v3132
    %v3148 = vadd.f32 %v3110, %v3134
    %v3149 = vadd.f32 %v3111, %v3136
    %v3150 = vadd.f32 %v3112, %v3138
    %s3151 = sld [smem:[#allocation3 + $0x21]]
    %v3152 = vstv %s3151
    %v3153 = vmul.f32 %v3152, %v944
    %v3154 = vmul.f32 %v3152, %v945
    %v3155 = vmul.f32 %v3152, %v946
    %v3156 = vmul.f32 %v3152, %v950
    %v3157 = vmul.f32 %v3152, %v951
    %v3158 = vmul.f32 %v3152, %v952
    %3165 = vrot.lane.b32.xlu0 %v3153, 123
    %v3166 = vpop.permute.xlu0 %3165
    %3167 = vrot.lane.b32.xlu0 %v3154, 123
    %v3168 = vpop.permute.xlu0 %3167
    %3169 = vrot.lane.b32.xlu0 %v3155, 123
    %v3170 = vpop.permute.xlu0 %3169
    %3171 = vrot.lane.b32.xlu0 %v3156, 123
    %v3172 = vpop.permute.xlu0 %3171
    %3173 = vrot.lane.b32.xlu0 %v3157, 123
    %v3174 = vpop.permute.xlu0 %3173
    %3175 = vrot.lane.b32.xlu0 %v3158, 123
    %v3176 = vpop.permute.xlu0 %3175
    %v3183 = vadd.f32 %v3145, %v3166
    %v3184 = vadd.f32 %v3146, %v3168
    %v3185 = vadd.f32 %v3147, %v3170
    %v3186 = vadd.f32 %v3148, %v3172
    %v3187 = vadd.f32 %v3149, %v3174
    %v3188 = vadd.f32 %v3150, %v3176
    %s3189 = sld [smem:[#allocation3 + $0x52]]
    %v3190 = vstv %s3189
    %v3191 = vmul.f32 %v3190, %v947
    %v3192 = vmul.f32 %v3190, %v948
    %v3193 = vmul.f32 %v3190, %v949
    %v3194 = vmul.f32 %v3190, %v953
    %v3195 = vmul.f32 %v3190, %v954
    %v3196 = vmul.f32 %v3190, %v955
    %3203 = vrot.lane.b32.xlu0 %v3191, 123
    %v3204 = vpop.permute.xlu0 %3203
    %3205 = vrot.lane.b32.xlu0 %v3192, 123
    %v3206 = vpop.permute.xlu0 %3205
    %3207 = vrot.lane.b32.xlu0 %v3193, 123
    %v3208 = vpop.permute.xlu0 %3207
    %3209 = vrot.lane.b32.xlu0 %v3194, 123
    %v3210 = vpop.permute.xlu0 %3209
    %3211 = vrot.lane.b32.xlu0 %v3195, 123
    %v3212 = vpop.permute.xlu0 %3211
    %3213 = vrot.lane.b32.xlu0 %v3196, 123
    %v3214 = vpop.permute.xlu0 %3213
    %v3221 = vadd.f32 %v3183, %v3204
    %v3222 = vadd.f32 %v3184, %v3206
    %v3223 = vadd.f32 %v3185, %v3208
    %v3224 = vadd.f32 %v3186, %v3210
    %v3225 = vadd.f32 %v3187, %v3212
    %v3226 = vadd.f32 %v3188, %v3214
    %s3227 = sld [smem:[#allocation3 + $0x22]]
    %v3228 = vstv %s3227
    %v3229 = vmul.f32 %v3228, %v944
    %v3230 = vmul.f32 %v3228, %v945
    %v3231 = vmul.f32 %v3228, %v946
    %v3232 = vmul.f32 %v3228, %v950
    %v3233 = vmul.f32 %v3228, %v951
    %v3234 = vmul.f32 %v3228, %v952
    %3241 = vrot.lane.b32.xlu0 %v3229, 122
    %v3242 = vpop.permute.xlu0 %3241
    %3243 = vrot.lane.b32.xlu0 %v3230, 122
    %v3244 = vpop.permute.xlu0 %3243
    %3245 = vrot.lane.b32.xlu0 %v3231, 122
    %v3246 = vpop.permute.xlu0 %3245
    %3247 = vrot.lane.b32.xlu0 %v3232, 122
    %v3248 = vpop.permute.xlu0 %3247
    %3249 = vrot.lane.b32.xlu0 %v3233, 122
    %v3250 = vpop.permute.xlu0 %3249
    %3251 = vrot.lane.b32.xlu0 %v3234, 122
    %v3252 = vpop.permute.xlu0 %3251
    %v3259 = vadd.f32 %v3221, %v3242
    %v3260 = vadd.f32 %v3222, %v3244
    %v3261 = vadd.f32 %v3223, %v3246
    %v3262 = vadd.f32 %v3224, %v3248
    %v3263 = vadd.f32 %v3225, %v3250
    %v3264 = vadd.f32 %v3226, %v3252
    %s3265 = sld [smem:[#allocation3 + $0x53]]
    %v3266 = vstv %s3265
    %v3267 = vmul.f32 %v3266, %v947
    %v3268 = vmul.f32 %v3266, %v948
    %v3269 = vmul.f32 %v3266, %v949
    %v3270 = vmul.f32 %v3266, %v953
    %v3271 = vmul.f32 %v3266, %v954
    %v3272 = vmul.f32 %v3266, %v955
    %3279 = vrot.lane.b32.xlu0 %v3267, 122
    %v3280 = vpop.permute.xlu0 %3279
    %3281 = vrot.lane.b32.xlu0 %v3268, 122
    %v3282 = vpop.permute.xlu0 %3281
    %3283 = vrot.lane.b32.xlu0 %v3269, 122
    %v3284 = vpop.permute.xlu0 %3283
    %3285 = vrot.lane.b32.xlu0 %v3270, 122
    %v3286 = vpop.permute.xlu0 %3285
    %3287 = vrot.lane.b32.xlu0 %v3271, 122
    %v3288 = vpop.permute.xlu0 %3287
    %3289 = vrot.lane.b32.xlu0 %v3272, 122
    %v3290 = vpop.permute.xlu0 %3289
    %v3297 = vadd.f32 %v3259, %v3280
    %v3298 = vadd.f32 %v3260, %v3282
    %v3299 = vadd.f32 %v3261, %v3284
    %v3300 = vadd.f32 %v3262, %v3286
    %v3301 = vadd.f32 %v3263, %v3288
    %v3302 = vadd.f32 %v3264, %v3290
    %vm3309 = vcmask 1043456
    %v3310 = vrot.slane %v3297, 4
    %v3311 = vrot.slane %v3298, 4
    %v3312 = vsel %vm3309, %v3310, %v3311
    %v3313 = vrot.slane %v3299, 4
    %v3314 = vsel %vm3309, %v3311, %v3313
    %v3315 = vrot.slane %v3300, 4
    %v3316 = vrot.slane %v3301, 4
    %v3317 = vsel %vm3309, %v3315, %v3316
    %v3318 = vrot.slane %v3302, 4
    %v3319 = vsel %vm3309, %v3316, %v3318
    %v3324 = vadd.f32 %v2815, %v3312
    %v3325 = vadd.f32 %v2816, %v3314
    %v3326 = vadd.f32 %v2817, %v3317
    %v3327 = vadd.f32 %v2818, %v3319
    %s3328 = sld [smem:[#allocation3 + $0x23]]
    %v3329 = vstv %s3328
    %v3330 = vmul.f32 %v3329, %v944
    %v3331 = vmul.f32 %v3329, %v945
    %v3332 = vmul.f32 %v3329, %v946
    %v3333 = vmul.f32 %v3329, %v950
    %v3334 = vmul.f32 %v3329, %v951
    %v3335 = vmul.f32 %v3329, %v952
    %v3336 = vadd.f32 %v3330, 0.0
    %v3337 = vadd.f32 %v3331, 0.0
    %v3338 = vadd.f32 %v3332, 0.0
    %v3339 = vadd.f32 %v3333, 0.0
    %v3340 = vadd.f32 %v3334, 0.0
    %v3341 = vadd.f32 %v3335, 0.0
    %s3342 = sld [smem:[#allocation3 + $0x54]]
    %v3343 = vstv %s3342
    %v3344 = vmul.f32 %v3343, %v947
    %v3345 = vmul.f32 %v3343, %v948
    %v3346 = vmul.f32 %v3343, %v949
    %v3347 = vmul.f32 %v3343, %v953
    %v3348 = vmul.f32 %v3343, %v954
    %v3349 = vmul.f32 %v3343, %v955
    %v3350 = vadd.f32 %v3336, %v3344
    %v3351 = vadd.f32 %v3337, %v3345
    %v3352 = vadd.f32 %v3338, %v3346
    %v3353 = vadd.f32 %v3339, %v3347
    %v3354 = vadd.f32 %v3340, %v3348
    %v3355 = vadd.f32 %v3341, %v3349
    %s3356 = sld [smem:[#allocation3 + $0x24]]
    %v3357 = vstv %s3356
    %v3358 = vmul.f32 %v3357, %v944
    %v3359 = vmul.f32 %v3357, %v945
    %v3360 = vmul.f32 %v3357, %v946
    %v3361 = vmul.f32 %v3357, %v950
    %v3362 = vmul.f32 %v3357, %v951
    %v3363 = vmul.f32 %v3357, %v952
    %3370 = vrot.lane.b32.xlu0 %v3358, 127
    %v3371 = vpop.permute.xlu0 %3370
    %3372 = vrot.lane.b32.xlu0 %v3359, 127
    %v3373 = vpop.permute.xlu0 %3372
    %3374 = vrot.lane.b32.xlu0 %v3360, 127
    %v3375 = vpop.permute.xlu0 %3374
    %3376 = vrot.lane.b32.xlu0 %v3361, 127
    %v3377 = vpop.permute.xlu0 %3376
    %3378 = vrot.lane.b32.xlu0 %v3362, 127
    %v3379 = vpop.permute.xlu0 %3378
    %3380 = vrot.lane.b32.xlu0 %v3363, 127
    %v3381 = vpop.permute.xlu0 %3380
    %v3388 = vadd.f32 %v3350, %v3371
    %v3389 = vadd.f32 %v3351, %v3373
    %v3390 = vadd.f32 %v3352, %v3375
    %v3391 = vadd.f32 %v3353, %v3377
    %v3392 = vadd.f32 %v3354, %v3379
    %v3393 = vadd.f32 %v3355, %v3381
    %s3394 = sld [smem:[#allocation3 + $0x55]]
    %v3395 = vstv %s3394
    %v3396 = vmul.f32 %v3395, %v947
    %v3397 = vmul.f32 %v3395, %v948
    %v3398 = vmul.f32 %v3395, %v949
    %v3399 = vmul.f32 %v3395, %v953
    %v3400 = vmul.f32 %v3395, %v954
    %v3401 = vmul.f32 %v3395, %v955
    %3408 = vrot.lane.b32.xlu0 %v3396, 127
    %v3409 = vpop.permute.xlu0 %3408
    %3410 = vrot.lane.b32.xlu0 %v3397, 127
    %v3411 = vpop.permute.xlu0 %3410
    %3412 = vrot.lane.b32.xlu0 %v3398, 127
    %v3413 = vpop.permute.xlu0 %3412
    %3414 = vrot.lane.b32.xlu0 %v3399, 127
    %v3415 = vpop.permute.xlu0 %3414
    %3416 = vrot.lane.b32.xlu0 %v3400, 127
    %v3417 = vpop.permute.xlu0 %3416
    %3418 = vrot.lane.b32.xlu0 %v3401, 127
    %v3419 = vpop.permute.xlu0 %3418
    %v3426 = vadd.f32 %v3388, %v3409
    %v3427 = vadd.f32 %v3389, %v3411
    %v3428 = vadd.f32 %v3390, %v3413
    %v3429 = vadd.f32 %v3391, %v3415
    %v3430 = vadd.f32 %v3392, %v3417
    %v3431 = vadd.f32 %v3393, %v3419
    %s3432 = sld [smem:[#allocation3 + $0x25]]
    %v3433 = vstv %s3432
    %v3434 = vmul.f32 %v3433, %v944
    %v3435 = vmul.f32 %v3433, %v945
    %v3436 = vmul.f32 %v3433, %v946
    %v3437 = vmul.f32 %v3433, %v950
    %v3438 = vmul.f32 %v3433, %v951
    %v3439 = vmul.f32 %v3433, %v952
    %3446 = vrot.lane.b32.xlu0 %v3434, 126
    %v3447 = vpop.permute.xlu0 %3446
    %3448 = vrot.lane.b32.xlu0 %v3435, 126
    %v3449 = vpop.permute.xlu0 %3448
    %3450 = vrot.lane.b32.xlu0 %v3436, 126
    %v3451 = vpop.permute.xlu0 %3450
    %3452 = vrot.lane.b32.xlu0 %v3437, 126
    %v3453 = vpop.permute.xlu0 %3452
    %3454 = vrot.lane.b32.xlu0 %v3438, 126
    %v3455 = vpop.permute.xlu0 %3454
    %3456 = vrot.lane.b32.xlu0 %v3439, 126
    %v3457 = vpop.permute.xlu0 %3456
    %v3464 = vadd.f32 %v3426, %v3447
    %v3465 = vadd.f32 %v3427, %v3449
    %v3466 = vadd.f32 %v3428, %v3451
    %v3467 = vadd.f32 %v3429, %v3453
    %v3468 = vadd.f32 %v3430, %v3455
    %v3469 = vadd.f32 %v3431, %v3457
    %s3470 = sld [smem:[#allocation3 + $0x56]]
    %v3471 = vstv %s3470
    %v3472 = vmul.f32 %v3471, %v947
    %v3473 = vmul.f32 %v3471, %v948
    %v3474 = vmul.f32 %v3471, %v949
    %v3475 = vmul.f32 %v3471, %v953
    %v3476 = vmul.f32 %v3471, %v954
    %v3477 = vmul.f32 %v3471, %v955
    %3484 = vrot.lane.b32.xlu0 %v3472, 126
    %v3485 = vpop.permute.xlu0 %3484
    %3486 = vrot.lane.b32.xlu0 %v3473, 126
    %v3487 = vpop.permute.xlu0 %3486
    %3488 = vrot.lane.b32.xlu0 %v3474, 126
    %v3489 = vpop.permute.xlu0 %3488
    %3490 = vrot.lane.b32.xlu0 %v3475, 126
    %v3491 = vpop.permute.xlu0 %3490
    %3492 = vrot.lane.b32.xlu0 %v3476, 126
    %v3493 = vpop.permute.xlu0 %3492
    %3494 = vrot.lane.b32.xlu0 %v3477, 126
    %v3495 = vpop.permute.xlu0 %3494
    %v3502 = vadd.f32 %v3464, %v3485
    %v3503 = vadd.f32 %v3465, %v3487
    %v3504 = vadd.f32 %v3466, %v3489
    %v3505 = vadd.f32 %v3467, %v3491
    %v3506 = vadd.f32 %v3468, %v3493
    %v3507 = vadd.f32 %v3469, %v3495
    %s3508 = sld [smem:[#allocation3 + $0x26]]
    %v3509 = vstv %s3508
    %v3510 = vmul.f32 %v3509, %v944
    %v3511 = vmul.f32 %v3509, %v945
    %v3512 = vmul.f32 %v3509, %v946
    %v3513 = vmul.f32 %v3509, %v950
    %v3514 = vmul.f32 %v3509, %v951
    %v3515 = vmul.f32 %v3509, %v952
    %3522 = vrot.lane.b32.xlu0 %v3510, 125
    %v3523 = vpop.permute.xlu0 %3522
    %3524 = vrot.lane.b32.xlu0 %v3511, 125
    %v3525 = vpop.permute.xlu0 %3524
    %3526 = vrot.lane.b32.xlu0 %v3512, 125
    %v3527 = vpop.permute.xlu0 %3526
    %3528 = vrot.lane.b32.xlu0 %v3513, 125
    %v3529 = vpop.permute.xlu0 %3528
    %3530 = vrot.lane.b32.xlu0 %v3514, 125
    %v3531 = vpop.permute.xlu0 %3530
    %3532 = vrot.lane.b32.xlu0 %v3515, 125
    %v3533 = vpop.permute.xlu0 %3532
    %v3540 = vadd.f32 %v3502, %v3523
    %v3541 = vadd.f32 %v3503, %v3525
    %v3542 = vadd.f32 %v3504, %v3527
    %v3543 = vadd.f32 %v3505, %v3529
    %v3544 = vadd.f32 %v3506, %v3531
    %v3545 = vadd.f32 %v3507, %v3533
    %s3546 = sld [smem:[#allocation3 + $0x57]]
    %v3547 = vstv %s3546
    %v3548 = vmul.f32 %v3547, %v947
    %v3549 = vmul.f32 %v3547, %v948
    %v3550 = vmul.f32 %v3547, %v949
    %v3551 = vmul.f32 %v3547, %v953
    %v3552 = vmul.f32 %v3547, %v954
    %v3553 = vmul.f32 %v3547, %v955
    %3560 = vrot.lane.b32.xlu0 %v3548, 125
    %v3561 = vpop.permute.xlu0 %3560
    %3562 = vrot.lane.b32.xlu0 %v3549, 125
    %v3563 = vpop.permute.xlu0 %3562
    %3564 = vrot.lane.b32.xlu0 %v3550, 125
    %v3565 = vpop.permute.xlu0 %3564
    %3566 = vrot.lane.b32.xlu0 %v3551, 125
    %v3567 = vpop.permute.xlu0 %3566
    %3568 = vrot.lane.b32.xlu0 %v3552, 125
    %v3569 = vpop.permute.xlu0 %3568
    %3570 = vrot.lane.b32.xlu0 %v3553, 125
    %v3571 = vpop.permute.xlu0 %3570
    %v3578 = vadd.f32 %v3540, %v3561
    %v3579 = vadd.f32 %v3541, %v3563
    %v3580 = vadd.f32 %v3542, %v3565
    %v3581 = vadd.f32 %v3543, %v3567
    %v3582 = vadd.f32 %v3544, %v3569
    %v3583 = vadd.f32 %v3545, %v3571
    %s3584 = sld [smem:[#allocation3 + $0x27]]
    %v3585 = vstv %s3584
    %v3586 = vmul.f32 %v3585, %v944
    %v3587 = vmul.f32 %v3585, %v945
    %v3588 = vmul.f32 %v3585, %v946
    %v3589 = vmul.f32 %v3585, %v950
    %v3590 = vmul.f32 %v3585, %v951
    %v3591 = vmul.f32 %v3585, %v952
    %3598 = vrot.lane.b32.xlu0 %v3586, 124
    %v3599 = vpop.permute.xlu0 %3598
    %3600 = vrot.lane.b32.xlu0 %v3587, 124
    %v3601 = vpop.permute.xlu0 %3600
    %3602 = vrot.lane.b32.xlu0 %v3588, 124
    %v3603 = vpop.permute.xlu0 %3602
    %3604 = vrot.lane.b32.xlu0 %v3589, 124
    %v3605 = vpop.permute.xlu0 %3604
    %3606 = vrot.lane.b32.xlu0 %v3590, 124
    %v3607 = vpop.permute.xlu0 %3606
    %3608 = vrot.lane.b32.xlu0 %v3591, 124
    %v3609 = vpop.permute.xlu0 %3608
    %v3616 = vadd.f32 %v3578, %v3599
    %v3617 = vadd.f32 %v3579, %v3601
    %v3618 = vadd.f32 %v3580, %v3603
    %v3619 = vadd.f32 %v3581, %v3605
    %v3620 = vadd.f32 %v3582, %v3607
    %v3621 = vadd.f32 %v3583, %v3609
    %s3622 = sld [smem:[#allocation3 + $0x58]]
    %v3623 = vstv %s3622
    %v3624 = vmul.f32 %v3623, %v947
    %v3625 = vmul.f32 %v3623, %v948
    %v3626 = vmul.f32 %v3623, %v949
    %v3627 = vmul.f32 %v3623, %v953
    %v3628 = vmul.f32 %v3623, %v954
    %v3629 = vmul.f32 %v3623, %v955
    %3636 = vrot.lane.b32.xlu0 %v3624, 124
    %v3637 = vpop.permute.xlu0 %3636
    %3638 = vrot.lane.b32.xlu0 %v3625, 124
    %v3639 = vpop.permute.xlu0 %3638
    %3640 = vrot.lane.b32.xlu0 %v3626, 124
    %v3641 = vpop.permute.xlu0 %3640
    %3642 = vrot.lane.b32.xlu0 %v3627, 124
    %v3643 = vpop.permute.xlu0 %3642
    %3644 = vrot.lane.b32.xlu0 %v3628, 124
    %v3645 = vpop.permute.xlu0 %3644
    %3646 = vrot.lane.b32.xlu0 %v3629, 124
    %v3647 = vpop.permute.xlu0 %3646
    %v3654 = vadd.f32 %v3616, %v3637
    %v3655 = vadd.f32 %v3617, %v3639
    %v3656 = vadd.f32 %v3618, %v3641
    %v3657 = vadd.f32 %v3619, %v3643
    %v3658 = vadd.f32 %v3620, %v3645
    %v3659 = vadd.f32 %v3621, %v3647
    %s3660 = sld [smem:[#allocation3 + $0x28]]
    %v3661 = vstv %s3660
    %v3662 = vmul.f32 %v3661, %v944
    %v3663 = vmul.f32 %v3661, %v945
    %v3664 = vmul.f32 %v3661, %v946
    %v3665 = vmul.f32 %v3661, %v950
    %v3666 = vmul.f32 %v3661, %v951
    %v3667 = vmul.f32 %v3661, %v952
    %3674 = vrot.lane.b32.xlu0 %v3662, 123
    %v3675 = vpop.permute.xlu0 %3674
    %3676 = vrot.lane.b32.xlu0 %v3663, 123
    %v3677 = vpop.permute.xlu0 %3676
    %3678 = vrot.lane.b32.xlu0 %v3664, 123
    %v3679 = vpop.permute.xlu0 %3678
    %3680 = vrot.lane.b32.xlu0 %v3665, 123
    %v3681 = vpop.permute.xlu0 %3680
    %3682 = vrot.lane.b32.xlu0 %v3666, 123
    %v3683 = vpop.permute.xlu0 %3682
    %3684 = vrot.lane.b32.xlu0 %v3667, 123
    %v3685 = vpop.permute.xlu0 %3684
    %v3692 = vadd.f32 %v3654, %v3675
    %v3693 = vadd.f32 %v3655, %v3677
    %v3694 = vadd.f32 %v3656, %v3679
    %v3695 = vadd.f32 %v3657, %v3681
    %v3696 = vadd.f32 %v3658, %v3683
    %v3697 = vadd.f32 %v3659, %v3685
    %s3698 = sld [smem:[#allocation3 + $0x59]]
    %v3699 = vstv %s3698
    %v3700 = vmul.f32 %v3699, %v947
    %v3701 = vmul.f32 %v3699, %v948
    %v3702 = vmul.f32 %v3699, %v949
    %v3703 = vmul.f32 %v3699, %v953
    %v3704 = vmul.f32 %v3699, %v954
    %v3705 = vmul.f32 %v3699, %v955
    %3712 = vrot.lane.b32.xlu0 %v3700, 123
    %v3713 = vpop.permute.xlu0 %3712
    %3714 = vrot.lane.b32.xlu0 %v3701, 123
    %v3715 = vpop.permute.xlu0 %3714
    %3716 = vrot.lane.b32.xlu0 %v3702, 123
    %v3717 = vpop.permute.xlu0 %3716
    %3718 = vrot.lane.b32.xlu0 %v3703, 123
    %v3719 = vpop.permute.xlu0 %3718
    %3720 = vrot.lane.b32.xlu0 %v3704, 123
    %v3721 = vpop.permute.xlu0 %3720
    %3722 = vrot.lane.b32.xlu0 %v3705, 123
    %v3723 = vpop.permute.xlu0 %3722
    %v3730 = vadd.f32 %v3692, %v3713
    %v3731 = vadd.f32 %v3693, %v3715
    %v3732 = vadd.f32 %v3694, %v3717
    %v3733 = vadd.f32 %v3695, %v3719
    %v3734 = vadd.f32 %v3696, %v3721
    %v3735 = vadd.f32 %v3697, %v3723
    %s3736 = sld [smem:[#allocation3 + $0x29]]
    %v3737 = vstv %s3736
    %v3738 = vmul.f32 %v3737, %v944
    %v3739 = vmul.f32 %v3737, %v945
    %v3740 = vmul.f32 %v3737, %v946
    %v3741 = vmul.f32 %v3737, %v950
    %v3742 = vmul.f32 %v3737, %v951
    %v3743 = vmul.f32 %v3737, %v952
    %3750 = vrot.lane.b32.xlu0 %v3738, 122
    %v3751 = vpop.permute.xlu0 %3750
    %3752 = vrot.lane.b32.xlu0 %v3739, 122
    %v3753 = vpop.permute.xlu0 %3752
    %3754 = vrot.lane.b32.xlu0 %v3740, 122
    %v3755 = vpop.permute.xlu0 %3754
    %3756 = vrot.lane.b32.xlu0 %v3741, 122
    %v3757 = vpop.permute.xlu0 %3756
    %3758 = vrot.lane.b32.xlu0 %v3742, 122
    %v3759 = vpop.permute.xlu0 %3758
    %3760 = vrot.lane.b32.xlu0 %v3743, 122
    %v3761 = vpop.permute.xlu0 %3760
    %v3768 = vadd.f32 %v3730, %v3751
    %v3769 = vadd.f32 %v3731, %v3753
    %v3770 = vadd.f32 %v3732, %v3755
    %v3771 = vadd.f32 %v3733, %v3757
    %v3772 = vadd.f32 %v3734, %v3759
    %v3773 = vadd.f32 %v3735, %v3761
    %s3774 = sld [smem:[#allocation3 + $0x5a]]
    %v3775 = vstv %s3774
    %v3776 = vmul.f32 %v3775, %v947
    %v3777 = vmul.f32 %v3775, %v948
    %v3778 = vmul.f32 %v3775, %v949
    %v3779 = vmul.f32 %v3775, %v953
    %v3780 = vmul.f32 %v3775, %v954
    %v3781 = vmul.f32 %v3775, %v955
    %3788 = vrot.lane.b32.xlu0 %v3776, 122
    %v3789 = vpop.permute.xlu0 %3788
    %3790 = vrot.lane.b32.xlu0 %v3777, 122
    %v3791 = vpop.permute.xlu0 %3790
    %3792 = vrot.lane.b32.xlu0 %v3778, 122
    %v3793 = vpop.permute.xlu0 %3792
    %3794 = vrot.lane.b32.xlu0 %v3779, 122
    %v3795 = vpop.permute.xlu0 %3794
    %3796 = vrot.lane.b32.xlu0 %v3780, 122
    %v3797 = vpop.permute.xlu0 %3796
    %3798 = vrot.lane.b32.xlu0 %v3781, 122
    %v3799 = vpop.permute.xlu0 %3798
    %v3806 = vadd.f32 %v3768, %v3789
    %v3807 = vadd.f32 %v3769, %v3791
    %v3808 = vadd.f32 %v3770, %v3793
    %v3809 = vadd.f32 %v3771, %v3795
    %v3810 = vadd.f32 %v3772, %v3797
    %v3811 = vadd.f32 %v3773, %v3799
    %vm3818 = vcmask 1042432
    %v3819 = vrot.slane %v3806, 5
    %v3820 = vrot.slane %v3807, 5
    %v3821 = vsel %vm3818, %v3819, %v3820
    %v3822 = vrot.slane %v3808, 5
    %v3823 = vsel %vm3818, %v3820, %v3822
    %v3824 = vrot.slane %v3809, 5
    %v3825 = vrot.slane %v3810, 5
    %v3826 = vsel %vm3818, %v3824, %v3825
    %v3827 = vrot.slane %v3811, 5
    %v3828 = vsel %vm3818, %v3825, %v3827
    %v3833 = vadd.f32 %v3324, %v3821
    %v3834 = vadd.f32 %v3325, %v3823
    %v3835 = vadd.f32 %v3326, %v3826
    %v3836 = vadd.f32 %v3327, %v3828
    %s3837 = sld [smem:[#allocation3 + $0x2a]]
    %v3838 = vstv %s3837
    %v3839 = vmul.f32 %v3838, %v944
    %v3840 = vmul.f32 %v3838, %v945
    %v3841 = vmul.f32 %v3838, %v946
    %v3842 = vmul.f32 %v3838, %v950
    %v3843 = vmul.f32 %v3838, %v951
    %v3844 = vmul.f32 %v3838, %v952
    %v3845 = vadd.f32 %v3839, 0.0
    %v3846 = vadd.f32 %v3840, 0.0
    %v3847 = vadd.f32 %v3841, 0.0
    %v3848 = vadd.f32 %v3842, 0.0
    %v3849 = vadd.f32 %v3843, 0.0
    %v3850 = vadd.f32 %v3844, 0.0
    %s3851 = sld [smem:[#allocation3 + $0x5b]]
    %v3852 = vstv %s3851
    %v3853 = vmul.f32 %v3852, %v947
    %v3854 = vmul.f32 %v3852, %v948
    %v3855 = vmul.f32 %v3852, %v949
    %v3856 = vmul.f32 %v3852, %v953
    %v3857 = vmul.f32 %v3852, %v954
    %v3858 = vmul.f32 %v3852, %v955
    %v3859 = vadd.f32 %v3845, %v3853
    %v3860 = vadd.f32 %v3846, %v3854
    %v3861 = vadd.f32 %v3847, %v3855
    %v3862 = vadd.f32 %v3848, %v3856
    %v3863 = vadd.f32 %v3849, %v3857
    %v3864 = vadd.f32 %v3850, %v3858
    %s3865 = sld [smem:[#allocation3 + $0x2b]]
    %v3866 = vstv %s3865
    %v3867 = vmul.f32 %v3866, %v944
    %v3868 = vmul.f32 %v3866, %v945
    %v3869 = vmul.f32 %v3866, %v946
    %v3870 = vmul.f32 %v3866, %v950
    %v3871 = vmul.f32 %v3866, %v951
    %v3872 = vmul.f32 %v3866, %v952
    %3879 = vrot.lane.b32.xlu0 %v3867, 127
    %v3880 = vpop.permute.xlu0 %3879
    %3881 = vrot.lane.b32.xlu0 %v3868, 127
    %v3882 = vpop.permute.xlu0 %3881
    %3883 = vrot.lane.b32.xlu0 %v3869, 127
    %v3884 = vpop.permute.xlu0 %3883
    %3885 = vrot.lane.b32.xlu0 %v3870, 127
    %v3886 = vpop.permute.xlu0 %3885
    %3887 = vrot.lane.b32.xlu0 %v3871, 127
    %v3888 = vpop.permute.xlu0 %3887
    %3889 = vrot.lane.b32.xlu0 %v3872, 127
    %v3890 = vpop.permute.xlu0 %3889
    %v3897 = vadd.f32 %v3859, %v3880
    %v3898 = vadd.f32 %v3860, %v3882
    %v3899 = vadd.f32 %v3861, %v3884
    %v3900 = vadd.f32 %v3862, %v3886
    %v3901 = vadd.f32 %v3863, %v3888
    %v3902 = vadd.f32 %v3864, %v3890
    %s3903 = sld [smem:[#allocation3 + $0x5c]]
    %v3904 = vstv %s3903
    %v3905 = vmul.f32 %v3904, %v947
    %v3906 = vmul.f32 %v3904, %v948
    %v3907 = vmul.f32 %v3904, %v949
    %v3908 = vmul.f32 %v3904, %v953
    %v3909 = vmul.f32 %v3904, %v954
    %v3910 = vmul.f32 %v3904, %v955
    %3917 = vrot.lane.b32.xlu0 %v3905, 127
    %v3918 = vpop.permute.xlu0 %3917
    %3919 = vrot.lane.b32.xlu0 %v3906, 127
    %v3920 = vpop.permute.xlu0 %3919
    %3921 = vrot.lane.b32.xlu0 %v3907, 127
    %v3922 = vpop.permute.xlu0 %3921
    %3923 = vrot.lane.b32.xlu0 %v3908, 127
    %v3924 = vpop.permute.xlu0 %3923
    %3925 = vrot.lane.b32.xlu0 %v3909, 127
    %v3926 = vpop.permute.xlu0 %3925
    %3927 = vrot.lane.b32.xlu0 %v3910, 127
    %v3928 = vpop.permute.xlu0 %3927
    %v3935 = vadd.f32 %v3897, %v3918
    %v3936 = vadd.f32 %v3898, %v3920
    %v3937 = vadd.f32 %v3899, %v3922
    %v3938 = vadd.f32 %v3900, %v3924
    %v3939 = vadd.f32 %v3901, %v3926
    %v3940 = vadd.f32 %v3902, %v3928
    %s3941 = sld [smem:[#allocation3 + $0x2c]]
    %v3942 = vstv %s3941
    %v3943 = vmul.f32 %v3942, %v944
    %v3944 = vmul.f32 %v3942, %v945
    %v3945 = vmul.f32 %v3942, %v946
    %v3946 = vmul.f32 %v3942, %v950
    %v3947 = vmul.f32 %v3942, %v951
    %v3948 = vmul.f32 %v3942, %v952
    %3955 = vrot.lane.b32.xlu0 %v3943, 126
    %v3956 = vpop.permute.xlu0 %3955
    %3957 = vrot.lane.b32.xlu0 %v3944, 126
    %v3958 = vpop.permute.xlu0 %3957
    %3959 = vrot.lane.b32.xlu0 %v3945, 126
    %v3960 = vpop.permute.xlu0 %3959
    %3961 = vrot.lane.b32.xlu0 %v3946, 126
    %v3962 = vpop.permute.xlu0 %3961
    %3963 = vrot.lane.b32.xlu0 %v3947, 126
    %v3964 = vpop.permute.xlu0 %3963
    %3965 = vrot.lane.b32.xlu0 %v3948, 126
    %v3966 = vpop.permute.xlu0 %3965
    %v3973 = vadd.f32 %v3935, %v3956
    %v3974 = vadd.f32 %v3936, %v3958
    %v3975 = vadd.f32 %v3937, %v3960
    %v3976 = vadd.f32 %v3938, %v3962
    %v3977 = vadd.f32 %v3939, %v3964
    %v3978 = vadd.f32 %v3940, %v3966
    %s3979 = sld [smem:[#allocation3 + $0x5d]]
    %v3980 = vstv %s3979
    %v3981 = vmul.f32 %v3980, %v947
    %v3982 = vmul.f32 %v3980, %v948
    %v3983 = vmul.f32 %v3980, %v949
    %v3984 = vmul.f32 %v3980, %v953
    %v3985 = vmul.f32 %v3980, %v954
    %v3986 = vmul.f32 %v3980, %v955
    %3993 = vrot.lane.b32.xlu0 %v3981, 126
    %v3994 = vpop.permute.xlu0 %3993
    %3995 = vrot.lane.b32.xlu0 %v3982, 126
    %v3996 = vpop.permute.xlu0 %3995
    %3997 = vrot.lane.b32.xlu0 %v3983, 126
    %v3998 = vpop.permute.xlu0 %3997
    %3999 = vrot.lane.b32.xlu0 %v3984, 126
    %v4000 = vpop.permute.xlu0 %3999
    %4001 = vrot.lane.b32.xlu0 %v3985, 126
    %v4002 = vpop.permute.xlu0 %4001
    %4003 = vrot.lane.b32.xlu0 %v3986, 126
    %v4004 = vpop.permute.xlu0 %4003
    %v4011 = vadd.f32 %v3973, %v3994
    %v4012 = vadd.f32 %v3974, %v3996
    %v4013 = vadd.f32 %v3975, %v3998
    %v4014 = vadd.f32 %v3976, %v4000
    %v4015 = vadd.f32 %v3977, %v4002
    %v4016 = vadd.f32 %v3978, %v4004
    %s4017 = sld [smem:[#allocation3 + $0x2d]]
    %v4018 = vstv %s4017
    %v4019 = vmul.f32 %v4018, %v944
    %v4020 = vmul.f32 %v4018, %v945
    %v4021 = vmul.f32 %v4018, %v946
    %v4022 = vmul.f32 %v4018, %v950
    %v4023 = vmul.f32 %v4018, %v951
    %v4024 = vmul.f32 %v4018, %v952
    %4031 = vrot.lane.b32.xlu0 %v4019, 125
    %v4032 = vpop.permute.xlu0 %4031
    %4033 = vrot.lane.b32.xlu0 %v4020, 125
    %v4034 = vpop.permute.xlu0 %4033
    %4035 = vrot.lane.b32.xlu0 %v4021, 125
    %v4036 = vpop.permute.xlu0 %4035
    %4037 = vrot.lane.b32.xlu0 %v4022, 125
    %v4038 = vpop.permute.xlu0 %4037
    %4039 = vrot.lane.b32.xlu0 %v4023, 125
    %v4040 = vpop.permute.xlu0 %4039
    %4041 = vrot.lane.b32.xlu0 %v4024, 125
    %v4042 = vpop.permute.xlu0 %4041
    %v4049 = vadd.f32 %v4011, %v4032
    %v4050 = vadd.f32 %v4012, %v4034
    %v4051 = vadd.f32 %v4013, %v4036
    %v4052 = vadd.f32 %v4014, %v4038
    %v4053 = vadd.f32 %v4015, %v4040
    %v4054 = vadd.f32 %v4016, %v4042
    %s4055 = sld [smem:[#allocation3 + $0x5e]]
    %v4056 = vstv %s4055
    %v4057 = vmul.f32 %v4056, %v947
    %v4058 = vmul.f32 %v4056, %v948
    %v4059 = vmul.f32 %v4056, %v949
    %v4060 = vmul.f32 %v4056, %v953
    %v4061 = vmul.f32 %v4056, %v954
    %v4062 = vmul.f32 %v4056, %v955
    %4069 = vrot.lane.b32.xlu0 %v4057, 125
    %v4070 = vpop.permute.xlu0 %4069
    %4071 = vrot.lane.b32.xlu0 %v4058, 125
    %v4072 = vpop.permute.xlu0 %4071
    %4073 = vrot.lane.b32.xlu0 %v4059, 125
    %v4074 = vpop.permute.xlu0 %4073
    %4075 = vrot.lane.b32.xlu0 %v4060, 125
    %v4076 = vpop.permute.xlu0 %4075
    %4077 = vrot.lane.b32.xlu0 %v4061, 125
    %v4078 = vpop.permute.xlu0 %4077
    %4079 = vrot.lane.b32.xlu0 %v4062, 125
    %v4080 = vpop.permute.xlu0 %4079
    %v4087 = vadd.f32 %v4049, %v4070
    %v4088 = vadd.f32 %v4050, %v4072
    %v4089 = vadd.f32 %v4051, %v4074
    %v4090 = vadd.f32 %v4052, %v4076
    %v4091 = vadd.f32 %v4053, %v4078
    %v4092 = vadd.f32 %v4054, %v4080
    %s4093 = sld [smem:[#allocation3 + $0x2e]]
    %v4094 = vstv %s4093
    %v4095 = vmul.f32 %v4094, %v944
    %v4096 = vmul.f32 %v4094, %v945
    %v4097 = vmul.f32 %v4094, %v946
    %v4098 = vmul.f32 %v4094, %v950
    %v4099 = vmul.f32 %v4094, %v951
    %v4100 = vmul.f32 %v4094, %v952
    %4107 = vrot.lane.b32.xlu0 %v4095, 124
    %v4108 = vpop.permute.xlu0 %4107
    %4109 = vrot.lane.b32.xlu0 %v4096, 124
    %v4110 = vpop.permute.xlu0 %4109
    %4111 = vrot.lane.b32.xlu0 %v4097, 124
    %v4112 = vpop.permute.xlu0 %4111
    %4113 = vrot.lane.b32.xlu0 %v4098, 124
    %v4114 = vpop.permute.xlu0 %4113
    %4115 = vrot.lane.b32.xlu0 %v4099, 124
    %v4116 = vpop.permute.xlu0 %4115
    %4117 = vrot.lane.b32.xlu0 %v4100, 124
    %v4118 = vpop.permute.xlu0 %4117
    %v4125 = vadd.f32 %v4087, %v4108
    %v4126 = vadd.f32 %v4088, %v4110
    %v4127 = vadd.f32 %v4089, %v4112
    %v4128 = vadd.f32 %v4090, %v4114
    %v4129 = vadd.f32 %v4091, %v4116
    %v4130 = vadd.f32 %v4092, %v4118
    %s4131 = sld [smem:[#allocation3 + $0x5f]]
    %v4132 = vstv %s4131
    %v4133 = vmul.f32 %v4132, %v947
    %v4134 = vmul.f32 %v4132, %v948
    %v4135 = vmul.f32 %v4132, %v949
    %v4136 = vmul.f32 %v4132, %v953
    %v4137 = vmul.f32 %v4132, %v954
    %v4138 = vmul.f32 %v4132, %v955
    %4145 = vrot.lane.b32.xlu0 %v4133, 124
    %v4146 = vpop.permute.xlu0 %4145
    %4147 = vrot.lane.b32.xlu0 %v4134, 124
    %v4148 = vpop.permute.xlu0 %4147
    %4149 = vrot.lane.b32.xlu0 %v4135, 124
    %v4150 = vpop.permute.xlu0 %4149
    %4151 = vrot.lane.b32.xlu0 %v4136, 124
    %v4152 = vpop.permute.xlu0 %4151
    %4153 = vrot.lane.b32.xlu0 %v4137, 124
    %v4154 = vpop.permute.xlu0 %4153
    %4155 = vrot.lane.b32.xlu0 %v4138, 124
    %v4156 = vpop.permute.xlu0 %4155
    %v4163 = vadd.f32 %v4125, %v4146
    %v4164 = vadd.f32 %v4126, %v4148
    %v4165 = vadd.f32 %v4127, %v4150
    %v4166 = vadd.f32 %v4128, %v4152
    %v4167 = vadd.f32 %v4129, %v4154
    %v4168 = vadd.f32 %v4130, %v4156
    %s4169 = sld [smem:[#allocation3 + $0x2f]]
    %v4170 = vstv %s4169
    %v4171 = vmul.f32 %v4170, %v944
    %v4172 = vmul.f32 %v4170, %v945
    %v4173 = vmul.f32 %v4170, %v946
    %v4174 = vmul.f32 %v4170, %v950
    %v4175 = vmul.f32 %v4170, %v951
    %v4176 = vmul.f32 %v4170, %v952
    %4183 = vrot.lane.b32.xlu0 %v4171, 123
    %v4184 = vpop.permute.xlu0 %4183
    %4185 = vrot.lane.b32.xlu0 %v4172, 123
    %v4186 = vpop.permute.xlu0 %4185
    %4187 = vrot.lane.b32.xlu0 %v4173, 123
    %v4188 = vpop.permute.xlu0 %4187
    %4189 = vrot.lane.b32.xlu0 %v4174, 123
    %v4190 = vpop.permute.xlu0 %4189
    %4191 = vrot.lane.b32.xlu0 %v4175, 123
    %v4192 = vpop.permute.xlu0 %4191
    %4193 = vrot.lane.b32.xlu0 %v4176, 123
    %v4194 = vpop.permute.xlu0 %4193
    %v4201 = vadd.f32 %v4163, %v4184
    %v4202 = vadd.f32 %v4164, %v4186
    %v4203 = vadd.f32 %v4165, %v4188
    %v4204 = vadd.f32 %v4166, %v4190
    %v4205 = vadd.f32 %v4167, %v4192
    %v4206 = vadd.f32 %v4168, %v4194
    %s4207 = sld [smem:[#allocation3 + $0x60]]
    %v4208 = vstv %s4207
    %v4209 = vmul.f32 %v4208, %v947
    %v4210 = vmul.f32 %v4208, %v948
    %v4211 = vmul.f32 %v4208, %v949
    %v4212 = vmul.f32 %v4208, %v953
    %v4213 = vmul.f32 %v4208, %v954
    %v4214 = vmul.f32 %v4208, %v955
    %4221 = vrot.lane.b32.xlu0 %v4209, 123
    %v4222 = vpop.permute.xlu0 %4221
    %4223 = vrot.lane.b32.xlu0 %v4210, 123
    %v4224 = vpop.permute.xlu0 %4223
    %4225 = vrot.lane.b32.xlu0 %v4211, 123
    %v4226 = vpop.permute.xlu0 %4225
    %4227 = vrot.lane.b32.xlu0 %v4212, 123
    %v4228 = vpop.permute.xlu0 %4227
    %4229 = vrot.lane.b32.xlu0 %v4213, 123
    %v4230 = vpop.permute.xlu0 %4229
    %4231 = vrot.lane.b32.xlu0 %v4214, 123
    %v4232 = vpop.permute.xlu0 %4231
    %v4239 = vadd.f32 %v4201, %v4222
    %v4240 = vadd.f32 %v4202, %v4224
    %v4241 = vadd.f32 %v4203, %v4226
    %v4242 = vadd.f32 %v4204, %v4228
    %v4243 = vadd.f32 %v4205, %v4230
    %v4244 = vadd.f32 %v4206, %v4232
    %s4245 = sld [smem:[#allocation3 + $0x30]]
    %v4246 = vstv %s4245
    %v4247 = vmul.f32 %v4246, %v944
    %v4248 = vmul.f32 %v4246, %v945
    %v4249 = vmul.f32 %v4246, %v946
    %v4250 = vmul.f32 %v4246, %v950
    %v4251 = vmul.f32 %v4246, %v951
    %v4252 = vmul.f32 %v4246, %v952
    %4259 = vrot.lane.b32.xlu0 %v4247, 122
    %v4260 = vpop.permute.xlu0 %4259
    %4261 = vrot.lane.b32.xlu0 %v4248, 122
    %v4262 = vpop.permute.xlu0 %4261
    %4263 = vrot.lane.b32.xlu0 %v4249, 122
    %v4264 = vpop.permute.xlu0 %4263
    %4265 = vrot.lane.b32.xlu0 %v4250, 122
    %v4266 = vpop.permute.xlu0 %4265
    %4267 = vrot.lane.b32.xlu0 %v4251, 122
    %v4268 = vpop.permute.xlu0 %4267
    %4269 = vrot.lane.b32.xlu0 %v4252, 122
    %v4270 = vpop.permute.xlu0 %4269
    %v4277 = vadd.f32 %v4239, %v4260
    %v4278 = vadd.f32 %v4240, %v4262
    %v4279 = vadd.f32 %v4241, %v4264
    %v4280 = vadd.f32 %v4242, %v4266
    %v4281 = vadd.f32 %v4243, %v4268
    %v4282 = vadd.f32 %v4244, %v4270
    %s4283 = sld [smem:[#allocation3 + $0x61]]
    %v4284 = vstv %s4283
    %v4285 = vmul.f32 %v4284, %v947
    %v4286 = vmul.f32 %v4284, %v948
    %v4287 = vmul.f32 %v4284, %v949
    %v4288 = vmul.f32 %v4284, %v953
    %v4289 = vmul.f32 %v4284, %v954
    %v4290 = vmul.f32 %v4284, %v955
    %4297 = vrot.lane.b32.xlu0 %v4285, 122
    %v4298 = vpop.permute.xlu0 %4297
    %4299 = vrot.lane.b32.xlu0 %v4286, 122
    %v4300 = vpop.permute.xlu0 %4299
    %4301 = vrot.lane.b32.xlu0 %v4287, 122
    %v4302 = vpop.permute.xlu0 %4301
    %4303 = vrot.lane.b32.xlu0 %v4288, 122
    %v4304 = vpop.permute.xlu0 %4303
    %4305 = vrot.lane.b32.xlu0 %v4289, 122
    %v4306 = vpop.permute.xlu0 %4305
    %4307 = vrot.lane.b32.xlu0 %v4290, 122
    %v4308 = vpop.permute.xlu0 %4307
    %v4315 = vadd.f32 %v4277, %v4298
    %v4316 = vadd.f32 %v4278, %v4300
    %v4317 = vadd.f32 %v4279, %v4302
    %v4318 = vadd.f32 %v4280, %v4304
    %v4319 = vadd.f32 %v4281, %v4306
    %v4320 = vadd.f32 %v4282, %v4308
    %v4327 = vrot.slane %v4315, 6
    %v4328 = vrot.slane %v4316, 6
    %v4329 = vsel %vm230, %v4327, %v4328
    %v4330 = vrot.slane %v4317, 6
    %v4331 = vsel %vm230, %v4328, %v4330
    %v4332 = vrot.slane %v4318, 6
    %v4333 = vrot.slane %v4319, 6
    %v4334 = vsel %vm230, %v4332, %v4333
    %v4335 = vrot.slane %v4320, 6
    %v4336 = vsel %vm230, %v4333, %v4335
    %v4341 = vadd.f32 %v3833, %v4329
    %v4342 = vadd.f32 %v3834, %v4331
    %v4343 = vadd.f32 %v3835, %v4334
    %v4344 = vadd.f32 %v3836, %v4336
    %vm4345 = vcmask 130048
    %v4346 = vsel %vm4345, %v4341, 0.0
    %v4347 = vsel %vm4345, %v4342, 0.0
    %v4348 = vadd.f32 %v4346, %v4347
    %v4349 = vsel %vm4345, %v4343, 0.0
    %v4350 = vadd.f32 %v4348, %v4349
    %v4351 = vsel %vm4345, %v4344, 0.0
    %v4352 = vadd.f32 %v4350, %v4351
    %4353 = vadd.xlane.f32.xlu0 %v4352
    %v4354 = vpop.xlane.xlu0 %4353
    %v4355 = vrot.slane %v4354, 4
    %v4356 = vadd.f32 %v4354, %v4355
    %v4357 = vrot.slane %v4356, 2
    %v4358 = vadd.f32 %v4356, %v4357
    %v4359 = vrot.slane %v4358, 1
    %v4360 = vadd.f32 %v4358, %v4359
    %s4361 = vtos %v4360
    %v4362 = vmul.f32 %v4341, %v4341
    %v4363 = vmul.f32 %v4342, %v4342
    %v4364 = vmul.f32 %v4343, %v4343
    %v4365 = vmul.f32 %v4344, %v4344
    %v4366 = vsel %vm4345, %v4362, 0.0
    %v4367 = vsel %vm4345, %v4363, 0.0
    %v4368 = vadd.f32 %v4366, %v4367
    %v4369 = vsel %vm4345, %v4364, 0.0
    %v4370 = vadd.f32 %v4368, %v4369
    %v4371 = vsel %vm4345, %v4365, 0.0
    %v4372 = vadd.f32 %v4370, %v4371
    %4373 = vadd.xlane.f32.xlu0 %v4372
    %v4374 = vpop.xlane.xlu0 %4373
    %v4375 = vrot.slane %v4374, 4
    %v4376 = vadd.f32 %v4374, %v4375
    %v4377 = vrot.slane %v4376, 2
    %v4378 = vadd.f32 %v4376, %v4377
    %v4379 = vrot.slane %v4378, 1
    %v4380 = vadd.f32 %v4378, %v4379
    %s4381 = vtos %v4380
    %v4382 = vrcp.pop 512.0
    %s4383 = vtos %v4382
    %s4384 = smul.f32 %s4361, %s4383
    %v4385 = vrcp.pop 512.0
    %s4386 = vtos %v4385
    %s4387 = smul.f32 %s4381, %s4386
    %s4388 = smul.f32 %s4384, %s4384
    %s4389 = ssub.f32 %s4387, %s4388
    %v4390 = vstv %s4384
    %v4391 = vsub.f32 %v4341, %v4390
    %v4392 = vsub.f32 %v4342, %v4390
    %v4393 = vsub.f32 %v4343, %v4390
    %v4394 = vsub.f32 %v4344, %v4390
    %s4395 = sadd.f32 %s4389, 1e-05
    %v4396 = vstv %s4395
    %v4397 = vrsqrt.pop %v4396
    %s4398 = vtos %v4397
    %v4399 = vstv %s4398
    %v4400 = vmul.f32 %v4391, %v4399
    %v4401 = vmul.f32 %v4392, %v4399
    %v4402 = vmul.f32 %v4393, %v4399
    %v4403 = vmul.f32 %v4394, %v4399
    %s4404 = sld [smem:[#allocation5]]
    %v4405 = vstv %s4404
    %v4406 = vmul.f32 %v4400, %v4405
    %v4407 = vmul.f32 %v4401, %v4405
    %v4408 = vmul.f32 %v4402, %v4405
    %v4409 = vmul.f32 %v4403, %v4405
    %s4410 = sld [smem:[#allocation5 + $0x1]]
    %v4411 = vstv %s4410
    %v4412 = vadd.f32 %v4406, %v4411
    %v4413 = vadd.f32 %v4407, %v4411
    %v4414 = vadd.f32 %v4408, %v4411
    %v4415 = vadd.f32 %v4409, %v4411
    %v4416 = vxor.u32 %v4412, 2147483648
    %v4417 = vxor.u32 %v4413, 2147483648
    %v4418 = vxor.u32 %v4414, 2147483648
    %v4419 = vxor.u32 %v4415, 2147483648
    %v4420 = vmul.f32 %v4416, 1.442695
    %v4421 = vpow.pop %v4420
    %v4422 = vmul.f32 %v4417, 1.442695
    %v4423 = vpow.pop %v4422
    %v4424 = vmul.f32 %v4418, 1.442695
    %v4425 = vpow.pop %v4424
    %v4426 = vmul.f32 %v4419, 1.442695
    %v4427 = vpow.pop %v4426
    %v4428 = vadd.f32 %v4421, 1.0
    %v4429 = vadd.f32 %v4423, 1.0
    %v4430 = vadd.f32 %v4425, 1.0
    %v4431 = vadd.f32 %v4427, 1.0
    %v4432 = vrcp.pop %v4428
    %v4433 = vmul.f32 1.0, %v4432
    %v4434 = vrcp.pop %v4429
    %v4435 = vmul.f32 1.0, %v4434
    %v4436 = vrcp.pop %v4430
    %v4437 = vmul.f32 1.0, %v4436
    %v4438 = vrcp.pop %v4431
    %v4439 = vmul.f32 1.0, %v4438
    %v4442 = vrot.slane %v4437, 7
    %v4443 = vsel %vm178, %v4442, %v4433
    %v4445 = vrot.slane %v4433, 1
    %v4446 = vsel %vm178, %v4437, %v4445
    %4447 = vrot.lane.b32.xlu0 %v4446, 16
    %v4448 = vpop.permute.xlu0 %4447
    %v4450 = vrot.slane %v4433, 2
    %v4451 = vrot.slane %v4437, 1
    %v4452 = vsel %vm178, %v4451, %v4450
    %4453 = vrot.lane.b32.xlu0 %v4452, 32
    %v4454 = vpop.permute.xlu0 %4453
    %v4456 = vrot.slane %v4433, 3
    %v4457 = vrot.slane %v4437, 2
    %v4458 = vsel %vm178, %v4457, %v4456
    %4459 = vrot.lane.b32.xlu0 %v4458, 48
    %v4460 = vpop.permute.xlu0 %4459
    %v4462 = vrot.slane %v4433, 4
    %v4463 = vrot.slane %v4437, 3
    %v4464 = vsel %vm178, %v4463, %v4462
    %4465 = vrot.lane.b32.xlu0 %v4464, 64
    %v4466 = vpop.permute.xlu0 %4465
    %v4468 = vrot.slane %v4433, 5
    %v4469 = vrot.slane %v4437, 4
    %v4470 = vsel %vm178, %v4469, %v4468
    %4471 = vrot.lane.b32.xlu0 %v4470, 80
    %v4472 = vpop.permute.xlu0 %4471
    %v4474 = vrot.slane %v4433, 6
    %v4475 = vrot.slane %v4437, 5
    %v4476 = vsel %vm178, %v4475, %v4474
    %4477 = vrot.lane.b32.xlu0 %v4476, 96
    %v4478 = vpop.permute.xlu0 %4477
    %v4480 = vrot.slane %v4433, 7
    %v4481 = vrot.slane %v4437, 6
    %v4482 = vsel %vm178, %v4481, %v4480
    %4483 = vrot.lane.b32.xlu0 %v4482, 112
    %v4484 = vpop.permute.xlu0 %4483
    %v4488 = vrot.slane %v4439, 7
    %v4489 = vsel %vm178, %v4488, %v4435
    %v4491 = vrot.slane %v4435, 1
    %v4492 = vsel %vm178, %v4439, %v4491
    %4493 = vrot.lane.b32.xlu0 %v4492, 16
    %v4494 = vpop.permute.xlu0 %4493
    %v4496 = vrot.slane %v4435, 2
    %v4497 = vrot.slane %v4439, 1
    %v4498 = vsel %vm178, %v4497, %v4496
    %4499 = vrot.lane.b32.xlu0 %v4498, 32
    %v4500 = vpop.permute.xlu0 %4499
    %v4502 = vrot.slane %v4435, 3
    %v4503 = vrot.slane %v4439, 2
    %v4504 = vsel %vm178, %v4503, %v4502
    %4505 = vrot.lane.b32.xlu0 %v4504, 48
    %v4506 = vpop.permute.xlu0 %4505
    %v4508 = vrot.slane %v4435, 4
    %v4509 = vrot.slane %v4439, 3
    %v4510 = vsel %vm178, %v4509, %v4508
    %4511 = vrot.lane.b32.xlu0 %v4510, 64
    %v4512 = vpop.permute.xlu0 %4511
    %v4514 = vrot.slane %v4435, 5
    %v4515 = vrot.slane %v4439, 4
    %v4516 = vsel %vm178, %v4515, %v4514
    %4517 = vrot.lane.b32.xlu0 %v4516, 80
    %v4518 = vpop.permute.xlu0 %4517
    %v4520 = vrot.slane %v4435, 6
    %v4521 = vrot.slane %v4439, 5
    %v4522 = vsel %vm178, %v4521, %v4520
    %4523 = vrot.lane.b32.xlu0 %v4522, 96
    %v4524 = vpop.permute.xlu0 %4523
    %v4526 = vrot.slane %v4435, 7
    %v4527 = vrot.slane %v4439, 6
    %v4528 = vsel %vm178, %v4527, %v4526
    %4529 = vrot.lane.b32.xlu0 %v4528, 112
    %v4530 = vpop.permute.xlu0 %4529
    %v4532 = vsel %vm4345, %v4443, %v4448
    %v4533 = vsel %vm243, %v4532, %v4454
    %vm4534 = vcmask 392192
    %v4535 = vsel %vm4534, %v4533, %v4460
    %vm4536 = vcmask 523264
    %v4537 = vsel %vm4536, %v4535, %v4466
    %vm4538 = vcmask 654336
    %v4539 = vsel %vm4538, %v4537, %v4472
    %vm4540 = vcmask 785408
    %v4541 = vsel %vm4540, %v4539, %v4478
    %vm4542 = vcmask 916480
    %v4543 = vsel %vm4542, %v4541, %v4484
    %v4544 = vsel %vm4345, %v4489, %v4494
    %v4545 = vsel %vm243, %v4544, %v4500
    %v4546 = vsel %vm4534, %v4545, %v4506
    %v4547 = vsel %vm4536, %v4546, %v4512
    %v4548 = vsel %vm4538, %v4547, %v4518
    %v4549 = vsel %vm4540, %v4548, %v4524
    %v4550 = vsel %vm4542, %v4549, %v4530
    %v4553 = vcombine.low %v4543, %v4550
    %v4555 = vunpack.c.l.s4 1966171168
    %v4556 = vunpack.c.0.s8 %v4555
    %v4557 = vlaneseq
    %v4558 = vshrl.u32 %v4557, 7
    %v4559 = vsub.s32 %v4556, %v4558
    %v4560 = vrot.slane %v4553, %v4559
    %v4561 = vcombine.high %v4560, %v4560
    %v4563 = vunpack.c.l.s4 1966171168
    %v4564 = vunpack.c.0.s8 %v4563
    %v4565 = vlaneseq
    %v4566 = vshrl.u32 %v4565, 7
    %v4567 = vsub.s32 %v4564, %v4566
    %v4568 = vrot.slane %v4560, %v4567
    %v4570 = vunpack.c.l.s4 1966171168
    %v4571 = vunpack.c.0.s8 %v4570
    %v4572 = vlaneseq
    %v4573 = vshrl.u32 %v4572, 7
    %v4574 = vsub.s32 %v4571, %v4573
    %v4575 = vrot.slane %v4561, %v4574
    %v4576 = vlaneseq
    %v4577 = vshrl.u32 %v4576, 7
    %v4578 = vsub.s32 0, %v4577
    %v4579 = vrot.slane %v4568, %v4578
    %v4580 = vlaneseq
    %v4581 = vshrl.u32 %v4580, 7
    %v4582 = vsub.s32 1, %v4581
    %v4583 = vrot.slane %v4568, %v4582
    %v4584 = vlaneseq
    %v4585 = vshrl.u32 %v4584, 7
    %v4586 = vsub.s32 0, %v4585
    %v4587 = vrot.slane %v4575, %v4586
    %v4588 = vlaneseq
    %v4589 = vshrl.u32 %v4588, 7
    %v4590 = vsub.s32 1, %v4589
    %v4591 = vrot.slane %v4575, %v4590
    %v4596 = vmul.f32 %v451, %v4579
    %v4597 = vmul.f32 %v452, %v4583
    %v4598 = vmul.f32 %v453, %v4579
    %v4599 = vmul.f32 %v454, %v4583
    %v4600 = vmul.f32 %v455, %v4579
    %v4601 = vmul.f32 %v456, %v4583
    %v4602 = vmul.f32 %v457, %v4579
    %v4603 = vmul.f32 %v458, %v4583
    %v4604 = vmul.f32 %v459, %v4587
    %v4605 = vmul.f32 %v460, %v4591
    %v4606 = vmul.f32 %v461, %v4587
    %v4607 = vmul.f32 %v462, %v4591
    %v4608 = vmul.f32 %v463, %v4587
    %v4609 = vmul.f32 %v464, %v4591
    %v4610 = vmul.f32 %v465, %v4587
    %v4611 = vmul.f32 %v466, %v4591
    %4612 = vst [vmem:[%s7] sm:$0xff] %v4596
    %4613 = vst [vmem:[%s7 + $0x8] sm:$0xff] %v4597
    %4614 = vst [vmem:[%s7 + $0x10] sm:$0xff] %v4598
    %4615 = vst [vmem:[%s7 + $0x18] sm:$0xff] %v4599
    %4616 = vst [vmem:[%s7 + $0x20] sm:$0xff] %v4600
    %4617 = vst [vmem:[%s7 + $0x28] sm:$0xff] %v4601
    %4618 = vst [vmem:[%s7 + $0x30] sm:$0xff] %v4602
    %4619 = vst [vmem:[%s7 + $0x38] sm:$0xff] %v4603
    %4620 = vst [vmem:[%s7 + $0x40] sm:$0xff] %v4604
    %4621 = vst [vmem:[%s7 + $0x48] sm:$0xff] %v4605
    %4622 = vst [vmem:[%s7 + $0x50] sm:$0xff] %v4606
    %4623 = vst [vmem:[%s7 + $0x58] sm:$0xff] %v4607
    %4624 = vst [vmem:[%s7 + $0x60] sm:$0xff] %v4608
    %4625 = vst [vmem:[%s7 + $0x68] sm:$0xff] %v4609
    %4626 = vst [vmem:[%s7 + $0x70] sm:$0xff] %v4610
    %4627 = vst [vmem:[%s7 + $0x78] sm:$0xff] %v4611
    // Predicated region
    $region38: #{cbam_forward.1} parent=1 // pred_check
      _
    $region39: #{cbam_forward.1} parent=1 // pred_check_branch
      %4629 = sbr.rel (0) target = $region41
    $region40: #{cbam_forward.1} parent=1 // pred_region
      _
    $region41: #{cbam_forward.1} parent=1 // pred_fallthru
      _
    // Predicated region
    $region42: #{cbam_forward.1} parent=1 // pred_check
      _
    $region43: #{cbam_forward.1} parent=1 // pred_check_branch
      %4631 = sbr.rel (0) target = $region45
    $region44: #{cbam_forward.1} parent=1 // pred_region
      _
    $region45: #{cbam_forward.1} parent=1 // pred_fallthru
      _
    %4632 = vsyncpa [#allocation4], 1
    %4633 = vsyncpa [#allocation6], 1

</llo_original>
